<compile_context>
chip_gen: v6e
topology: v6e:2x2x1
jax: 0.10.0
libtpu: 0.0.40
codegen_flags: <defaults>
</compile_context>

<pallas_src>
import jax
import jax.numpy as jnp
from jax.experimental import pallas as pl
from jax.experimental.pallas import tpu as pltpu

# ---------------- config (small, synthetic) ----------------
B = 2           # batch
T_ENC = 8       # encoder sequence length
T_DEC = 4       # decoder steps
D = 16          # embedding dim
H = 32          # hidden dim      -> 4H = 128 (one full lane dim for the gates)
V = 32          # vocab size
V_PAD = 128     # vocab padded to a full lane dim (pad columns masked via bias)
PAD_ID = 0
START_ID = 2
NEG = -1e9


def _lstm_step(x, h, c, wx, wh, b):
    """Stacked-gate LSTM cell: one x@Wx and one h@Wh per step (gates = [i|f|g|o])."""
    gates = (jnp.dot(x, wx, preferred_element_type=jnp.float32)
             + jnp.dot(h, wh, preferred_element_type=jnp.float32)
             + b)                                   # [B, 4H] (lane-dense 128)
    i_g = jax.nn.sigmoid(gates[:, 0 * H:1 * H])
    f_g = jax.nn.sigmoid(gates[:, 1 * H:2 * H])
    g_g = jnp.tanh(gates[:, 2 * H:3 * H])
    o_g = jax.nn.sigmoid(gates[:, 3 * H:4 * H])
    c_new = f_g * c + i_g * g_g
    h_new = o_g * jnp.tanh(c_new)
    return h_new, c_new


# ---------------- fused encoder + decoder kernel ----------------
def seq2seq_kernel(enc_emb_ref,     # [T_ENC, B, D] f32
                   enc_mask_ref,    # [B, T_ENC]    f32 (1 valid, 0 pad)
                   dec_emb_ref,     # [T_DEC, B, D] f32 (teacher-forced inputs)
                   tgt_ref,         # [B, T_DEC]    int32 targets
                   enc_wx_ref, enc_wh_ref, enc_b_ref,   # [D,4H] [H,4H] [1,4H]
                   dec_wx_ref, dec_wh_ref, dec_b_ref,   # [D,4H] [H,4H] [1,4H]
                   w_out_ref,       # [2H, V_PAD]
                   b_out_ref,       # [1, V_PAD] (-1e9 in padded vocab columns)
                   loss_ref,        # out: [B, 1] f32, per-example summed NLL
                   dist_ref,        # out: [B, V_PAD] f32, last-step distribution
                   enc_sc):         # scratch: [B, T_ENC, H] f32 encoder outputs
    # ---- load every weight exactly once ----
    enc_wx = enc_wx_ref[...]; enc_wh = enc_wh_ref[...]; enc_b = enc_b_ref[...]
    dec_wx = dec_wx_ref[...]; dec_wh = dec_wh_ref[...]; dec_b = dec_b_ref[...]
    w_out = w_out_ref[...];  b_out = b_out_ref[...]

    # ---- encoder: unrolled recurrence, h/c stay in vregs ----
    h = jnp.zeros((B, H), jnp.float32)
    c = jnp.zeros((B, H), jnp.float32)
    for t in range(T_ENC):
        x = enc_emb_ref[t]                                  # [B, D]
        h, c = _lstm_step(x, h, c, enc_wx, enc_wh, enc_b)
        enc_sc[:, t:t + 1, :] = h[:, None, :]               # batch-major enc_out

    enc = enc_sc[...]                                       # [B, T_ENC, H]

    # ---- decoder-loop invariants, hoisted ----
    attn_bias = (enc_mask_ref[...] - 1.0) * (-NEG)          # 0 valid, -1e9 pad
    attn_bias = attn_bias * jnp.float32(1.0)                # [B, T_ENC] f32
    vocab_ids = jax.lax.broadcasted_iota(jnp.int32, (B, V_PAD), 1)
    tgt_all = tgt_ref[...]                                  # [B, T_DEC] int32

    # ---- decoder: unrolled, deterministic teacher forcing ----
    # TODO(synk): scheduled sampling (rand > 0.25 mixing) and multinomial
    # re-sampling of x_t are stochastic host-side ops; deterministic teacher
    # forcing is used instead.
    loss_acc = jnp.zeros((B, 1), jnp.float32)
    logp = None
    for t in range(T_DEC):
        x = dec_emb_ref[t]                                  # [B, D]
        h, c = _lstm_step(x, h, c, dec_wx, dec_wh, dec_b)

        # attention over encoder outputs (masked softmax); tiny, stays on VPU
        scores = jnp.sum(h[:, None, :] * enc, axis=-1) + attn_bias   # [B, T_ENC]
        m = jnp.max(scores, axis=-1, keepdims=True)
        e = jnp.exp(scores - m)
        attn = e * pl.reciprocal(jnp.sum(e, axis=-1, keepdims=True), approx=True)
        ctx = jnp.sum(attn[:, :, None] * enc, axis=1)                # [B, H]

        # fused, lane-dense output projection + log-softmax
        hc = jnp.concatenate([h, ctx], axis=-1)                      # [B, 2H]
        logits = (jnp.dot(hc, w_out, preferred_element_type=jnp.float32)
                  + b_out)                                           # [B, V_PAD]
        lm = jnp.max(logits, axis=-1, keepdims=True)
        shifted = logits - lm
        logp = shifted - jnp.log(jnp.sum(jnp.exp(shifted), axis=-1, keepdims=True))

        # NLL with ignore_index = PAD_ID
        tgt = tgt_all[:, t:t + 1]                                    # [B, 1]
        onehot = (vocab_ids == tgt).astype(jnp.float32)
        nll = -jnp.sum(onehot * logp, axis=-1, keepdims=True)        # [B, 1]
        valid = (tgt != PAD_ID).astype(jnp.float32)
        loss_acc = loss_acc + nll * valid

    # single store of each output (no per-step partial writes)
    loss_ref[...] = loss_acc
    dist_ref[...] = jnp.exp(logp)          # last decode step's distribution


def run_seq2seq(enc_emb_tbd, enc_mask, dec_emb_tbd, targets_bt,
                enc_wx, enc_wh, enc_b, dec_wx, dec_wh, dec_b, w_out, b_out):
    n_in = 12
    vmem_specs = [pl.BlockSpec(memory_space=pltpu.MemorySpace.VMEM)
                  for _ in range(n_in)]
    return pl.pallas_call(
        seq2seq_kernel,
        out_shape=(jax.ShapeDtypeStruct((B, 1), jnp.float32),
                   jax.ShapeDtypeStruct((B, V_PAD), jnp.float32)),
        in_specs=vmem_specs,
        out_specs=(pl.BlockSpec(memory_space=pltpu.MemorySpace.VMEM),
                   pl.BlockSpec(memory_space=pltpu.MemorySpace.VMEM)),
        scratch_shapes=[pltpu.VMEM((B, T_ENC, H), jnp.float32)],
    )(enc_emb_tbd, enc_mask, dec_emb_tbd, targets_bt,
      enc_wx, enc_wh, enc_b, dec_wx, dec_wh, dec_b, w_out, b_out)


# ---------------- parameter init & wrapper ----------------
def init_params(key):
    ks = jax.random.split(key, 10)
    s = 0.1
    return dict(
        emb=jax.random.normal(ks[0], (V, D), jnp.float32) * s,
        # LSTM gate weights stacked along the output axis [i | f | g | o] -> 4H=128
        enc_wx=jax.random.normal(ks[1], (D, 4 * H), jnp.float32) * s,
        enc_wh=jax.random.normal(ks[2], (H, 4 * H), jnp.float32) * s,
        enc_b=jnp.zeros((1, 4 * H), jnp.float32),
        dec_wx=jax.random.normal(ks[3], (D, 4 * H), jnp.float32) * s,
        dec_wh=jax.random.normal(ks[4], (H, 4 * H), jnp.float32) * s,
        dec_b=jnp.zeros((1, 4 * H), jnp.float32),
        # output projection from [h ; ctx]
        w_out_h=jax.random.normal(ks[5], (H, V), jnp.float32) * s,
        w_out_c=jax.random.normal(ks[6], (H, V), jnp.float32) * s,
        b_out=jnp.zeros((1, V), jnp.float32),
    )


@jax.jit
def model_forward(params, enc_batch, enc_lens, dec_batch, target_batch):
    # --- glue: embeddings, masks, tiny layout shuffles (XLA side) ---
    enc_mask = (jnp.arange(T_ENC)[None, :] < enc_lens[:, None]).astype(jnp.float32)
    enc_emb_tbd = jnp.transpose(jnp.take(params["emb"], enc_batch, axis=0), (1, 0, 2))
    dec_emb_tbd = jnp.transpose(jnp.take(params["emb"], dec_batch, axis=0), (1, 0, 2))
    targets_bt = target_batch.astype(jnp.int32)                      # [B, T_DEC]

    # fuse [W_h ; W_c] -> [2H, V_PAD]; padded vocab columns get -1e9 bias so
    # they contribute nothing to (log-)softmax inside the kernel.
    w_out = jnp.zeros((2 * H, V_PAD), jnp.float32)
    w_out = w_out.at[:H, :V].set(params["w_out_h"]).at[H:, :V].set(params["w_out_c"])
    b_out = jnp.full((1, V_PAD), NEG, jnp.float32).at[:, :V].set(params["b_out"])

    loss_sum, _last_dist = run_seq2seq(
        enc_emb_tbd, enc_mask, dec_emb_tbd, targets_bt,
        params["enc_wx"], params["enc_wh"], params["enc_b"],
        params["dec_wx"], params["dec_wh"], params["dec_b"],
        w_out, b_out)

    losses = loss_sum[:, 0]          # per-example sum over decode steps
    batch_avg_loss = losses / B      # matches `losses / config.batch_size`
    mle_loss = jnp.mean(batch_avg_loss)   # same double division as the PyTorch code
    # TODO(synk): simplification (SARI) loss requires beam search + string
    # metrics on host; no kernel equivalent. Returned as 0.0 (opt off).
    simp_loss = jnp.float32(0.0)
    return mle_loss, simp_loss


if __name__ == "__main__":
    key = jax.random.PRNGKey(0)
    k_p, k1, k2, k3 = jax.random.split(key, 4)

    params = init_params(k_p)

    enc_batch = jax.random.randint(k1, (B, T_ENC), 3, V, dtype=jnp.int32)
    enc_lens = jnp.array([T_ENC, T_ENC - 2], dtype=jnp.int32)
    dec_batch = jax.random.randint(k2, (B, T_DEC), 3, V, dtype=jnp.int32)
    dec_batch = dec_batch.at[:, 0].set(START_ID)
    target_batch = jax.random.randint(k3, (B, T_DEC), 3, V, dtype=jnp.int32)
    target_batch = target_batch.at[1, T_DEC - 1].set(PAD_ID)   # exercise ignore_index

    mle_loss, simp_loss = model_forward(params, enc_batch, enc_lens,
                                        dec_batch, target_batch)
    jax.block_until_ready((mle_loss, simp_loss))
    assert jnp.isfinite(mle_loss)
    print("KERNEL_OK")
</pallas_src>

<mosaic_0001>
module attributes {stable_mosaic.version = 11 : i64} {
  func.func @seq2seq_kernel(%arg0: memref<8x2x16xf32, #tpu.memory_space<vmem>>, %arg1: memref<2x8xf32, #tpu.memory_space<vmem>>, %arg2: memref<4x2x16xf32, #tpu.memory_space<vmem>>, %arg3: memref<2x4xi32, #tpu.memory_space<vmem>>, %arg4: memref<16x128xf32, #tpu.memory_space<vmem>>, %arg5: memref<32x128xf32, #tpu.memory_space<vmem>>, %arg6: memref<1x128xf32, #tpu.memory_space<vmem>>, %arg7: memref<16x128xf32, #tpu.memory_space<vmem>>, %arg8: memref<32x128xf32, #tpu.memory_space<vmem>>, %arg9: memref<1x128xf32, #tpu.memory_space<vmem>>, %arg10: memref<64x128xf32, #tpu.memory_space<vmem>>, %arg11: memref<1x128xf32, #tpu.memory_space<vmem>>, %arg12: memref<2x1xf32, #tpu.memory_space<vmem>>, %arg13: memref<2x128xf32, #tpu.memory_space<vmem>>, %arg14: memref<2x8x32xf32, #tpu.memory_space<vmem>>) attributes {dimension_semantics = [], scalar_prefetch = 0 : i64, scratch_operands = 1 : i64, tpu.core_type = #tpu.core_type<tc>} {
    %c0 = arith.constant 0 : index
    %c0_0 = arith.constant 0 : index
    %0 = vector.load %arg4[%c0, %c0_0] : memref<16x128xf32, #tpu.memory_space<vmem>>, vector<16x128xf32>
    %c0_1 = arith.constant 0 : index
    %c0_2 = arith.constant 0 : index
    %1 = vector.load %arg5[%c0_1, %c0_2] : memref<32x128xf32, #tpu.memory_space<vmem>>, vector<32x128xf32>
    %c0_3 = arith.constant 0 : index
    %c0_4 = arith.constant 0 : index
    %2 = vector.load %arg6[%c0_3, %c0_4] : memref<1x128xf32, #tpu.memory_space<vmem>>, vector<1x128xf32>
    %c0_5 = arith.constant 0 : index
    %c0_6 = arith.constant 0 : index
    %3 = vector.load %arg7[%c0_5, %c0_6] : memref<16x128xf32, #tpu.memory_space<vmem>>, vector<16x128xf32>
    %c0_7 = arith.constant 0 : index
    %c0_8 = arith.constant 0 : index
    %4 = vector.load %arg8[%c0_7, %c0_8] : memref<32x128xf32, #tpu.memory_space<vmem>>, vector<32x128xf32>
    %c0_9 = arith.constant 0 : index
    %c0_10 = arith.constant 0 : index
    %5 = vector.load %arg9[%c0_9, %c0_10] : memref<1x128xf32, #tpu.memory_space<vmem>>, vector<1x128xf32>
    %c0_11 = arith.constant 0 : index
    %c0_12 = arith.constant 0 : index
    %6 = vector.load %arg10[%c0_11, %c0_12] : memref<64x128xf32, #tpu.memory_space<vmem>>, vector<64x128xf32>
    %c0_13 = arith.constant 0 : index
    %c0_14 = arith.constant 0 : index
    %7 = vector.load %arg11[%c0_13, %c0_14] : memref<1x128xf32, #tpu.memory_space<vmem>>, vector<1x128xf32>
    %cst = arith.constant 0.000000e+00 : f32
    %8 = vector.broadcast %cst : f32 to vector<2x32xf32>
    %cst_15 = arith.constant 0.000000e+00 : f32
    %9 = vector.broadcast %cst_15 : f32 to vector<2x32xf32>
    %c0_16 = arith.constant 0 : index
    %c0_17 = arith.constant 0 : index
    %c0_18 = arith.constant 0 : index
    %10 = vector.load %arg0[%c0_16, %c0_17, %c0_18] : memref<8x2x16xf32, #tpu.memory_space<vmem>>, vector<1x2x16xf32>
    %11 = vector.shape_cast %10 : vector<1x2x16xf32> to vector<2x16xf32>
    %cst_19 = arith.constant dense<0.000000e+00> : vector<2x128xf32>
    %12 = tpu.matmul %11, %0, %cst_19 {dimension_numbers = #tpu.dot_dimension_numbers<[1], [0], [0], [1], [0, 0, 1, 1], [], []>} : vector<2x16xf32>, vector<16x128xf32>, vector<2x128xf32> -> vector<2x128xf32>
    %cst_20 = arith.constant dense<0.000000e+00> : vector<2x128xf32>
    %13 = tpu.matmul %8, %1, %cst_20 {dimension_numbers = #tpu.dot_dimension_numbers<[1], [0], [0], [1], [0, 0, 1, 1], [], []>} : vector<2x32xf32>, vector<32x128xf32>, vector<2x128xf32> -> vector<2x128xf32>
    %14 = arith.addf %12, %13 : vector<2x128xf32>
    %15 = vector.broadcast %2 : vector<1x128xf32> to vector<2x128xf32>
    %16 = arith.addf %14, %15 : vector<2x128xf32>
    %17 = vector.extract_strided_slice %16 {offsets = [0, 0], sizes = [2, 32], strides = [1, 1]} : vector<2x128xf32> to vector<2x32xf32>
    %18 = arith.negf %17 : vector<2x32xf32>
    %19 = math.exp %18 : vector<2x32xf32>
    %cst_21 = arith.constant 1.000000e+00 : f32
    %20 = vector.broadcast %cst_21 : f32 to vector<2x32xf32>
    %21 = arith.addf %20, %19 : vector<2x32xf32>
    %22 = arith.divf %20, %21 : vector<2x32xf32>
    %23 = vector.extract_strided_slice %16 {offsets = [0, 32], sizes = [2, 32], strides = [1, 1]} : vector<2x128xf32> to vector<2x32xf32>
    %24 = arith.negf %23 : vector<2x32xf32>
    %25 = math.exp %24 : vector<2x32xf32>
    %cst_22 = arith.constant 1.000000e+00 : f32
    %26 = vector.broadcast %cst_22 : f32 to vector<2x32xf32>
    %27 = arith.addf %26, %25 : vector<2x32xf32>
    %28 = arith.divf %26, %27 : vector<2x32xf32>
    %29 = vector.extract_strided_slice %16 {offsets = [0, 64], sizes = [2, 32], strides = [1, 1]} : vector<2x128xf32> to vector<2x32xf32>
    %30 = math.tanh %29 : vector<2x32xf32>
    %31 = vector.extract_strided_slice %16 {offsets = [0, 96], sizes = [2, 32], strides = [1, 1]} : vector<2x128xf32> to vector<2x32xf32>
    %32 = arith.negf %31 : vector<2x32xf32>
    %33 = math.exp %32 : vector<2x32xf32>
    %cst_23 = arith.constant 1.000000e+00 : f32
    %34 = vector.broadcast %cst_23 : f32 to vector<2x32xf32>
    %35 = arith.addf %34, %33 : vector<2x32xf32>
    %36 = arith.divf %34, %35 : vector<2x32xf32>
    %37 = arith.mulf %28, %9 : vector<2x32xf32>
    %38 = arith.mulf %22, %30 : vector<2x32xf32>
    %39 = arith.addf %37, %38 : vector<2x32xf32>
    %40 = math.tanh %39 : vector<2x32xf32>
    %41 = arith.mulf %36, %40 : vector<2x32xf32>
    %42 = vector.shape_cast %41 : vector<2x32xf32> to vector<2x1x32xf32>
    %c0_24 = arith.constant 0 : index
    %c0_25 = arith.constant 0 : index
    %c0_26 = arith.constant 0 : index
    %43 = vector.load %arg14[%c0_24, %c0_25, %c0_26] : memref<2x8x32xf32, #tpu.memory_space<vmem>>, vector<2x1x32xf32>
    tpu.vector_store %arg14[%c0_24, %c0_25, %c0_26], %42 {strides = array<i32>} : memref<2x8x32xf32, #tpu.memory_space<vmem>>, vector<2x1x32xf32>,
    %c1 = arith.constant 1 : index
    %c0_27 = arith.constant 0 : index
    %c0_28 = arith.constant 0 : index
    %44 = vector.load %arg0[%c1, %c0_27, %c0_28] : memref<8x2x16xf32, #tpu.memory_space<vmem>>, vector<1x2x16xf32>
    %45 = vector.shape_cast %44 : vector<1x2x16xf32> to vector<2x16xf32>
    %cst_29 = arith.constant dense<0.000000e+00> : vector<2x128xf32>
    %46 = tpu.matmul %45, %0, %cst_29 {dimension_numbers = #tpu.dot_dimension_numbers<[1], [0], [0], [1], [0, 0, 1, 1], [], []>} : vector<2x16xf32>, vector<16x128xf32>, vector<2x128xf32> -> vector<2x128xf32>
    %cst_30 = arith.constant dense<0.000000e+00> : vector<2x128xf32>
    %47 = tpu.matmul %41, %1, %cst_30 {dimension_numbers = #tpu.dot_dimension_numbers<[1], [0], [0], [1], [0, 0, 1, 1], [], []>} : vector<2x32xf32>, vector<32x128xf32>, vector<2x128xf32> -> vector<2x128xf32>
    %48 = arith.addf %46, %47 : vector<2x128xf32>
    %49 = vector.broadcast %2 : vector<1x128xf32> to vector<2x128xf32>
    %50 = arith.addf %48, %49 : vector<2x128xf32>
    %51 = vector.extract_strided_slice %50 {offsets = [0, 0], sizes = [2, 32], strides = [1, 1]} : vector<2x128xf32> to vector<2x32xf32>
    %52 = arith.negf %51 : vector<2x32xf32>
    %53 = math.exp %52 : vector<2x32xf32>
    %cst_31 = arith.constant 1.000000e+00 : f32
    %54 = vector.broadcast %cst_31 : f32 to vector<2x32xf32>
    %55 = arith.addf %54, %53 : vector<2x32xf32>
    %56 = arith.divf %54, %55 : vector<2x32xf32>
    %57 = vector.extract_strided_slice %50 {offsets = [0, 32], sizes = [2, 32], strides = [1, 1]} : vector<2x128xf32> to vector<2x32xf32>
    %58 = arith.negf %57 : vector<2x32xf32>
    %59 = math.exp %58 : vector<2x32xf32>
    %cst_32 = arith.constant 1.000000e+00 : f32
    %60 = vector.broadcast %cst_32 : f32 to vector<2x32xf32>
    %61 = arith.addf %60, %59 : vector<2x32xf32>
    %62 = arith.divf %60, %61 : vector<2x32xf32>
    %63 = vector.extract_strided_slice %50 {offsets = [0, 64], sizes = [2, 32], strides = [1, 1]} : vector<2x128xf32> to vector<2x32xf32>
    %64 = math.tanh %63 : vector<2x32xf32>
    %65 = vector.extract_strided_slice %50 {offsets = [0, 96], sizes = [2, 32], strides = [1, 1]} : vector<2x128xf32> to vector<2x32xf32>
    %66 = arith.negf %65 : vector<2x32xf32>
    %67 = math.exp %66 : vector<2x32xf32>
    %cst_33 = arith.constant 1.000000e+00 : f32
    %68 = vector.broadcast %cst_33 : f32 to vector<2x32xf32>
    %69 = arith.addf %68, %67 : vector<2x32xf32>
    %70 = arith.divf %68, %69 : vector<2x32xf32>
    %71 = arith.mulf %62, %39 : vector<2x32xf32>
    %72 = arith.mulf %56, %64 : vector<2x32xf32>
    %73 = arith.addf %71, %72 : vector<2x32xf32>
    %74 = math.tanh %73 : vector<2x32xf32>
    %75 = arith.mulf %70, %74 : vector<2x32xf32>
    %76 = vector.shape_cast %75 : vector<2x32xf32> to vector<2x1x32xf32>
    %c0_34 = arith.constant 0 : index
    %c1_35 = arith.constant 1 : index
    %c0_36 = arith.constant 0 : index
    %77 = vector.load %arg14[%c0_34, %c1_35, %c0_36] : memref<2x8x32xf32, #tpu.memory_space<vmem>>, vector<2x1x32xf32>
    tpu.vector_store %arg14[%c0_34, %c1_35, %c0_36], %76 {strides = array<i32>} : memref<2x8x32xf32, #tpu.memory_space<vmem>>, vector<2x1x32xf32>,
    %c2 = arith.constant 2 : index
    %c0_37 = arith.constant 0 : index
    %c0_38 = arith.constant 0 : index
    %78 = vector.load %arg0[%c2, %c0_37, %c0_38] : memref<8x2x16xf32, #tpu.memory_space<vmem>>, vector<1x2x16xf32>
    %79 = vector.shape_cast %78 : vector<1x2x16xf32> to vector<2x16xf32>
    %cst_39 = arith.constant dense<0.000000e+00> : vector<2x128xf32>
    %80 = tpu.matmul %79, %0, %cst_39 {dimension_numbers = #tpu.dot_dimension_numbers<[1], [0], [0], [1], [0, 0, 1, 1], [], []>} : vector<2x16xf32>, vector<16x128xf32>, vector<2x128xf32> -> vector<2x128xf32>
    %cst_40 = arith.constant dense<0.000000e+00> : vector<2x128xf32>
    %81 = tpu.matmul %75, %1, %cst_40 {dimension_numbers = #tpu.dot_dimension_numbers<[1], [0], [0], [1], [0, 0, 1, 1], [], []>} : vector<2x32xf32>, vector<32x128xf32>, vector<2x128xf32> -> vector<2x128xf32>
    %82 = arith.addf %80, %81 : vector<2x128xf32>
    %83 = vector.broadcast %2 : vector<1x128xf32> to vector<2x128xf32>
    %84 = arith.addf %82, %83 : vector<2x128xf32>
    %85 = vector.extract_strided_slice %84 {offsets = [0, 0], sizes = [2, 32], strides = [1, 1]} : vector<2x128xf32> to vector<2x32xf32>
    %86 = arith.negf %85 : vector<2x32xf32>
    %87 = math.exp %86 : vector<2x32xf32>
    %cst_41 = arith.constant 1.000000e+00 : f32
    %88 = vector.broadcast %cst_41 : f32 to vector<2x32xf32>
    %89 = arith.addf %88, %87 : vector<2x32xf32>
    %90 = arith.divf %88, %89 : vector<2x32xf32>
    %91 = vector.extract_strided_slice %84 {offsets = [0, 32], sizes = [2, 32], strides = [1, 1]} : vector<2x128xf32> to vector<2x32xf32>
    %92 = arith.negf %91 : vector<2x32xf32>
    %93 = math.exp %92 : vector<2x32xf32>
    %cst_42 = arith.constant 1.000000e+00 : f32
    %94 = vector.broadcast %cst_42 : f32 to vector<2x32xf32>
    %95 = arith.addf %94, %93 : vector<2x32xf32>
    %96 = arith.divf %94, %95 : vector<2x32xf32>
    %97 = vector.extract_strided_slice %84 {offsets = [0, 64], sizes = [2, 32], strides = [1, 1]} : vector<2x128xf32> to vector<2x32xf32>
    %98 = math.tanh %97 : vector<2x32xf32>
    %99 = vector.extract_strided_slice %84 {offsets = [0, 96], sizes = [2, 32], strides = [1, 1]} : vector<2x128xf32> to vector<2x32xf32>
    %100 = arith.negf %99 : vector<2x32xf32>
    %101 = math.exp %100 : vector<2x32xf32>
    %cst_43 = arith.constant 1.000000e+00 : f32
    %102 = vector.broadcast %cst_43 : f32 to vector<2x32xf32>
    %103 = arith.addf %102, %101 : vector<2x32xf32>
    %104 = arith.divf %102, %103 : vector<2x32xf32>
    %105 = arith.mulf %96, %73 : vector<2x32xf32>
    %106 = arith.mulf %90, %98 : vector<2x32xf32>
    %107 = arith.addf %105, %106 : vector<2x32xf32>
    %108 = math.tanh %107 : vector<2x32xf32>
    %109 = arith.mulf %104, %108 : vector<2x32xf32>
    %110 = vector.shape_cast %109 : vector<2x32xf32> to vector<2x1x32xf32>
    %c0_44 = arith.constant 0 : index
    %c2_45 = arith.constant 2 : index
    %c0_46 = arith.constant 0 : index
    %111 = vector.load %arg14[%c0_44, %c2_45, %c0_46] : memref<2x8x32xf32, #tpu.memory_space<vmem>>, vector<2x1x32xf32>
    tpu.vector_store %arg14[%c0_44, %c2_45, %c0_46], %110 {strides = array<i32>} : memref<2x8x32xf32, #tpu.memory_space<vmem>>, vector<2x1x32xf32>,
    %c3 = arith.constant 3 : index
    %c0_47 = arith.constant 0 : index
    %c0_48 = arith.constant 0 : index
    %112 = vector.load %arg0[%c3, %c0_47, %c0_48] : memref<8x2x16xf32, #tpu.memory_space<vmem>>, vector<1x2x16xf32>
    %113 = vector.shape_cast %112 : vector<1x2x16xf32> to vector<2x16xf32>
    %cst_49 = arith.constant dense<0.000000e+00> : vector<2x128xf32>
    %114 = tpu.matmul %113, %0, %cst_49 {dimension_numbers = #tpu.dot_dimension_numbers<[1], [0], [0], [1], [0, 0, 1, 1], [], []>} : vector<2x16xf32>, vector<16x128xf32>, vector<2x128xf32> -> vector<2x128xf32>
    %cst_50 = arith.constant dense<0.000000e+00> : vector<2x128xf32>
    %115 = tpu.matmul %109, %1, %cst_50 {dimension_numbers = #tpu.dot_dimension_numbers<[1], [0], [0], [1], [0, 0, 1, 1], [], []>} : vector<2x32xf32>, vector<32x128xf32>, vector<2x128xf32> -> vector<2x128xf32>
    %116 = arith.addf %114, %115 : vector<2x128xf32>
    %117 = vector.broadcast %2 : vector<1x128xf32> to vector<2x128xf32>
    %118 = arith.addf %116, %117 : vector<2x128xf32>
    %119 = vector.extract_strided_slice %118 {offsets = [0, 0], sizes = [2, 32], strides = [1, 1]} : vector<2x128xf32> to vector<2x32xf32>
    %120 = arith.negf %119 : vector<2x32xf32>
    %121 = math.exp %120 : vector<2x32xf32>
    %cst_51 = arith.constant 1.000000e+00 : f32
    %122 = vector.broadcast %cst_51 : f32 to vector<2x32xf32>
    %123 = arith.addf %122, %121 : vector<2x32xf32>
    %124 = arith.divf %122, %123 : vector<2x32xf32>
    %125 = vector.extract_strided_slice %118 {offsets = [0, 32], sizes = [2, 32], strides = [1, 1]} : vector<2x128xf32> to vector<2x32xf32>
    %126 = arith.negf %125 : vector<2x32xf32>
    %127 = math.exp %126 : vector<2x32xf32>
    %cst_52 = arith.constant 1.000000e+00 : f32
    %128 = vector.broadcast %cst_52 : f32 to vector<2x32xf32>
    %129 = arith.addf %128, %127 : vector<2x32xf32>
    %130 = arith.divf %128, %129 : vector<2x32xf32>
    %131 = vector.extract_strided_slice %118 {offsets = [0, 64], sizes = [2, 32], strides = [1, 1]} : vector<2x128xf32> to vector<2x32xf32>
    %132 = math.tanh %131 : vector<2x32xf32>
    %133 = vector.extract_strided_slice %118 {offsets = [0, 96], sizes = [2, 32], strides = [1, 1]} : vector<2x128xf32> to vector<2x32xf32>
    %134 = arith.negf %133 : vector<2x32xf32>
    %135 = math.exp %134 : vector<2x32xf32>
    %cst_53 = arith.constant 1.000000e+00 : f32
    %136 = vector.broadcast %cst_53 : f32 to vector<2x32xf32>
    %137 = arith.addf %136, %135 : vector<2x32xf32>
    %138 = arith.divf %136, %137 : vector<2x32xf32>
    %139 = arith.mulf %130, %107 : vector<2x32xf32>
    %140 = arith.mulf %124, %132 : vector<2x32xf32>
    %141 = arith.addf %139, %140 : vector<2x32xf32>
    %142 = math.tanh %141 : vector<2x32xf32>
    %143 = arith.mulf %138, %142 : vector<2x32xf32>
    %144 = vector.shape_cast %143 : vector<2x32xf32> to vector<2x1x32xf32>
    %c0_54 = arith.constant 0 : index
    %c3_55 = arith.constant 3 : index
    %c0_56 = arith.constant 0 : index
    %145 = vector.load %arg14[%c0_54, %c3_55, %c0_56] : memref<2x8x32xf32, #tpu.memory_space<vmem>>, vector<2x1x32xf32>
    tpu.vector_store %arg14[%c0_54, %c3_55, %c0_56], %144 {strides = array<i32>} : memref<2x8x32xf32, #tpu.memory_space<vmem>>, vector<2x1x32xf32>,
    %c4 = arith.constant 4 : index
    %c0_57 = arith.constant 0 : index
    %c0_58 = arith.constant 0 : index
    %146 = vector.load %arg0[%c4, %c0_57, %c0_58] : memref<8x2x16xf32, #tpu.memory_space<vmem>>, vector<1x2x16xf32>
    %147 = vector.shape_cast %146 : vector<1x2x16xf32> to vector<2x16xf32>
    %cst_59 = arith.constant dense<0.000000e+00> : vector<2x128xf32>
    %148 = tpu.matmul %147, %0, %cst_59 {dimension_numbers = #tpu.dot_dimension_numbers<[1], [0], [0], [1], [0, 0, 1, 1], [], []>} : vector<2x16xf32>, vector<16x128xf32>, vector<2x128xf32> -> vector<2x128xf32>
    %cst_60 = arith.constant dense<0.000000e+00> : vector<2x128xf32>
    %149 = tpu.matmul %143, %1, %cst_60 {dimension_numbers = #tpu.dot_dimension_numbers<[1], [0], [0], [1], [0, 0, 1, 1], [], []>} : vector<2x32xf32>, vector<32x128xf32>, vector<2x128xf32> -> vector<2x128xf32>
    %150 = arith.addf %148, %149 : vector<2x128xf32>
    %151 = vector.broadcast %2 : vector<1x128xf32> to vector<2x128xf32>
    %152 = arith.addf %150, %151 : vector<2x128xf32>
    %153 = vector.extract_strided_slice %152 {offsets = [0, 0], sizes = [2, 32], strides = [1, 1]} : vector<2x128xf32> to vector<2x32xf32>
    %154 = arith.negf %153 : vector<2x32xf32>
    %155 = math.exp %154 : vector<2x32xf32>
    %cst_61 = arith.constant 1.000000e+00 : f32
    %156 = vector.broadcast %cst_61 : f32 to vector<2x32xf32>
    %157 = arith.addf %156, %155 : vector<2x32xf32>
    %158 = arith.divf %156, %157 : vector<2x32xf32>
    %159 = vector.extract_strided_slice %152 {offsets = [0, 32], sizes = [2, 32], strides = [1, 1]} : vector<2x128xf32> to vector<2x32xf32>
    %160 = arith.negf %159 : vector<2x32xf32>
    %161 = math.exp %160 : vector<2x32xf32>
    %cst_62 = arith.constant 1.000000e+00 : f32
    %162 = vector.broadcast %cst_62 : f32 to vector<2x32xf32>
    %163 = arith.addf %162, %161 : vector<2x32xf32>
    %164 = arith.divf %162, %163 : vector<2x32xf32>
    %165 = vector.extract_strided_slice %152 {offsets = [0, 64], sizes = [2, 32], strides = [1, 1]} : vector<2x128xf32> to vector<2x32xf32>
    %166 = math.tanh %165 : vector<2x32xf32>
    %167 = vector.extract_strided_slice %152 {offsets = [0, 96], sizes = [2, 32], strides = [1, 1]} : vector<2x128xf32> to vector<2x32xf32>
    %168 = arith.negf %167 : vector<2x32xf32>
    %169 = math.exp %168 : vector<2x32xf32>
    %cst_63 = arith.constant 1.000000e+00 : f32
    %170 = vector.broadcast %cst_63 : f32 to vector<2x32xf32>
    %171 = arith.addf %170, %169 : vector<2x32xf32>
    %172 = arith.divf %170, %171 : vector<2x32xf32>
    %173 = arith.mulf %164, %141 : vector<2x32xf32>
    %174 = arith.mulf %158, %166 : vector<2x32xf32>
    %175 = arith.addf %173, %174 : vector<2x32xf32>
    %176 = math.tanh %175 : vector<2x32xf32>
    %177 = arith.mulf %172, %176 : vector<2x32xf32>
    %178 = vector.shape_cast %177 : vector<2x32xf32> to vector<2x1x32xf32>
    %c0_64 = arith.constant 0 : index
    %c4_65 = arith.constant 4 : index
    %c0_66 = arith.constant 0 : index
    %179 = vector.load %arg14[%c0_64, %c4_65, %c0_66] : memref<2x8x32xf32, #tpu.memory_space<vmem>>, vector<2x1x32xf32>
    tpu.vector_store %arg14[%c0_64, %c4_65, %c0_66], %178 {strides = array<i32>} : memref<2x8x32xf32, #tpu.memory_space<vmem>>, vector<2x1x32xf32>,
    %c5 = arith.constant 5 : index
    %c0_67 = arith.constant 0 : index
    %c0_68 = arith.constant 0 : index
    %180 = vector.load %arg0[%c5, %c0_67, %c0_68] : memref<8x2x16xf32, #tpu.memory_space<vmem>>, vector<1x2x16xf32>
    %181 = vector.shape_cast %180 : vector<1x2x16xf32> to vector<2x16xf32>
    %cst_69 = arith.constant dense<0.000000e+00> : vector<2x128xf32>
    %182 = tpu.matmul %181, %0, %cst_69 {dimension_numbers = #tpu.dot_dimension_numbers<[1], [0], [0], [1], [0, 0, 1, 1], [], []>} : vector<2x16xf32>, vector<16x128xf32>, vector<2x128xf32> -> vector<2x128xf32>
    %cst_70 = arith.constant dense<0.000000e+00> : vector<2x128xf32>
    %183 = tpu.matmul %177, %1, %cst_70 {dimension_numbers = #tpu.dot_dimension_numbers<[1], [0], [0], [1], [0, 0, 1, 1], [], []>} : vector<2x32xf32>, vector<32x128xf32>, vector<2x128xf32> -> vector<2x128xf32>
    %184 = arith.addf %182, %183 : vector<2x128xf32>
    %185 = vector.broadcast %2 : vector<1x128xf32> to vector<2x128xf32>
    %186 = arith.addf %184, %185 : vector<2x128xf32>
    %187 = vector.extract_strided_slice %186 {offsets = [0, 0], sizes = [2, 32], strides = [1, 1]} : vector<2x128xf32> to vector<2x32xf32>
    %188 = arith.negf %187 : vector<2x32xf32>
    %189 = math.exp %188 : vector<2x32xf32>
    %cst_71 = arith.constant 1.000000e+00 : f32
    %190 = vector.broadcast %cst_71 : f32 to vector<2x32xf32>
    %191 = arith.addf %190, %189 : vector<2x32xf32>
    %192 = arith.divf %190, %191 : vector<2x32xf32>
    %193 = vector.extract_strided_slice %186 {offsets = [0, 32], sizes = [2, 32], strides = [1, 1]} : vector<2x128xf32> to vector<2x32xf32>
    %194 = arith.negf %193 : vector<2x32xf32>
    %195 = math.exp %194 : vector<2x32xf32>
    %cst_72 = arith.constant 1.000000e+00 : f32
    %196 = vector.broadcast %cst_72 : f32 to vector<2x32xf32>
    %197 = arith.addf %196, %195 : vector<2x32xf32>
    %198 = arith.divf %196, %197 : vector<2x32xf32>
    %199 = vector.extract_strided_slice %186 {offsets = [0, 64], sizes = [2, 32], strides = [1, 1]} : vector<2x128xf32> to vector<2x32xf32>
    %200 = math.tanh %199 : vector<2x32xf32>
    %201 = vector.extract_strided_slice %186 {offsets = [0, 96], sizes = [2, 32], strides = [1, 1]} : vector<2x128xf32> to vector<2x32xf32>
    %202 = arith.negf %201 : vector<2x32xf32>
    %203 = math.exp %202 : vector<2x32xf32>
    %cst_73 = arith.constant 1.000000e+00 : f32
    %204 = vector.broadcast %cst_73 : f32 to vector<2x32xf32>
    %205 = arith.addf %204, %203 : vector<2x32xf32>
    %206 = arith.divf %204, %205 : vector<2x32xf32>
    %207 = arith.mulf %198, %175 : vector<2x32xf32>
    %208 = arith.mulf %192, %200 : vector<2x32xf32>
    %209 = arith.addf %207, %208 : vector<2x32xf32>
    %210 = math.tanh %209 : vector<2x32xf32>
    %211 = arith.mulf %206, %210 : vector<2x32xf32>
    %212 = vector.shape_cast %211 : vector<2x32xf32> to vector<2x1x32xf32>
    %c0_74 = arith.constant 0 : index
    %c5_75 = arith.constant 5 : index
    %c0_76 = arith.constant 0 : index
    %213 = vector.load %arg14[%c0_74, %c5_75, %c0_76] : memref<2x8x32xf32, #tpu.memory_space<vmem>>, vector<2x1x32xf32>
    tpu.vector_store %arg14[%c0_74, %c5_75, %c0_76], %212 {strides = array<i32>} : memref<2x8x32xf32, #tpu.memory_space<vmem>>, vector<2x1x32xf32>,
    %c6 = arith.constant 6 : index
    %c0_77 = arith.constant 0 : index
    %c0_78 = arith.constant 0 : index
    %214 = vector.load %arg0[%c6, %c0_77, %c0_78] : memref<8x2x16xf32, #tpu.memory_space<vmem>>, vector<1x2x16xf32>
    %215 = vector.shape_cast %214 : vector<1x2x16xf32> to vector<2x16xf32>
    %cst_79 = arith.constant dense<0.000000e+00> : vector<2x128xf32>
    %216 = tpu.matmul %215, %0, %cst_79 {dimension_numbers = #tpu.dot_dimension_numbers<[1], [0], [0], [1], [0, 0, 1, 1], [], []>} : vector<2x16xf32>, vector<16x128xf32>, vector<2x128xf32> -> vector<2x128xf32>
    %cst_80 = arith.constant dense<0.000000e+00> : vector<2x128xf32>
    %217 = tpu.matmul %211, %1, %cst_80 {dimension_numbers = #tpu.dot_dimension_numbers<[1], [0], [0], [1], [0, 0, 1, 1], [], []>} : vector<2x32xf32>, vector<32x128xf32>, vector<2x128xf32> -> vector<2x128xf32>
    %218 = arith.addf %216, %217 : vector<2x128xf32>
    %219 = vector.broadcast %2 : vector<1x128xf32> to vector<2x128xf32>
    %220 = arith.addf %218, %219 : vector<2x128xf32>
    %221 = vector.extract_strided_slice %220 {offsets = [0, 0], sizes = [2, 32], strides = [1, 1]} : vector<2x128xf32> to vector<2x32xf32>
    %222 = arith.negf %221 : vector<2x32xf32>
    %223 = math.exp %222 : vector<2x32xf32>
    %cst_81 = arith.constant 1.000000e+00 : f32
    %224 = vector.broadcast %cst_81 : f32 to vector<2x32xf32>
    %225 = arith.addf %224, %223 : vector<2x32xf32>
    %226 = arith.divf %224, %225 : vector<2x32xf32>
    %227 = vector.extract_strided_slice %220 {offsets = [0, 32], sizes = [2, 32], strides = [1, 1]} : vector<2x128xf32> to vector<2x32xf32>
    %228 = arith.negf %227 : vector<2x32xf32>
    %229 = math.exp %228 : vector<2x32xf32>
    %cst_82 = arith.constant 1.000000e+00 : f32
    %230 = vector.broadcast %cst_82 : f32 to vector<2x32xf32>
    %231 = arith.addf %230, %229 : vector<2x32xf32>
    %232 = arith.divf %230, %231 : vector<2x32xf32>
    %233 = vector.extract_strided_slice %220 {offsets = [0, 64], sizes = [2, 32], strides = [1, 1]} : vector<2x128xf32> to vector<2x32xf32>
    %234 = math.tanh %233 : vector<2x32xf32>
    %235 = vector.extract_strided_slice %220 {offsets = [0, 96], sizes = [2, 32], strides = [1, 1]} : vector<2x128xf32> to vector<2x32xf32>
    %236 = arith.negf %235 : vector<2x32xf32>
    %237 = math.exp %236 : vector<2x32xf32>
    %cst_83 = arith.constant 1.000000e+00 : f32
    %238 = vector.broadcast %cst_83 : f32 to vector<2x32xf32>
    %239 = arith.addf %238, %237 : vector<2x32xf32>
    %240 = arith.divf %238, %239 : vector<2x32xf32>
    %241 = arith.mulf %232, %209 : vector<2x32xf32>
    %242 = arith.mulf %226, %234 : vector<2x32xf32>
    %243 = arith.addf %241, %242 : vector<2x32xf32>
    %244 = math.tanh %243 : vector<2x32xf32>
    %245 = arith.mulf %240, %244 : vector<2x32xf32>
    %246 = vector.shape_cast %245 : vector<2x32xf32> to vector<2x1x32xf32>
    %c0_84 = arith.constant 0 : index
    %c6_85 = arith.constant 6 : index
    %c0_86 = arith.constant 0 : index
    %247 = vector.load %arg14[%c0_84, %c6_85, %c0_86] : memref<2x8x32xf32, #tpu.memory_space<vmem>>, vector<2x1x32xf32>
    tpu.vector_store %arg14[%c0_84, %c6_85, %c0_86], %246 {strides = array<i32>} : memref<2x8x32xf32, #tpu.memory_space<vmem>>, vector<2x1x32xf32>,
    %c7 = arith.constant 7 : index
    %c0_87 = arith.constant 0 : index
    %c0_88 = arith.constant 0 : index
    %248 = vector.load %arg0[%c7, %c0_87, %c0_88] : memref<8x2x16xf32, #tpu.memory_space<vmem>>, vector<1x2x16xf32>
    %249 = vector.shape_cast %248 : vector<1x2x16xf32> to vector<2x16xf32>
    %cst_89 = arith.constant dense<0.000000e+00> : vector<2x128xf32>
    %250 = tpu.matmul %249, %0, %cst_89 {dimension_numbers = #tpu.dot_dimension_numbers<[1], [0], [0], [1], [0, 0, 1, 1], [], []>} : vector<2x16xf32>, vector<16x128xf32>, vector<2x128xf32> -> vector<2x128xf32>
    %cst_90 = arith.constant dense<0.000000e+00> : vector<2x128xf32>
    %251 = tpu.matmul %245, %1, %cst_90 {dimension_numbers = #tpu.dot_dimension_numbers<[1], [0], [0], [1], [0, 0, 1, 1], [], []>} : vector<2x32xf32>, vector<32x128xf32>, vector<2x128xf32> -> vector<2x128xf32>
    %252 = arith.addf %250, %251 : vector<2x128xf32>
    %253 = vector.broadcast %2 : vector<1x128xf32> to vector<2x128xf32>
    %254 = arith.addf %252, %253 : vector<2x128xf32>
    %255 = vector.extract_strided_slice %254 {offsets = [0, 0], sizes = [2, 32], strides = [1, 1]} : vector<2x128xf32> to vector<2x32xf32>
    %256 = arith.negf %255 : vector<2x32xf32>
    %257 = math.exp %256 : vector<2x32xf32>
    %cst_91 = arith.constant 1.000000e+00 : f32
    %258 = vector.broadcast %cst_91 : f32 to vector<2x32xf32>
    %259 = arith.addf %258, %257 : vector<2x32xf32>
    %260 = arith.divf %258, %259 : vector<2x32xf32>
    %261 = vector.extract_strided_slice %254 {offsets = [0, 32], sizes = [2, 32], strides = [1, 1]} : vector<2x128xf32> to vector<2x32xf32>
    %262 = arith.negf %261 : vector<2x32xf32>
    %263 = math.exp %262 : vector<2x32xf32>
    %cst_92 = arith.constant 1.000000e+00 : f32
    %264 = vector.broadcast %cst_92 : f32 to vector<2x32xf32>
    %265 = arith.addf %264, %263 : vector<2x32xf32>
    %266 = arith.divf %264, %265 : vector<2x32xf32>
    %267 = vector.extract_strided_slice %254 {offsets = [0, 64], sizes = [2, 32], strides = [1, 1]} : vector<2x128xf32> to vector<2x32xf32>
    %268 = math.tanh %267 : vector<2x32xf32>
    %269 = vector.extract_strided_slice %254 {offsets = [0, 96], sizes = [2, 32], strides = [1, 1]} : vector<2x128xf32> to vector<2x32xf32>
    %270 = arith.negf %269 : vector<2x32xf32>
    %271 = math.exp %270 : vector<2x32xf32>
    %cst_93 = arith.constant 1.000000e+00 : f32
    %272 = vector.broadcast %cst_93 : f32 to vector<2x32xf32>
    %273 = arith.addf %272, %271 : vector<2x32xf32>
    %274 = arith.divf %272, %273 : vector<2x32xf32>
    %275 = arith.mulf %266, %243 : vector<2x32xf32>
    %276 = arith.mulf %260, %268 : vector<2x32xf32>
    %277 = arith.addf %275, %276 : vector<2x32xf32>
    %278 = math.tanh %277 : vector<2x32xf32>
    %279 = arith.mulf %274, %278 : vector<2x32xf32>
    %280 = vector.shape_cast %279 : vector<2x32xf32> to vector<2x1x32xf32>
    %c0_94 = arith.constant 0 : index
    %c7_95 = arith.constant 7 : index
    %c0_96 = arith.constant 0 : index
    %281 = vector.load %arg14[%c0_94, %c7_95, %c0_96] : memref<2x8x32xf32, #tpu.memory_space<vmem>>, vector<2x1x32xf32>
    tpu.vector_store %arg14[%c0_94, %c7_95, %c0_96], %280 {strides = array<i32>} : memref<2x8x32xf32, #tpu.memory_space<vmem>>, vector<2x1x32xf32>,
    %c0_97 = arith.constant 0 : index
    %c0_98 = arith.constant 0 : index
    %c0_99 = arith.constant 0 : index
    %282 = vector.load %arg14[%c0_97, %c0_98, %c0_99] : memref<2x8x32xf32, #tpu.memory_space<vmem>>, vector<2x8x32xf32>
    %c0_100 = arith.constant 0 : index
    %c0_101 = arith.constant 0 : index
    %283 = vector.load %arg1[%c0_100, %c0_101] : memref<2x8xf32, #tpu.memory_space<vmem>>, vector<2x8xf32>
    %cst_102 = arith.constant 1.000000e+00 : f32
    %284 = vector.broadcast %cst_102 : f32 to vector<2x8xf32>
    %285 = arith.subf %283, %284 : vector<2x8xf32>
    %cst_103 = arith.constant 1.000000e+09 : f32
    %286 = vector.broadcast %cst_103 : f32 to vector<2x8xf32>
    %287 = arith.mulf %285, %286 : vector<2x8xf32>
    %cst_104 = arith.constant 1.000000e+00 : f32
    %288 = vector.broadcast %cst_104 : f32 to vector<2x8xf32>
    %289 = arith.mulf %287, %288 : vector<2x8xf32>
    %290 = tpu.iota {dimensions = array<i32: 1>} : vector<2x128xi32>
    %c0_105 = arith.constant 0 : index
    %c0_106 = arith.constant 0 : index
    %291 = vector.load %arg3[%c0_105, %c0_106] : memref<2x4xi32, #tpu.memory_space<vmem>>, vector<2x4xi32>
    %cst_107 = arith.constant 0.000000e+00 : f32
    %292 = vector.broadcast %cst_107 : f32 to vector<2x1xf32>
    %c0_108 = arith.constant 0 : index
    %c0_109 = arith.constant 0 : index
    %c0_110 = arith.constant 0 : index
    %293 = vector.load %arg2[%c0_108, %c0_109, %c0_110] : memref<4x2x16xf32, #tpu.memory_space<vmem>>, vector<1x2x16xf32>
    %294 = vector.shape_cast %293 : vector<1x2x16xf32> to vector<2x16xf32>
    %cst_111 = arith.constant dense<0.000000e+00> : vector<2x128xf32>
    %295 = tpu.matmul %294, %3, %cst_111 {dimension_numbers = #tpu.dot_dimension_numbers<[1], [0], [0], [1], [0, 0, 1, 1], [], []>} : vector<2x16xf32>, vector<16x128xf32>, vector<2x128xf32> -> vector<2x128xf32>
    %cst_112 = arith.constant dense<0.000000e+00> : vector<2x128xf32>
    %296 = tpu.matmul %279, %4, %cst_112 {dimension_numbers = #tpu.dot_dimension_numbers<[1], [0], [0], [1], [0, 0, 1, 1], [], []>} : vector<2x32xf32>, vector<32x128xf32>, vector<2x128xf32> -> vector<2x128xf32>
    %297 = arith.addf %295, %296 : vector<2x128xf32>
    %298 = vector.broadcast %5 : vector<1x128xf32> to vector<2x128xf32>
    %299 = arith.addf %297, %298 : vector<2x128xf32>
    %300 = vector.extract_strided_slice %299 {offsets = [0, 0], sizes = [2, 32], strides = [1, 1]} : vector<2x128xf32> to vector<2x32xf32>
    %301 = arith.negf %300 : vector<2x32xf32>
    %302 = math.exp %301 : vector<2x32xf32>
    %cst_113 = arith.constant 1.000000e+00 : f32
    %303 = vector.broadcast %cst_113 : f32 to vector<2x32xf32>
    %304 = arith.addf %303, %302 : vector<2x32xf32>
    %305 = arith.divf %303, %304 : vector<2x32xf32>
    %306 = vector.extract_strided_slice %299 {offsets = [0, 32], sizes = [2, 32], strides = [1, 1]} : vector<2x128xf32> to vector<2x32xf32>
    %307 = arith.negf %306 : vector<2x32xf32>
    %308 = math.exp %307 : vector<2x32xf32>
    %cst_114 = arith.constant 1.000000e+00 : f32
    %309 = vector.broadcast %cst_114 : f32 to vector<2x32xf32>
    %310 = arith.addf %309, %308 : vector<2x32xf32>
    %311 = arith.divf %309, %310 : vector<2x32xf32>
    %312 = vector.extract_strided_slice %299 {offsets = [0, 64], sizes = [2, 32], strides = [1, 1]} : vector<2x128xf32> to vector<2x32xf32>
    %313 = math.tanh %312 : vector<2x32xf32>
    %314 = vector.extract_strided_slice %299 {offsets = [0, 96], sizes = [2, 32], strides = [1, 1]} : vector<2x128xf32> to vector<2x32xf32>
    %315 = arith.negf %314 : vector<2x32xf32>
    %316 = math.exp %315 : vector<2x32xf32>
    %cst_115 = arith.constant 1.000000e+00 : f32
    %317 = vector.broadcast %cst_115 : f32 to vector<2x32xf32>
    %318 = arith.addf %317, %316 : vector<2x32xf32>
    %319 = arith.divf %317, %318 : vector<2x32xf32>
    %320 = arith.mulf %311, %277 : vector<2x32xf32>
    %321 = arith.mulf %305, %313 : vector<2x32xf32>
    %322 = arith.addf %320, %321 : vector<2x32xf32>
    %323 = math.tanh %322 : vector<2x32xf32>
    %324 = arith.mulf %319, %323 : vector<2x32xf32>
    %325 = vector.shape_cast %324 : vector<2x32xf32> to vector<2x1x32xf32>
    %326 = vector.broadcast %325 : vector<2x1x32xf32> to vector<2x8x32xf32>
    %327 = arith.mulf %326, %282 : vector<2x8x32xf32>
    %cst_116 = arith.constant dense<0.000000e+00> : vector<2x8xf32>
    %328 = vector.multi_reduction <add>, %327, %cst_116 [2] : vector<2x8x32xf32> to vector<2x8xf32>
    %329 = arith.addf %328, %289 : vector<2x8xf32>
    %cst_117 = arith.constant dense<0xFF800000> : vector<2xf32>
    %330 = vector.multi_reduction <maximumf>, %329, %cst_117 [1] : vector<2x8xf32> to vector<2xf32>
    %331 = vector.shape_cast %330 : vector<2xf32> to vector<2x1xf32>
    %332 = vector.broadcast %331 : vector<2x1xf32> to vector<2x8xf32>
    %333 = arith.subf %329, %332 : vector<2x8xf32>
    %334 = math.exp %333 : vector<2x8xf32>
    %cst_118 = arith.constant dense<0.000000e+00> : vector<2xf32>
    %335 = vector.multi_reduction <add>, %334, %cst_118 [1] : vector<2x8xf32> to vector<2xf32>
    %336 = vector.shape_cast %335 : vector<2xf32> to vector<2x1xf32>
    %337 = tpu.reciprocal %336 {approx = true} : vector<2x1xf32> -> vector<2x1xf32>
    %338 = vector.broadcast %337 : vector<2x1xf32> to vector<2x8xf32>
    %339 = arith.mulf %334, %338 : vector<2x8xf32>
    %340 = vector.shape_cast %339 : vector<2x8xf32> to vector<2x8x1xf32>
    %341 = vector.broadcast %340 : vector<2x8x1xf32> to vector<2x8x32xf32>
    %342 = arith.mulf %341, %282 : vector<2x8x32xf32>
    %cst_119 = arith.constant dense<0.000000e+00> : vector<2x32xf32>
    %343 = vector.multi_reduction <add>, %342, %cst_119 [1] : vector<2x8x32xf32> to vector<2x32xf32>
    %344 = tpu.concatenate %324, %343 in 1 : vector<2x32xf32>, vector<2x32xf32> -> vector<2x64xf32>
    %cst_120 = arith.constant dense<0.000000e+00> : vector<2x128xf32>
    %345 = tpu.matmul %344, %6, %cst_120 {dimension_numbers = #tpu.dot_dimension_numbers<[1], [0], [0], [1], [0, 0, 1, 1], [], []>} : vector<2x64xf32>, vector<64x128xf32>, vector<2x128xf32> -> vector<2x128xf32>
    %346 = vector.broadcast %7 : vector<1x128xf32> to vector<2x128xf32>
    %347 = arith.addf %345, %346 : vector<2x128xf32>
    %cst_121 = arith.constant dense<0xFF800000> : vector<2xf32>
    %348 = vector.multi_reduction <maximumf>, %347, %cst_121 [1] : vector<2x128xf32> to vector<2xf32>
    %349 = vector.shape_cast %348 : vector<2xf32> to vector<2x1xf32>
    %350 = vector.broadcast %349 : vector<2x1xf32> to vector<2x128xf32>
    %351 = arith.subf %347, %350 : vector<2x128xf32>
    %352 = math.exp %351 : vector<2x128xf32>
    %cst_122 = arith.constant dense<0.000000e+00> : vector<2xf32>
    %353 = vector.multi_reduction <add>, %352, %cst_122 [1] : vector<2x128xf32> to vector<2xf32>
    %354 = vector.shape_cast %353 : vector<2xf32> to vector<2x1xf32>
    %355 = math.log %354 : vector<2x1xf32>
    %356 = vector.broadcast %355 : vector<2x1xf32> to vector<2x128xf32>
    %357 = arith.subf %351, %356 : vector<2x128xf32>
    %358 = vector.extract_strided_slice %291 {offsets = [0, 0], sizes = [2, 1], strides = [1, 1]} : vector<2x4xi32> to vector<2x1xi32>
    %359 = vector.broadcast %358 : vector<2x1xi32> to vector<2x128xi32>
    %360 = arith.cmpi eq, %290, %359 : vector<2x128xi32>
    %361 = arith.extui %360 : vector<2x128xi1> to vector<2x128xi32>
    %362 = arith.sitofp %361 : vector<2x128xi32> to vector<2x128xf32>
    %363 = arith.mulf %362, %357 : vector<2x128xf32>
    %cst_123 = arith.constant dense<0.000000e+00> : vector<2xf32>
    %364 = vector.multi_reduction <add>, %363, %cst_123 [1] : vector<2x128xf32> to vector<2xf32>
    %365 = vector.shape_cast %364 : vector<2xf32> to vector<2x1xf32>
    %cst_124 = arith.constant 0.000000e+00 : f32
    %366 = vector.broadcast %cst_124 : f32 to vector<2x1xf32>
    %367 = arith.subf %366, %365 : vector<2x1xf32>
    %c0_i32 = arith.constant 0 : i32
    %368 = vector.broadcast %c0_i32 : i32 to vector<2x1xi32>
    %369 = arith.cmpi ne, %358, %368 : vector<2x1xi32>
    %370 = arith.extui %369 : vector<2x1xi1> to vector<2x1xi32>
    %371 = arith.sitofp %370 : vector<2x1xi32> to vector<2x1xf32>
    %372 = arith.mulf %367, %371 : vector<2x1xf32>
    %373 = arith.addf %292, %372 : vector<2x1xf32>
    %c1_125 = arith.constant 1 : index
    %c0_126 = arith.constant 0 : index
    %c0_127 = arith.constant 0 : index
    %374 = vector.load %arg2[%c1_125, %c0_126, %c0_127] : memref<4x2x16xf32, #tpu.memory_space<vmem>>, vector<1x2x16xf32>
    %375 = vector.shape_cast %374 : vector<1x2x16xf32> to vector<2x16xf32>
    %cst_128 = arith.constant dense<0.000000e+00> : vector<2x128xf32>
    %376 = tpu.matmul %375, %3, %cst_128 {dimension_numbers = #tpu.dot_dimension_numbers<[1], [0], [0], [1], [0, 0, 1, 1], [], []>} : vector<2x16xf32>, vector<16x128xf32>, vector<2x128xf32> -> vector<2x128xf32>
    %cst_129 = arith.constant dense<0.000000e+00> : vector<2x128xf32>
    %377 = tpu.matmul %324, %4, %cst_129 {dimension_numbers = #tpu.dot_dimension_numbers<[1], [0], [0], [1], [0, 0, 1, 1], [], []>} : vector<2x32xf32>, vector<32x128xf32>, vector<2x128xf32> -> vector<2x128xf32>
    %378 = arith.addf %376, %377 : vector<2x128xf32>
    %379 = vector.broadcast %5 : vector<1x128xf32> to vector<2x128xf32>
    %380 = arith.addf %378, %379 : vector<2x128xf32>
    %381 = vector.extract_strided_slice %380 {offsets = [0, 0], sizes = [2, 32], strides = [1, 1]} : vector<2x128xf32> to vector<2x32xf32>
    %382 = arith.negf %381 : vector<2x32xf32>
    %383 = math.exp %382 : vector<2x32xf32>
    %cst_130 = arith.constant 1.000000e+00 : f32
    %384 = vector.broadcast %cst_130 : f32 to vector<2x32xf32>
    %385 = arith.addf %384, %383 : vector<2x32xf32>
    %386 = arith.divf %384, %385 : vector<2x32xf32>
    %387 = vector.extract_strided_slice %380 {offsets = [0, 32], sizes = [2, 32], strides = [1, 1]} : vector<2x128xf32> to vector<2x32xf32>
    %388 = arith.negf %387 : vector<2x32xf32>
    %389 = math.exp %388 : vector<2x32xf32>
    %cst_131 = arith.constant 1.000000e+00 : f32
    %390 = vector.broadcast %cst_131 : f32 to vector<2x32xf32>
    %391 = arith.addf %390, %389 : vector<2x32xf32>
    %392 = arith.divf %390, %391 : vector<2x32xf32>
    %393 = vector.extract_strided_slice %380 {offsets = [0, 64], sizes = [2, 32], strides = [1, 1]} : vector<2x128xf32> to vector<2x32xf32>
    %394 = math.tanh %393 : vector<2x32xf32>
    %395 = vector.extract_strided_slice %380 {offsets = [0, 96], sizes = [2, 32], strides = [1, 1]} : vector<2x128xf32> to vector<2x32xf32>
    %396 = arith.negf %395 : vector<2x32xf32>
    %397 = math.exp %396 : vector<2x32xf32>
    %cst_132 = arith.constant 1.000000e+00 : f32
    %398 = vector.broadcast %cst_132 : f32 to vector<2x32xf32>
    %399 = arith.addf %398, %397 : vector<2x32xf32>
    %400 = arith.divf %398, %399 : vector<2x32xf32>
    %401 = arith.mulf %392, %322 : vector<2x32xf32>
    %402 = arith.mulf %386, %394 : vector<2x32xf32>
    %403 = arith.addf %401, %402 : vector<2x32xf32>
    %404 = math.tanh %403 : vector<2x32xf32>
    %405 = arith.mulf %400, %404 : vector<2x32xf32>
    %406 = vector.shape_cast %405 : vector<2x32xf32> to vector<2x1x32xf32>
    %407 = vector.broadcast %406 : vector<2x1x32xf32> to vector<2x8x32xf32>
    %408 = arith.mulf %407, %282 : vector<2x8x32xf32>
    %cst_133 = arith.constant dense<0.000000e+00> : vector<2x8xf32>
    %409 = vector.multi_reduction <add>, %408, %cst_133 [2] : vector<2x8x32xf32> to vector<2x8xf32>
    %410 = arith.addf %409, %289 : vector<2x8xf32>
    %cst_134 = arith.constant dense<0xFF800000> : vector<2xf32>
    %411 = vector.multi_reduction <maximumf>, %410, %cst_134 [1] : vector<2x8xf32> to vector<2xf32>
    %412 = vector.shape_cast %411 : vector<2xf32> to vector<2x1xf32>
    %413 = vector.broadcast %412 : vector<2x1xf32> to vector<2x8xf32>
    %414 = arith.subf %410, %413 : vector<2x8xf32>
    %415 = math.exp %414 : vector<2x8xf32>
    %cst_135 = arith.constant dense<0.000000e+00> : vector<2xf32>
    %416 = vector.multi_reduction <add>, %415, %cst_135 [1] : vector<2x8xf32> to vector<2xf32>
    %417 = vector.shape_cast %416 : vector<2xf32> to vector<2x1xf32>
    %418 = tpu.reciprocal %417 {approx = true} : vector<2x1xf32> -> vector<2x1xf32>
    %419 = vector.broadcast %418 : vector<2x1xf32> to vector<2x8xf32>
    %420 = arith.mulf %415, %419 : vector<2x8xf32>
    %421 = vector.shape_cast %420 : vector<2x8xf32> to vector<2x8x1xf32>
    %422 = vector.broadcast %421 : vector<2x8x1xf32> to vector<2x8x32xf32>
    %423 = arith.mulf %422, %282 : vector<2x8x32xf32>
    %cst_136 = arith.constant dense<0.000000e+00> : vector<2x32xf32>
    %424 = vector.multi_reduction <add>, %423, %cst_136 [1] : vector<2x8x32xf32> to vector<2x32xf32>
    %425 = tpu.concatenate %405, %424 in 1 : vector<2x32xf32>, vector<2x32xf32> -> vector<2x64xf32>
    %cst_137 = arith.constant dense<0.000000e+00> : vector<2x128xf32>
    %426 = tpu.matmul %425, %6, %cst_137 {dimension_numbers = #tpu.dot_dimension_numbers<[1], [0], [0], [1], [0, 0, 1, 1], [], []>} : vector<2x64xf32>, vector<64x128xf32>, vector<2x128xf32> -> vector<2x128xf32>
    %427 = vector.broadcast %7 : vector<1x128xf32> to vector<2x128xf32>
    %428 = arith.addf %426, %427 : vector<2x128xf32>
    %cst_138 = arith.constant dense<0xFF800000> : vector<2xf32>
    %429 = vector.multi_reduction <maximumf>, %428, %cst_138 [1] : vector<2x128xf32> to vector<2xf32>
    %430 = vector.shape_cast %429 : vector<2xf32> to vector<2x1xf32>
    %431 = vector.broadcast %430 : vector<2x1xf32> to vector<2x128xf32>
    %432 = arith.subf %428, %431 : vector<2x128xf32>
    %433 = math.exp %432 : vector<2x128xf32>
    %cst_139 = arith.constant dense<0.000000e+00> : vector<2xf32>
    %434 = vector.multi_reduction <add>, %433, %cst_139 [1] : vector<2x128xf32> to vector<2xf32>
    %435 = vector.shape_cast %434 : vector<2xf32> to vector<2x1xf32>
    %436 = math.log %435 : vector<2x1xf32>
    %437 = vector.broadcast %436 : vector<2x1xf32> to vector<2x128xf32>
    %438 = arith.subf %432, %437 : vector<2x128xf32>
    %439 = vector.extract_strided_slice %291 {offsets = [0, 1], sizes = [2, 1], strides = [1, 1]} : vector<2x4xi32> to vector<2x1xi32>
    %440 = vector.broadcast %439 : vector<2x1xi32> to vector<2x128xi32>
    %441 = arith.cmpi eq, %290, %440 : vector<2x128xi32>
    %442 = arith.extui %441 : vector<2x128xi1> to vector<2x128xi32>
    %443 = arith.sitofp %442 : vector<2x128xi32> to vector<2x128xf32>
    %444 = arith.mulf %443, %438 : vector<2x128xf32>
    %cst_140 = arith.constant dense<0.000000e+00> : vector<2xf32>
    %445 = vector.multi_reduction <add>, %444, %cst_140 [1] : vector<2x128xf32> to vector<2xf32>
    %446 = vector.shape_cast %445 : vector<2xf32> to vector<2x1xf32>
    %cst_141 = arith.constant 0.000000e+00 : f32
    %447 = vector.broadcast %cst_141 : f32 to vector<2x1xf32>
    %448 = arith.subf %447, %446 : vector<2x1xf32>
    %c0_i32_142 = arith.constant 0 : i32
    %449 = vector.broadcast %c0_i32_142 : i32 to vector<2x1xi32>
    %450 = arith.cmpi ne, %439, %449 : vector<2x1xi32>
    %451 = arith.extui %450 : vector<2x1xi1> to vector<2x1xi32>
    %452 = arith.sitofp %451 : vector<2x1xi32> to vector<2x1xf32>
    %453 = arith.mulf %448, %452 : vector<2x1xf32>
    %454 = arith.addf %373, %453 : vector<2x1xf32>
    %c2_143 = arith.constant 2 : index
    %c0_144 = arith.constant 0 : index
    %c0_145 = arith.constant 0 : index
    %455 = vector.load %arg2[%c2_143, %c0_144, %c0_145] : memref<4x2x16xf32, #tpu.memory_space<vmem>>, vector<1x2x16xf32>
    %456 = vector.shape_cast %455 : vector<1x2x16xf32> to vector<2x16xf32>
    %cst_146 = arith.constant dense<0.000000e+00> : vector<2x128xf32>
    %457 = tpu.matmul %456, %3, %cst_146 {dimension_numbers = #tpu.dot_dimension_numbers<[1], [0], [0], [1], [0, 0, 1, 1], [], []>} : vector<2x16xf32>, vector<16x128xf32>, vector<2x128xf32> -> vector<2x128xf32>
    %cst_147 = arith.constant dense<0.000000e+00> : vector<2x128xf32>
    %458 = tpu.matmul %405, %4, %cst_147 {dimension_numbers = #tpu.dot_dimension_numbers<[1], [0], [0], [1], [0, 0, 1, 1], [], []>} : vector<2x32xf32>, vector<32x128xf32>, vector<2x128xf32> -> vector<2x128xf32>
    %459 = arith.addf %457, %458 : vector<2x128xf32>
    %460 = vector.broadcast %5 : vector<1x128xf32> to vector<2x128xf32>
    %461 = arith.addf %459, %460 : vector<2x128xf32>
    %462 = vector.extract_strided_slice %461 {offsets = [0, 0], sizes = [2, 32], strides = [1, 1]} : vector<2x128xf32> to vector<2x32xf32>
    %463 = arith.negf %462 : vector<2x32xf32>
    %464 = math.exp %463 : vector<2x32xf32>
    %cst_148 = arith.constant 1.000000e+00 : f32
    %465 = vector.broadcast %cst_148 : f32 to vector<2x32xf32>
    %466 = arith.addf %465, %464 : vector<2x32xf32>
    %467 = arith.divf %465, %466 : vector<2x32xf32>
    %468 = vector.extract_strided_slice %461 {offsets = [0, 32], sizes = [2, 32], strides = [1, 1]} : vector<2x128xf32> to vector<2x32xf32>
    %469 = arith.negf %468 : vector<2x32xf32>
    %470 = math.exp %469 : vector<2x32xf32>
    %cst_149 = arith.constant 1.000000e+00 : f32
    %471 = vector.broadcast %cst_149 : f32 to vector<2x32xf32>
    %472 = arith.addf %471, %470 : vector<2x32xf32>
    %473 = arith.divf %471, %472 : vector<2x32xf32>
    %474 = vector.extract_strided_slice %461 {offsets = [0, 64], sizes = [2, 32], strides = [1, 1]} : vector<2x128xf32> to vector<2x32xf32>
    %475 = math.tanh %474 : vector<2x32xf32>
    %476 = vector.extract_strided_slice %461 {offsets = [0, 96], sizes = [2, 32], strides = [1, 1]} : vector<2x128xf32> to vector<2x32xf32>
    %477 = arith.negf %476 : vector<2x32xf32>
    %478 = math.exp %477 : vector<2x32xf32>
    %cst_150 = arith.constant 1.000000e+00 : f32
    %479 = vector.broadcast %cst_150 : f32 to vector<2x32xf32>
    %480 = arith.addf %479, %478 : vector<2x32xf32>
    %481 = arith.divf %479, %480 : vector<2x32xf32>
    %482 = arith.mulf %473, %403 : vector<2x32xf32>
    %483 = arith.mulf %467, %475 : vector<2x32xf32>
    %484 = arith.addf %482, %483 : vector<2x32xf32>
    %485 = math.tanh %484 : vector<2x32xf32>
    %486 = arith.mulf %481, %485 : vector<2x32xf32>
    %487 = vector.shape_cast %486 : vector<2x32xf32> to vector<2x1x32xf32>
    %488 = vector.broadcast %487 : vector<2x1x32xf32> to vector<2x8x32xf32>
    %489 = arith.mulf %488, %282 : vector<2x8x32xf32>
    %cst_151 = arith.constant dense<0.000000e+00> : vector<2x8xf32>
    %490 = vector.multi_reduction <add>, %489, %cst_151 [2] : vector<2x8x32xf32> to vector<2x8xf32>
    %491 = arith.addf %490, %289 : vector<2x8xf32>
    %cst_152 = arith.constant dense<0xFF800000> : vector<2xf32>
    %492 = vector.multi_reduction <maximumf>, %491, %cst_152 [1] : vector<2x8xf32> to vector<2xf32>
    %493 = vector.shape_cast %492 : vector<2xf32> to vector<2x1xf32>
    %494 = vector.broadcast %493 : vector<2x1xf32> to vector<2x8xf32>
    %495 = arith.subf %491, %494 : vector<2x8xf32>
    %496 = math.exp %495 : vector<2x8xf32>
    %cst_153 = arith.constant dense<0.000000e+00> : vector<2xf32>
    %497 = vector.multi_reduction <add>, %496, %cst_153 [1] : vector<2x8xf32> to vector<2xf32>
    %498 = vector.shape_cast %497 : vector<2xf32> to vector<2x1xf32>
    %499 = tpu.reciprocal %498 {approx = true} : vector<2x1xf32> -> vector<2x1xf32>
    %500 = vector.broadcast %499 : vector<2x1xf32> to vector<2x8xf32>
    %501 = arith.mulf %496, %500 : vector<2x8xf32>
    %502 = vector.shape_cast %501 : vector<2x8xf32> to vector<2x8x1xf32>
    %503 = vector.broadcast %502 : vector<2x8x1xf32> to vector<2x8x32xf32>
    %504 = arith.mulf %503, %282 : vector<2x8x32xf32>
    %cst_154 = arith.constant dense<0.000000e+00> : vector<2x32xf32>
    %505 = vector.multi_reduction <add>, %504, %cst_154 [1] : vector<2x8x32xf32> to vector<2x32xf32>
    %506 = tpu.concatenate %486, %505 in 1 : vector<2x32xf32>, vector<2x32xf32> -> vector<2x64xf32>
    %cst_155 = arith.constant dense<0.000000e+00> : vector<2x128xf32>
    %507 = tpu.matmul %506, %6, %cst_155 {dimension_numbers = #tpu.dot_dimension_numbers<[1], [0], [0], [1], [0, 0, 1, 1], [], []>} : vector<2x64xf32>, vector<64x128xf32>, vector<2x128xf32> -> vector<2x128xf32>
    %508 = vector.broadcast %7 : vector<1x128xf32> to vector<2x128xf32>
    %509 = arith.addf %507, %508 : vector<2x128xf32>
    %cst_156 = arith.constant dense<0xFF800000> : vector<2xf32>
    %510 = vector.multi_reduction <maximumf>, %509, %cst_156 [1] : vector<2x128xf32> to vector<2xf32>
    %511 = vector.shape_cast %510 : vector<2xf32> to vector<2x1xf32>
    %512 = vector.broadcast %511 : vector<2x1xf32> to vector<2x128xf32>
    %513 = arith.subf %509, %512 : vector<2x128xf32>
    %514 = math.exp %513 : vector<2x128xf32>
    %cst_157 = arith.constant dense<0.000000e+00> : vector<2xf32>
    %515 = vector.multi_reduction <add>, %514, %cst_157 [1] : vector<2x128xf32> to vector<2xf32>
    %516 = vector.shape_cast %515 : vector<2xf32> to vector<2x1xf32>
    %517 = math.log %516 : vector<2x1xf32>
    %518 = vector.broadcast %517 : vector<2x1xf32> to vector<2x128xf32>
    %519 = arith.subf %513, %518 : vector<2x128xf32>
    %520 = vector.extract_strided_slice %291 {offsets = [0, 2], sizes = [2, 1], strides = [1, 1]} : vector<2x4xi32> to vector<2x1xi32>
    %521 = vector.broadcast %520 : vector<2x1xi32> to vector<2x128xi32>
    %522 = arith.cmpi eq, %290, %521 : vector<2x128xi32>
    %523 = arith.extui %522 : vector<2x128xi1> to vector<2x128xi32>
    %524 = arith.sitofp %523 : vector<2x128xi32> to vector<2x128xf32>
    %525 = arith.mulf %524, %519 : vector<2x128xf32>
    %cst_158 = arith.constant dense<0.000000e+00> : vector<2xf32>
    %526 = vector.multi_reduction <add>, %525, %cst_158 [1] : vector<2x128xf32> to vector<2xf32>
    %527 = vector.shape_cast %526 : vector<2xf32> to vector<2x1xf32>
    %cst_159 = arith.constant 0.000000e+00 : f32
    %528 = vector.broadcast %cst_159 : f32 to vector<2x1xf32>
    %529 = arith.subf %528, %527 : vector<2x1xf32>
    %c0_i32_160 = arith.constant 0 : i32
    %530 = vector.broadcast %c0_i32_160 : i32 to vector<2x1xi32>
    %531 = arith.cmpi ne, %520, %530 : vector<2x1xi32>
    %532 = arith.extui %531 : vector<2x1xi1> to vector<2x1xi32>
    %533 = arith.sitofp %532 : vector<2x1xi32> to vector<2x1xf32>
    %534 = arith.mulf %529, %533 : vector<2x1xf32>
    %535 = arith.addf %454, %534 : vector<2x1xf32>
    %c3_161 = arith.constant 3 : index
    %c0_162 = arith.constant 0 : index
    %c0_163 = arith.constant 0 : index
    %536 = vector.load %arg2[%c3_161, %c0_162, %c0_163] : memref<4x2x16xf32, #tpu.memory_space<vmem>>, vector<1x2x16xf32>
    %537 = vector.shape_cast %536 : vector<1x2x16xf32> to vector<2x16xf32>
    %cst_164 = arith.constant dense<0.000000e+00> : vector<2x128xf32>
    %538 = tpu.matmul %537, %3, %cst_164 {dimension_numbers = #tpu.dot_dimension_numbers<[1], [0], [0], [1], [0, 0, 1, 1], [], []>} : vector<2x16xf32>, vector<16x128xf32>, vector<2x128xf32> -> vector<2x128xf32>
    %cst_165 = arith.constant dense<0.000000e+00> : vector<2x128xf32>
    %539 = tpu.matmul %486, %4, %cst_165 {dimension_numbers = #tpu.dot_dimension_numbers<[1], [0], [0], [1], [0, 0, 1, 1], [], []>} : vector<2x32xf32>, vector<32x128xf32>, vector<2x128xf32> -> vector<2x128xf32>
    %540 = arith.addf %538, %539 : vector<2x128xf32>
    %541 = vector.broadcast %5 : vector<1x128xf32> to vector<2x128xf32>
    %542 = arith.addf %540, %541 : vector<2x128xf32>
    %543 = vector.extract_strided_slice %542 {offsets = [0, 0], sizes = [2, 32], strides = [1, 1]} : vector<2x128xf32> to vector<2x32xf32>
    %544 = arith.negf %543 : vector<2x32xf32>
    %545 = math.exp %544 : vector<2x32xf32>
    %cst_166 = arith.constant 1.000000e+00 : f32
    %546 = vector.broadcast %cst_166 : f32 to vector<2x32xf32>
    %547 = arith.addf %546, %545 : vector<2x32xf32>
    %548 = arith.divf %546, %547 : vector<2x32xf32>
    %549 = vector.extract_strided_slice %542 {offsets = [0, 32], sizes = [2, 32], strides = [1, 1]} : vector<2x128xf32> to vector<2x32xf32>
    %550 = arith.negf %549 : vector<2x32xf32>
    %551 = math.exp %550 : vector<2x32xf32>
    %cst_167 = arith.constant 1.000000e+00 : f32
    %552 = vector.broadcast %cst_167 : f32 to vector<2x32xf32>
    %553 = arith.addf %552, %551 : vector<2x32xf32>
    %554 = arith.divf %552, %553 : vector<2x32xf32>
    %555 = vector.extract_strided_slice %542 {offsets = [0, 64], sizes = [2, 32], strides = [1, 1]} : vector<2x128xf32> to vector<2x32xf32>
    %556 = math.tanh %555 : vector<2x32xf32>
    %557 = vector.extract_strided_slice %542 {offsets = [0, 96], sizes = [2, 32], strides = [1, 1]} : vector<2x128xf32> to vector<2x32xf32>
    %558 = arith.negf %557 : vector<2x32xf32>
    %559 = math.exp %558 : vector<2x32xf32>
    %cst_168 = arith.constant 1.000000e+00 : f32
    %560 = vector.broadcast %cst_168 : f32 to vector<2x32xf32>
    %561 = arith.addf %560, %559 : vector<2x32xf32>
    %562 = arith.divf %560, %561 : vector<2x32xf32>
    %563 = arith.mulf %554, %484 : vector<2x32xf32>
    %564 = arith.mulf %548, %556 : vector<2x32xf32>
    %565 = arith.addf %563, %564 : vector<2x32xf32>
    %566 = math.tanh %565 : vector<2x32xf32>
    %567 = arith.mulf %562, %566 : vector<2x32xf32>
    %568 = vector.shape_cast %567 : vector<2x32xf32> to vector<2x1x32xf32>
    %569 = vector.broadcast %568 : vector<2x1x32xf32> to vector<2x8x32xf32>
    %570 = arith.mulf %569, %282 : vector<2x8x32xf32>
    %cst_169 = arith.constant dense<0.000000e+00> : vector<2x8xf32>
    %571 = vector.multi_reduction <add>, %570, %cst_169 [2] : vector<2x8x32xf32> to vector<2x8xf32>
    %572 = arith.addf %571, %289 : vector<2x8xf32>
    %cst_170 = arith.constant dense<0xFF800000> : vector<2xf32>
    %573 = vector.multi_reduction <maximumf>, %572, %cst_170 [1] : vector<2x8xf32> to vector<2xf32>
    %574 = vector.shape_cast %573 : vector<2xf32> to vector<2x1xf32>
    %575 = vector.broadcast %574 : vector<2x1xf32> to vector<2x8xf32>
    %576 = arith.subf %572, %575 : vector<2x8xf32>
    %577 = math.exp %576 : vector<2x8xf32>
    %cst_171 = arith.constant dense<0.000000e+00> : vector<2xf32>
    %578 = vector.multi_reduction <add>, %577, %cst_171 [1] : vector<2x8xf32> to vector<2xf32>
    %579 = vector.shape_cast %578 : vector<2xf32> to vector<2x1xf32>
    %580 = tpu.reciprocal %579 {approx = true} : vector<2x1xf32> -> vector<2x1xf32>
    %581 = vector.broadcast %580 : vector<2x1xf32> to vector<2x8xf32>
    %582 = arith.mulf %577, %581 : vector<2x8xf32>
    %583 = vector.shape_cast %582 : vector<2x8xf32> to vector<2x8x1xf32>
    %584 = vector.broadcast %583 : vector<2x8x1xf32> to vector<2x8x32xf32>
    %585 = arith.mulf %584, %282 : vector<2x8x32xf32>
    %cst_172 = arith.constant dense<0.000000e+00> : vector<2x32xf32>
    %586 = vector.multi_reduction <add>, %585, %cst_172 [1] : vector<2x8x32xf32> to vector<2x32xf32>
    %587 = tpu.concatenate %567, %586 in 1 : vector<2x32xf32>, vector<2x32xf32> -> vector<2x64xf32>
    %cst_173 = arith.constant dense<0.000000e+00> : vector<2x128xf32>
    %588 = tpu.matmul %587, %6, %cst_173 {dimension_numbers = #tpu.dot_dimension_numbers<[1], [0], [0], [1], [0, 0, 1, 1], [], []>} : vector<2x64xf32>, vector<64x128xf32>, vector<2x128xf32> -> vector<2x128xf32>
    %589 = vector.broadcast %7 : vector<1x128xf32> to vector<2x128xf32>
    %590 = arith.addf %588, %589 : vector<2x128xf32>
    %cst_174 = arith.constant dense<0xFF800000> : vector<2xf32>
    %591 = vector.multi_reduction <maximumf>, %590, %cst_174 [1] : vector<2x128xf32> to vector<2xf32>
    %592 = vector.shape_cast %591 : vector<2xf32> to vector<2x1xf32>
    %593 = vector.broadcast %592 : vector<2x1xf32> to vector<2x128xf32>
    %594 = arith.subf %590, %593 : vector<2x128xf32>
    %595 = math.exp %594 : vector<2x128xf32>
    %cst_175 = arith.constant dense<0.000000e+00> : vector<2xf32>
    %596 = vector.multi_reduction <add>, %595, %cst_175 [1] : vector<2x128xf32> to vector<2xf32>
    %597 = vector.shape_cast %596 : vector<2xf32> to vector<2x1xf32>
    %598 = math.log %597 : vector<2x1xf32>
    %599 = vector.broadcast %598 : vector<2x1xf32> to vector<2x128xf32>
    %600 = arith.subf %594, %599 : vector<2x128xf32>
    %601 = vector.extract_strided_slice %291 {offsets = [0, 3], sizes = [2, 1], strides = [1, 1]} : vector<2x4xi32> to vector<2x1xi32>
    %602 = vector.broadcast %601 : vector<2x1xi32> to vector<2x128xi32>
    %603 = arith.cmpi eq, %290, %602 : vector<2x128xi32>
    %604 = arith.extui %603 : vector<2x128xi1> to vector<2x128xi32>
    %605 = arith.sitofp %604 : vector<2x128xi32> to vector<2x128xf32>
    %606 = arith.mulf %605, %600 : vector<2x128xf32>
    %cst_176 = arith.constant dense<0.000000e+00> : vector<2xf32>
    %607 = vector.multi_reduction <add>, %606, %cst_176 [1] : vector<2x128xf32> to vector<2xf32>
    %608 = vector.shape_cast %607 : vector<2xf32> to vector<2x1xf32>
    %cst_177 = arith.constant 0.000000e+00 : f32
    %609 = vector.broadcast %cst_177 : f32 to vector<2x1xf32>
    %610 = arith.subf %609, %608 : vector<2x1xf32>
    %c0_i32_178 = arith.constant 0 : i32
    %611 = vector.broadcast %c0_i32_178 : i32 to vector<2x1xi32>
    %612 = arith.cmpi ne, %601, %611 : vector<2x1xi32>
    %613 = arith.extui %612 : vector<2x1xi1> to vector<2x1xi32>
    %614 = arith.sitofp %613 : vector<2x1xi32> to vector<2x1xf32>
    %615 = arith.mulf %610, %614 : vector<2x1xf32>
    %616 = arith.addf %535, %615 : vector<2x1xf32>
    %c0_179 = arith.constant 0 : index
    %c0_180 = arith.constant 0 : index
    %617 = vector.load %arg12[%c0_179, %c0_180] : memref<2x1xf32, #tpu.memory_space<vmem>>, vector<2x1xf32>
    tpu.vector_store %arg12[%c0_179, %c0_180], %616 {strides = array<i32>} : memref<2x1xf32, #tpu.memory_space<vmem>>, vector<2x1xf32>,
    %618 = math.exp %600 : vector<2x128xf32>
    %c0_181 = arith.constant 0 : index
    %c0_182 = arith.constant 0 : index
    %619 = vector.load %arg13[%c0_181, %c0_182] : memref<2x128xf32, #tpu.memory_space<vmem>>, vector<2x128xf32>
    tpu.vector_store %arg13[%c0_181, %c0_182], %618 {strides = array<i32>} : memref<2x128xf32, #tpu.memory_space<vmem>>, vector<2x128xf32>,
    return
  }
}

</mosaic_0001>

<llo_original>
// kernel: model_forward.1
$region0: #{model_forward.1}
  #allocation0 [shape = 'u32[]', space=smem, size = 0x4, offset = 0x4, fixed_abs, tag = 'smem constant byte address 0x4 - core index']
  #allocation1 [shape = 'u32[144,128]{1,0:T(1,128)}', space=vmem, size = 0x12000, scoped, tag = 'internal scratch']
  #allocation2 [shape = 'f32[2,8,32]{2,1,0:T(8,128)}', space=vmem, size = 0x2000, scoped, tag = 'scratch operand']
  %s0 = inlined_call_operand.vmem [shape: f32[8,2,16], index: 0, kind: input, shape index: {}]
  %s1 = inlined_call_operand.vmem [shape: f32[2,8], index: 1, kind: input, shape index: {}]
  %s2 = inlined_call_operand.vmem [shape: f32[4,2,16], index: 2, kind: input, shape index: {}]
  %s3 = inlined_call_operand.vmem [shape: s32[2,4], index: 3, kind: input, shape index: {}]
  %s4 = inlined_call_operand.vmem [shape: f32[16,128], index: 4, kind: input, shape index: {}]
  %s5 = inlined_call_operand.vmem [shape: f32[32,128], index: 5, kind: input, shape index: {}]
  %s6 = inlined_call_operand.vmem [shape: f32[1,128], index: 6, kind: input, shape index: {}]
  %s7 = inlined_call_operand.vmem [shape: f32[16,128], index: 7, kind: input, shape index: {}]
  %s8 = inlined_call_operand.vmem [shape: f32[32,128], index: 8, kind: input, shape index: {}]
  %s9 = inlined_call_operand.vmem [shape: f32[1,128], index: 9, kind: input, shape index: {}]
  %s10 = inlined_call_operand.vmem [shape: f32[64,128], index: 10, kind: input, shape index: {}]
  %s11 = inlined_call_operand.vmem [shape: f32[1,128], index: 11, kind: input, shape index: {}]
  %s12 = inlined_call_operand.vmem [shape: f32[2,1], index: 12, kind: output, shape index: {0}]
  %s13 = inlined_call_operand.hbm [shape: f32[2,128], index: 13, kind: output, shape index: {1}]
  %14 = xla_tuple %s12, %s13
  %s15 = sld [smem:[#allocation0]]
  $region66: #{model_forward.1} parent=0
    _
  %s17 = ssub.s32 1, %s15
  %s18 = scalar_select 0, %s17, %s15
  $region1: #{model_forward.1} parent=0
    #allocation3 [shape = 'u8[1024]{0}', space=vmem, size = 0x400, scoped, tag = 'output window, operand 1, single buffered']
    #allocation4 [shape = 's32[1]{0}', space=sflag, size = 0x4, scoped, tag = 'scoped memory for model_forward.1']
    %19 = vsyncpa [#allocation4], 0
    // Predicated region
    $region2: #{model_forward.1} parent=1 // pred_check
      _
    $region3: #{model_forward.1} parent=1 // pred_check_branch
      %21 = sbr.rel (0) target = $region5
    $region4: #{model_forward.1} parent=1 // pred_region
      _
    $region5: #{model_forward.1} parent=1 // pred_fallthru
      _
    // Predicated region
    $region6: #{model_forward.1} parent=1 // pred_check
      _
    $region7: #{model_forward.1} parent=1 // pred_check_branch
      %23 = sbr.rel (0) target = $region9
    $region8: #{model_forward.1} parent=1 // pred_region
      _
    $region9: #{model_forward.1} parent=1 // pred_fallthru
      _
    // Predicated region
    $region10: #{model_forward.1} parent=1 // pred_check
      _
    $region11: #{model_forward.1} parent=1 // pred_check_branch
      %25 = sbr.rel (0) target = $region13
    $region12: #{model_forward.1} parent=1 // pred_region
      _
    $region13: #{model_forward.1} parent=1 // pred_fallthru
      _
    // Predicated region
    $region14: #{model_forward.1} parent=1 // pred_check
      _
    $region15: #{model_forward.1} parent=1 // pred_check_branch
      %27 = sbr.rel (0) target = $region17
    $region16: #{model_forward.1} parent=1 // pred_region
      _
    $region17: #{model_forward.1} parent=1 // pred_fallthru
      _
    // Predicated region
    $region18: #{model_forward.1} parent=1 // pred_check
      _
    $region19: #{model_forward.1} parent=1 // pred_check_branch
      %29 = sbr.rel (0) target = $region21
    $region20: #{model_forward.1} parent=1 // pred_region
      _
    $region21: #{model_forward.1} parent=1 // pred_fallthru
      _
    // Predicated region
    $region22: #{model_forward.1} parent=1 // pred_check
      _
    $region23: #{model_forward.1} parent=1 // pred_check_branch
      %31 = sbr.rel (0) target = $region25
    $region24: #{model_forward.1} parent=1 // pred_region
      _
    $region25: #{model_forward.1} parent=1 // pred_fallthru
      _
    // Predicated region
    $region26: #{model_forward.1} parent=1 // pred_check
      _
    $region27: #{model_forward.1} parent=1 // pred_check_branch
      %33 = sbr.rel (0) target = $region29
    $region28: #{model_forward.1} parent=1 // pred_region
      _
    $region29: #{model_forward.1} parent=1 // pred_fallthru
      _
    // Predicated region
    $region30: #{model_forward.1} parent=1 // pred_check
      _
    $region31: #{model_forward.1} parent=1 // pred_check_branch
      %35 = sbr.rel (0) target = $region33
    $region32: #{model_forward.1} parent=1 // pred_region
      _
    $region33: #{model_forward.1} parent=1 // pred_fallthru
      _
    // Predicated region
    $region34: #{model_forward.1} parent=1 // pred_check
      _
    $region35: #{model_forward.1} parent=1 // pred_check_branch
      %37 = sbr.rel (0) target = $region37
    $region36: #{model_forward.1} parent=1 // pred_region
      _
    $region37: #{model_forward.1} parent=1 // pred_fallthru
      _
    // Predicated region
    $region38: #{model_forward.1} parent=1 // pred_check
      _
    $region39: #{model_forward.1} parent=1 // pred_check_branch
      %39 = sbr.rel (0) target = $region41
    $region40: #{model_forward.1} parent=1 // pred_region
      _
    $region41: #{model_forward.1} parent=1 // pred_fallthru
      _
    // Predicated region
    $region42: #{model_forward.1} parent=1 // pred_check
      _
    $region43: #{model_forward.1} parent=1 // pred_check_branch
      %41 = sbr.rel (0) target = $region45
    $region44: #{model_forward.1} parent=1 // pred_region
      _
    $region45: #{model_forward.1} parent=1 // pred_fallthru
      _
    // Predicated region
    $region46: #{model_forward.1} parent=1 // pred_check
      _
    $region47: #{model_forward.1} parent=1 // pred_check_branch
      %43 = sbr.rel (0) target = $region49
    $region48: #{model_forward.1} parent=1 // pred_region
      _
    $region49: #{model_forward.1} parent=1 // pred_fallthru
      _
    %v44 = vld [vmem:[%s4] sm:$0xff]
    %v45 = vld [vmem:[%s4 + $0x8] sm:$0xff]
    %v46 = vld [vmem:[%s5] sm:$0xff]
    %v47 = vld [vmem:[%s5 + $0x8] sm:$0xff]
    %v48 = vld [vmem:[%s5 + $0x10] sm:$0xff]
    %v49 = vld [vmem:[%s5 + $0x18] sm:$0xff]
    %v50 = vld [vmem:[%s6] sm:$0x1]
    %v51 = vld [vmem:[%s7] sm:$0xff]
    %v52 = vld [vmem:[%s7 + $0x8] sm:$0xff]
    %v53 = vld [vmem:[%s8] sm:$0xff]
    %v54 = vld [vmem:[%s8 + $0x8] sm:$0xff]
    %v55 = vld [vmem:[%s8 + $0x10] sm:$0xff]
    %v56 = vld [vmem:[%s8 + $0x18] sm:$0xff]
    %v57 = vld [vmem:[%s9] sm:$0x1]
    %v58 = vld [vmem:[%s10] sm:$0xff]
    %v59 = vld [vmem:[%s10 + $0x8] sm:$0xff]
    %v60 = vld [vmem:[%s10 + $0x10] sm:$0xff]
    %v61 = vld [vmem:[%s10 + $0x18] sm:$0xff]
    %v62 = vld [vmem:[%s10 + $0x20] sm:$0xff]
    %v63 = vld [vmem:[%s10 + $0x28] sm:$0xff]
    %v64 = vld [vmem:[%s10 + $0x30] sm:$0xff]
    %v65 = vld [vmem:[%s10 + $0x38] sm:$0xff]
    %v66 = vld [vmem:[%s11] sm:$0x1]
    %v67 = vld [vmem:[%s0] sm:$0x3]
    %vm68 = vcmask 261120
    %v70 = vsel %vm68, 0.0, 0
    %72 = vmatprep.subr.mxu0 0.0
    %73 = vmatpush1.msra.mxu0 0.0
    %74 = vmatprep.subr.mxu0 0.0
    %75 = vmatpush1.msra.mxu0 0.0
    %76 = vmatprep.subr.mxu0 0.0
    %77 = vmatpush1.msra.mxu0 0.0
    %78 = vmatprep.subr.mxu0 0.0
    %79 = vmatpush1.msra.mxu0 0.0
    %80 = vmatprep.subr.mxu0 0.0
    %81 = vmatpush1.msra.mxu0 0.0
    %82 = vmatprep.subr.mxu0 0.0
    %83 = vmatpush1.msra.mxu0 0.0
    %84 = vmatprep.subr.mxu0 0.0
    %85 = vmatpush1.msra.mxu0 0.0
    %86 = vmatprep.subr.mxu0 0.0
    %87 = vmatpush1.msra.mxu0 0.0
    %88 = vmatprep.subr.mxu0 0.0
    %89 = vmatpush1.msra.mxu0 0.0
    %90 = vmatprep.subr.mxu0 0.0
    %91 = vmatpush1.msra.mxu0 0.0
    %92 = vmatprep.subr.mxu0 0.0
    %93 = vmatpush1.msra.mxu0 0.0
    %94 = vmatprep.subr.mxu0 0.0
    %95 = vmatpush1.msra.mxu0 0.0
    %96 = vmatprep.subr.mxu0 0.0
    %97 = vmatpush1.msra.mxu0 %v49
    %98 = vmatprep.subr.mxu0 0.0
    %99 = vmatpush1.msra.mxu0 %v48
    %100 = vmatprep.subr.mxu0 0.0
    %101 = vmatpush1.msra.mxu0 %v47
    %102 = vmatprep.subr.mxu0 0.0
    %103 = vmatpush1.msra.mxu0 %v46
    %104 = vmatprep.subr.mxu0 0.0
    %105 = vmatpush2.msra.mxu0 0.0
    %106 = vmatprep.subr.mxu0 0.0
    %107 = vmatpush2.msra.mxu0 0.0
    %108 = vmatprep.subr.mxu0 0.0
    %109 = vmatpush2.msra.mxu0 0.0
    %110 = vmatprep.subr.mxu0 0.0
    %111 = vmatpush2.msra.mxu0 0.0
    %112 = vmatprep.subr.mxu0 0.0
    %113 = vmatpush2.msra.mxu0 0.0
    %114 = vmatprep.subr.mxu0 0.0
    %115 = vmatpush2.msra.mxu0 0.0
    %116 = vmatprep.subr.mxu0 0.0
    %117 = vmatpush2.msra.mxu0 0.0
    %118 = vmatprep.subr.mxu0 0.0
    %119 = vmatpush2.msra.mxu0 0.0
    %120 = vmatprep.subr.mxu0 0.0
    %121 = vmatpush2.msra.mxu0 0.0
    %122 = vmatprep.subr.mxu0 0.0
    %123 = vmatpush2.msra.mxu0 0.0
    %124 = vmatprep.subr.mxu0 0.0
    %125 = vmatpush2.msra.mxu0 0.0
    %126 = vmatprep.subr.mxu0 0.0
    %127 = vmatpush2.msra.mxu0 0.0
    %128 = vmatprep.subr.mxu0 0.0
    %129 = vmatpush2.msra.mxu0 0.0
    %130 = vmatprep.subr.mxu0 0.0
    %131 = vmatpush2.msra.mxu0 0.0
    %132 = vmatprep.subr.mxu0 0.0
    %133 = vmatpush2.msra.mxu0 0.0
    %134 = vmatprep.subr.mxu0 0.0
    %135 = vmatpush2.msra.mxu0 0.0
    %136 = vmatprep.mubr.f32.mxu0 0.0
    %137 = vmatmul.mubr.f32.gmra.mxu0 %v70
    %v138 = vpop.f32.mrf.mxu0
    %v139 = vadd.f32 0.0, %v138
    %v140 = vpop.f32.mrf.mxu0
    %141 = vdwg.mxu0
    %vm142 = vcmask 130048
    %v144 = vsel %vm142, %v67, 0
    %146 = vmatprep.subr.mxu0 0.0
    %147 = vmatpush1.msra.mxu0 0.0
    %148 = vmatprep.subr.mxu0 0.0
    %149 = vmatpush1.msra.mxu0 0.0
    %150 = vmatprep.subr.mxu0 0.0
    %151 = vmatpush1.msra.mxu0 0.0
    %152 = vmatprep.subr.mxu0 0.0
    %153 = vmatpush1.msra.mxu0 0.0
    %154 = vmatprep.subr.mxu0 0.0
    %155 = vmatpush1.msra.mxu0 0.0
    %156 = vmatprep.subr.mxu0 0.0
    %157 = vmatpush1.msra.mxu0 0.0
    %158 = vmatprep.subr.mxu0 0.0
    %159 = vmatpush1.msra.mxu0 0.0
    %160 = vmatprep.subr.mxu0 0.0
    %161 = vmatpush1.msra.mxu0 0.0
    %162 = vmatprep.subr.mxu0 0.0
    %163 = vmatpush1.msra.mxu0 0.0
    %164 = vmatprep.subr.mxu0 0.0
    %165 = vmatpush1.msra.mxu0 0.0
    %166 = vmatprep.subr.mxu0 0.0
    %167 = vmatpush1.msra.mxu0 0.0
    %168 = vmatprep.subr.mxu0 0.0
    %169 = vmatpush1.msra.mxu0 0.0
    %170 = vmatprep.subr.mxu0 0.0
    %171 = vmatpush1.msra.mxu0 0.0
    %172 = vmatprep.subr.mxu0 0.0
    %173 = vmatpush1.msra.mxu0 0.0
    %174 = vmatprep.subr.mxu0 0.0
    %175 = vmatpush1.msra.mxu0 %v45
    %176 = vmatprep.subr.mxu0 0.0
    %177 = vmatpush1.msra.mxu0 %v44
    %178 = vmatprep.subr.mxu0 0.0
    %179 = vmatpush2.msra.mxu0 0.0
    %180 = vmatprep.subr.mxu0 0.0
    %181 = vmatpush2.msra.mxu0 0.0
    %182 = vmatprep.subr.mxu0 0.0
    %183 = vmatpush2.msra.mxu0 0.0
    %184 = vmatprep.subr.mxu0 0.0
    %185 = vmatpush2.msra.mxu0 0.0
    %186 = vmatprep.subr.mxu0 0.0
    %187 = vmatpush2.msra.mxu0 0.0
    %188 = vmatprep.subr.mxu0 0.0
    %189 = vmatpush2.msra.mxu0 0.0
    %190 = vmatprep.subr.mxu0 0.0
    %191 = vmatpush2.msra.mxu0 0.0
    %192 = vmatprep.subr.mxu0 0.0
    %193 = vmatpush2.msra.mxu0 0.0
    %194 = vmatprep.subr.mxu0 0.0
    %195 = vmatpush2.msra.mxu0 0.0
    %196 = vmatprep.subr.mxu0 0.0
    %197 = vmatpush2.msra.mxu0 0.0
    %198 = vmatprep.subr.mxu0 0.0
    %199 = vmatpush2.msra.mxu0 0.0
    %200 = vmatprep.subr.mxu0 0.0
    %201 = vmatpush2.msra.mxu0 0.0
    %202 = vmatprep.subr.mxu0 0.0
    %203 = vmatpush2.msra.mxu0 0.0
    %204 = vmatprep.subr.mxu0 0.0
    %205 = vmatpush2.msra.mxu0 0.0
    %206 = vmatprep.subr.mxu0 0.0
    %207 = vmatpush2.msra.mxu0 0.0
    %208 = vmatprep.subr.mxu0 0.0
    %209 = vmatpush2.msra.mxu0 0.0
    %210 = vmatprep.mubr.f32.mxu0 0.0
    %211 = vmatmul.mubr.f32.gmra.mxu0 %v144
    %v212 = vpop.f32.mrf.mxu0
    %v213 = vadd.f32 %v139, %v212
    %v214 = vpop.f32.mrf.mxu0
    %215 = vdwg.mxu0
    %v217 = vlaneseq
    %v218 = vshrl.u32 %v217, 7
    %v219 = vsub.s32 0, %v218
    %v220 = vrot.slane %v50, %v219
    %v222 = vadd.f32 %v213, %v220
    %v223 = vxor.u32 %v222, 2147483648
    %v224 = vmul.f32 %v223, 1.442695
    %v225 = vpow.pop %v224
    %v226 = vadd.f32 %v225, 1.0
    %v227 = vrcp.pop %v226
    %v228 = vmul.f32 1.0, %v227
    %v229 = vtanh.pop %v222
    %v230 = vmul.f32 %v228, 0.0
    %232 = vrot.lane.b32.xlu0 %v229, 64
    %v233 = vpop.permute.xlu0 %232
    %v235 = vmul.f32 %v228, %v233
    %237 = vrot.lane.b32.xlu0 %v235, 32
    %v238 = vpop.permute.xlu0 %237
    %v240 = vadd.f32 %v230, %v238
    %v241 = vtanh.pop %v240
    %243 = vrot.lane.b32.xlu0 %v241, 64
    %v244 = vpop.permute.xlu0 %243
    %v246 = vmul.f32 %v228, %v244
    %v249 = vunpack.c.l.s4 1966171168
    %v250 = vunpack.c.0.s8 %v249
    %v251 = vlaneseq
    %v252 = vshrl.u32 %v251, 7
    %v253 = vsub.s32 %v250, %v252
    %v254 = vrot.slane %v246, %v253
    %v255 = vcombine.high %v254, %v254
    %v257 = vunpack.c.l.s4 1966171168
    %v258 = vunpack.c.0.s8 %v257
    %v259 = vlaneseq
    %v260 = vshrl.u32 %v259, 7
    %v261 = vsub.s32 %v258, %v260
    %v262 = vrot.slane %v254, %v261
    %v264 = vunpack.c.l.s4 1966171168
    %v265 = vunpack.c.0.s8 %v264
    %v266 = vlaneseq
    %v267 = vshrl.u32 %v266, 7
    %v268 = vsub.s32 %v265, %v267
    %v269 = vrot.slane %v255, %v268
    %v270 = vlaneseq
    %v271 = vshrl.u32 %v270, 7
    %v272 = vsub.s32 0, %v271
    %v273 = vrot.slane %v262, %v272
    %v274 = vlaneseq
    %v275 = vshrl.u32 %v274, 7
    %v276 = vsub.s32 0, %v275
    %v277 = vrot.slane %v269, %v276
    %278 = vrot.lane.b32.xlu0 %v273, 32
    %v279 = vpop.permute.xlu0 %278
    %280 = vrot.lane.b32.xlu0 %v277, 32
    %v281 = vpop.permute.xlu0 %280
    %vm284 = vcmask 253952
    %285 = vst.msk [vmem:[#allocation2] sm:$0x1] %vm284, %v279
    %286 = vst.msk [vmem:[#allocation2 + $0x8] sm:$0x1] %vm284, %v281
    %s287 = scalar_lea.vmem %s0, 2
    %v288 = vld [vmem:[%s287] sm:$0x3]
    %289 = vrot.lane.b32.xlu0 %v246, 32
    %v290 = vpop.permute.xlu0 %289
    %v291 = vsel %vm68, %v290, 0
    %293 = vmatprep.subr.mxu0 0.0
    %294 = vmatpush1.msra.mxu0 0.0
    %295 = vmatprep.subr.mxu0 0.0
    %296 = vmatpush1.msra.mxu0 0.0
    %297 = vmatprep.subr.mxu0 0.0
    %298 = vmatpush1.msra.mxu0 0.0
    %299 = vmatprep.subr.mxu0 0.0
    %300 = vmatpush1.msra.mxu0 0.0
    %301 = vmatprep.subr.mxu0 0.0
    %302 = vmatpush1.msra.mxu0 0.0
    %303 = vmatprep.subr.mxu0 0.0
    %304 = vmatpush1.msra.mxu0 0.0
    %305 = vmatprep.subr.mxu0 0.0
    %306 = vmatpush1.msra.mxu0 0.0
    %307 = vmatprep.subr.mxu0 0.0
    %308 = vmatpush1.msra.mxu0 0.0
    %309 = vmatprep.subr.mxu0 0.0
    %310 = vmatpush1.msra.mxu0 0.0
    %311 = vmatprep.subr.mxu0 0.0
    %312 = vmatpush1.msra.mxu0 0.0
    %313 = vmatprep.subr.mxu0 0.0
    %314 = vmatpush1.msra.mxu0 0.0
    %315 = vmatprep.subr.mxu0 0.0
    %316 = vmatpush1.msra.mxu0 0.0
    %317 = vmatprep.subr.mxu0 0.0
    %318 = vmatpush1.msra.mxu0 %v49
    %319 = vmatprep.subr.mxu0 0.0
    %320 = vmatpush1.msra.mxu0 %v48
    %321 = vmatprep.subr.mxu0 0.0
    %322 = vmatpush1.msra.mxu0 %v47
    %323 = vmatprep.subr.mxu0 0.0
    %324 = vmatpush1.msra.mxu0 %v46
    %325 = vmatprep.subr.mxu0 0.0
    %326 = vmatpush2.msra.mxu0 0.0
    %327 = vmatprep.subr.mxu0 0.0
    %328 = vmatpush2.msra.mxu0 0.0
    %329 = vmatprep.subr.mxu0 0.0
    %330 = vmatpush2.msra.mxu0 0.0
    %331 = vmatprep.subr.mxu0 0.0
    %332 = vmatpush2.msra.mxu0 0.0
    %333 = vmatprep.subr.mxu0 0.0
    %334 = vmatpush2.msra.mxu0 0.0
    %335 = vmatprep.subr.mxu0 0.0
    %336 = vmatpush2.msra.mxu0 0.0
    %337 = vmatprep.subr.mxu0 0.0
    %338 = vmatpush2.msra.mxu0 0.0
    %339 = vmatprep.subr.mxu0 0.0
    %340 = vmatpush2.msra.mxu0 0.0
    %341 = vmatprep.subr.mxu0 0.0
    %342 = vmatpush2.msra.mxu0 0.0
    %343 = vmatprep.subr.mxu0 0.0
    %344 = vmatpush2.msra.mxu0 0.0
    %345 = vmatprep.subr.mxu0 0.0
    %346 = vmatpush2.msra.mxu0 0.0
    %347 = vmatprep.subr.mxu0 0.0
    %348 = vmatpush2.msra.mxu0 0.0
    %349 = vmatprep.subr.mxu0 0.0
    %350 = vmatpush2.msra.mxu0 0.0
    %351 = vmatprep.subr.mxu0 0.0
    %352 = vmatpush2.msra.mxu0 0.0
    %353 = vmatprep.subr.mxu0 0.0
    %354 = vmatpush2.msra.mxu0 0.0
    %355 = vmatprep.subr.mxu0 0.0
    %356 = vmatpush2.msra.mxu0 0.0
    %357 = vmatprep.mubr.f32.mxu0 0.0
    %358 = vmatmul.mubr.f32.gmra.mxu0 %v291
    %v359 = vpop.f32.mrf.mxu0
    %v360 = vadd.f32 0.0, %v359
    %v361 = vpop.f32.mrf.mxu0
    %362 = vdwg.mxu0
    %v364 = vsel %vm142, %v288, 0
    %366 = vmatprep.subr.mxu0 0.0
    %367 = vmatpush1.msra.mxu0 0.0
    %368 = vmatprep.subr.mxu0 0.0
    %369 = vmatpush1.msra.mxu0 0.0
    %370 = vmatprep.subr.mxu0 0.0
    %371 = vmatpush1.msra.mxu0 0.0
    %372 = vmatprep.subr.mxu0 0.0
    %373 = vmatpush1.msra.mxu0 0.0
    %374 = vmatprep.subr.mxu0 0.0
    %375 = vmatpush1.msra.mxu0 0.0
    %376 = vmatprep.subr.mxu0 0.0
    %377 = vmatpush1.msra.mxu0 0.0
    %378 = vmatprep.subr.mxu0 0.0
    %379 = vmatpush1.msra.mxu0 0.0
    %380 = vmatprep.subr.mxu0 0.0
    %381 = vmatpush1.msra.mxu0 0.0
    %382 = vmatprep.subr.mxu0 0.0
    %383 = vmatpush1.msra.mxu0 0.0
    %384 = vmatprep.subr.mxu0 0.0
    %385 = vmatpush1.msra.mxu0 0.0
    %386 = vmatprep.subr.mxu0 0.0
    %387 = vmatpush1.msra.mxu0 0.0
    %388 = vmatprep.subr.mxu0 0.0
    %389 = vmatpush1.msra.mxu0 0.0
    %390 = vmatprep.subr.mxu0 0.0
    %391 = vmatpush1.msra.mxu0 0.0
    %392 = vmatprep.subr.mxu0 0.0
    %393 = vmatpush1.msra.mxu0 0.0
    %394 = vmatprep.subr.mxu0 0.0
    %395 = vmatpush1.msra.mxu0 %v45
    %396 = vmatprep.subr.mxu0 0.0
    %397 = vmatpush1.msra.mxu0 %v44
    %398 = vmatprep.subr.mxu0 0.0
    %399 = vmatpush2.msra.mxu0 0.0
    %400 = vmatprep.subr.mxu0 0.0
    %401 = vmatpush2.msra.mxu0 0.0
    %402 = vmatprep.subr.mxu0 0.0
    %403 = vmatpush2.msra.mxu0 0.0
    %404 = vmatprep.subr.mxu0 0.0
    %405 = vmatpush2.msra.mxu0 0.0
    %406 = vmatprep.subr.mxu0 0.0
    %407 = vmatpush2.msra.mxu0 0.0
    %408 = vmatprep.subr.mxu0 0.0
    %409 = vmatpush2.msra.mxu0 0.0
    %410 = vmatprep.subr.mxu0 0.0
    %411 = vmatpush2.msra.mxu0 0.0
    %412 = vmatprep.subr.mxu0 0.0
    %413 = vmatpush2.msra.mxu0 0.0
    %414 = vmatprep.subr.mxu0 0.0
    %415 = vmatpush2.msra.mxu0 0.0
    %416 = vmatprep.subr.mxu0 0.0
    %417 = vmatpush2.msra.mxu0 0.0
    %418 = vmatprep.subr.mxu0 0.0
    %419 = vmatpush2.msra.mxu0 0.0
    %420 = vmatprep.subr.mxu0 0.0
    %421 = vmatpush2.msra.mxu0 0.0
    %422 = vmatprep.subr.mxu0 0.0
    %423 = vmatpush2.msra.mxu0 0.0
    %424 = vmatprep.subr.mxu0 0.0
    %425 = vmatpush2.msra.mxu0 0.0
    %426 = vmatprep.subr.mxu0 0.0
    %427 = vmatpush2.msra.mxu0 0.0
    %428 = vmatprep.subr.mxu0 0.0
    %429 = vmatpush2.msra.mxu0 0.0
    %430 = vmatprep.mubr.f32.mxu0 0.0
    %431 = vmatmul.mubr.f32.gmra.mxu0 %v364
    %v432 = vpop.f32.mrf.mxu0
    %v433 = vadd.f32 %v360, %v432
    %v434 = vpop.f32.mrf.mxu0
    %435 = vdwg.mxu0
    %v436 = vadd.f32 %v433, %v220
    %v437 = vxor.u32 %v436, 2147483648
    %v438 = vmul.f32 %v437, 1.442695
    %v439 = vpow.pop %v438
    %v440 = vadd.f32 %v439, 1.0
    %v441 = vrcp.pop %v440
    %v442 = vmul.f32 1.0, %v441
    %v443 = vtanh.pop %v436
    %v444 = vmul.f32 %v442, %v240
    %446 = vrot.lane.b32.xlu0 %v443, 64
    %v447 = vpop.permute.xlu0 %446
    %v449 = vmul.f32 %v442, %v447
    %451 = vrot.lane.b32.xlu0 %v449, 32
    %v452 = vpop.permute.xlu0 %451
    %v454 = vadd.f32 %v444, %v452
    %v455 = vtanh.pop %v454
    %457 = vrot.lane.b32.xlu0 %v455, 64
    %v458 = vpop.permute.xlu0 %457
    %v460 = vmul.f32 %v442, %v458
    %v463 = vunpack.c.l.s4 1966171168
    %v464 = vunpack.c.0.s8 %v463
    %v465 = vlaneseq
    %v466 = vshrl.u32 %v465, 7
    %v467 = vsub.s32 %v464, %v466
    %v468 = vrot.slane %v460, %v467
    %v469 = vcombine.high %v468, %v468
    %v471 = vunpack.c.l.s4 1966171168
    %v472 = vunpack.c.0.s8 %v471
    %v473 = vlaneseq
    %v474 = vshrl.u32 %v473, 7
    %v475 = vsub.s32 %v472, %v474
    %v476 = vrot.slane %v468, %v475
    %v478 = vunpack.c.l.s4 1966171168
    %v479 = vunpack.c.0.s8 %v478
    %v480 = vlaneseq
    %v481 = vshrl.u32 %v480, 7
    %v482 = vsub.s32 %v479, %v481
    %v483 = vrot.slane %v469, %v482
    %v484 = vlaneseq
    %v485 = vshrl.u32 %v484, 7
    %v486 = vsub.s32 0, %v485
    %v487 = vrot.slane %v476, %v486
    %v488 = vlaneseq
    %v489 = vshrl.u32 %v488, 7
    %v490 = vsub.s32 0, %v489
    %v491 = vrot.slane %v483, %v490
    %492 = vrot.lane.b32.xlu0 %v487, 32
    %v493 = vpop.permute.xlu0 %492
    %494 = vrot.lane.b32.xlu0 %v491, 32
    %v495 = vpop.permute.xlu0 %494
    %498 = vst.msk [vmem:[#allocation2 + $0x1] sm:$0x1] %vm284, %v493
    %499 = vst.msk [vmem:[#allocation2 + $0x9] sm:$0x1] %vm284, %v495
    %s500 = scalar_lea.vmem %s0, 4
    %v501 = vld [vmem:[%s500] sm:$0x3]
    %502 = vrot.lane.b32.xlu0 %v460, 32
    %v503 = vpop.permute.xlu0 %502
    %v504 = vsel %vm68, %v503, 0
    %506 = vmatprep.subr.mxu0 0.0
    %507 = vmatpush1.msra.mxu0 0.0
    %508 = vmatprep.subr.mxu0 0.0
    %509 = vmatpush1.msra.mxu0 0.0
    %510 = vmatprep.subr.mxu0 0.0
    %511 = vmatpush1.msra.mxu0 0.0
    %512 = vmatprep.subr.mxu0 0.0
    %513 = vmatpush1.msra.mxu0 0.0
    %514 = vmatprep.subr.mxu0 0.0
    %515 = vmatpush1.msra.mxu0 0.0
    %516 = vmatprep.subr.mxu0 0.0
    %517 = vmatpush1.msra.mxu0 0.0
    %518 = vmatprep.subr.mxu0 0.0
    %519 = vmatpush1.msra.mxu0 0.0
    %520 = vmatprep.subr.mxu0 0.0
    %521 = vmatpush1.msra.mxu0 0.0
    %522 = vmatprep.subr.mxu0 0.0
    %523 = vmatpush1.msra.mxu0 0.0
    %524 = vmatprep.subr.mxu0 0.0
    %525 = vmatpush1.msra.mxu0 0.0
    %526 = vmatprep.subr.mxu0 0.0
    %527 = vmatpush1.msra.mxu0 0.0
    %528 = vmatprep.subr.mxu0 0.0
    %529 = vmatpush1.msra.mxu0 0.0
    %530 = vmatprep.subr.mxu0 0.0
    %531 = vmatpush1.msra.mxu0 %v49
    %532 = vmatprep.subr.mxu0 0.0
    %533 = vmatpush1.msra.mxu0 %v48
    %534 = vmatprep.subr.mxu0 0.0
    %535 = vmatpush1.msra.mxu0 %v47
    %536 = vmatprep.subr.mxu0 0.0
    %537 = vmatpush1.msra.mxu0 %v46
    %538 = vmatprep.subr.mxu0 0.0
    %539 = vmatpush2.msra.mxu0 0.0
    %540 = vmatprep.subr.mxu0 0.0
    %541 = vmatpush2.msra.mxu0 0.0
    %542 = vmatprep.subr.mxu0 0.0
    %543 = vmatpush2.msra.mxu0 0.0
    %544 = vmatprep.subr.mxu0 0.0
    %545 = vmatpush2.msra.mxu0 0.0
    %546 = vmatprep.subr.mxu0 0.0
    %547 = vmatpush2.msra.mxu0 0.0
    %548 = vmatprep.subr.mxu0 0.0
    %549 = vmatpush2.msra.mxu0 0.0
    %550 = vmatprep.subr.mxu0 0.0
    %551 = vmatpush2.msra.mxu0 0.0
    %552 = vmatprep.subr.mxu0 0.0
    %553 = vmatpush2.msra.mxu0 0.0
    %554 = vmatprep.subr.mxu0 0.0
    %555 = vmatpush2.msra.mxu0 0.0
    %556 = vmatprep.subr.mxu0 0.0
    %557 = vmatpush2.msra.mxu0 0.0
    %558 = vmatprep.subr.mxu0 0.0
    %559 = vmatpush2.msra.mxu0 0.0
    %560 = vmatprep.subr.mxu0 0.0
    %561 = vmatpush2.msra.mxu0 0.0
    %562 = vmatprep.subr.mxu0 0.0
    %563 = vmatpush2.msra.mxu0 0.0
    %564 = vmatprep.subr.mxu0 0.0
    %565 = vmatpush2.msra.mxu0 0.0
    %566 = vmatprep.subr.mxu0 0.0
    %567 = vmatpush2.msra.mxu0 0.0
    %568 = vmatprep.subr.mxu0 0.0
    %569 = vmatpush2.msra.mxu0 0.0
    %570 = vmatprep.mubr.f32.mxu0 0.0
    %571 = vmatmul.mubr.f32.gmra.mxu0 %v504
    %v572 = vpop.f32.mrf.mxu0
    %v573 = vadd.f32 0.0, %v572
    %v574 = vpop.f32.mrf.mxu0
    %575 = vdwg.mxu0
    %v577 = vsel %vm142, %v501, 0
    %579 = vmatprep.subr.mxu0 0.0
    %580 = vmatpush1.msra.mxu0 0.0
    %581 = vmatprep.subr.mxu0 0.0
    %582 = vmatpush1.msra.mxu0 0.0
    %583 = vmatprep.subr.mxu0 0.0
    %584 = vmatpush1.msra.mxu0 0.0
    %585 = vmatprep.subr.mxu0 0.0
    %586 = vmatpush1.msra.mxu0 0.0
    %587 = vmatprep.subr.mxu0 0.0
    %588 = vmatpush1.msra.mxu0 0.0
    %589 = vmatprep.subr.mxu0 0.0
    %590 = vmatpush1.msra.mxu0 0.0
    %591 = vmatprep.subr.mxu0 0.0
    %592 = vmatpush1.msra.mxu0 0.0
    %593 = vmatprep.subr.mxu0 0.0
    %594 = vmatpush1.msra.mxu0 0.0
    %595 = vmatprep.subr.mxu0 0.0
    %596 = vmatpush1.msra.mxu0 0.0
    %597 = vmatprep.subr.mxu0 0.0
    %598 = vmatpush1.msra.mxu0 0.0
    %599 = vmatprep.subr.mxu0 0.0
    %600 = vmatpush1.msra.mxu0 0.0
    %601 = vmatprep.subr.mxu0 0.0
    %602 = vmatpush1.msra.mxu0 0.0
    %603 = vmatprep.subr.mxu0 0.0
    %604 = vmatpush1.msra.mxu0 0.0
    %605 = vmatprep.subr.mxu0 0.0
    %606 = vmatpush1.msra.mxu0 0.0
    %607 = vmatprep.subr.mxu0 0.0
    %608 = vmatpush1.msra.mxu0 %v45
    %609 = vmatprep.subr.mxu0 0.0
    %610 = vmatpush1.msra.mxu0 %v44
    %611 = vmatprep.subr.mxu0 0.0
    %612 = vmatpush2.msra.mxu0 0.0
    %613 = vmatprep.subr.mxu0 0.0
    %614 = vmatpush2.msra.mxu0 0.0
    %615 = vmatprep.subr.mxu0 0.0
    %616 = vmatpush2.msra.mxu0 0.0
    %617 = vmatprep.subr.mxu0 0.0
    %618 = vmatpush2.msra.mxu0 0.0
    %619 = vmatprep.subr.mxu0 0.0
    %620 = vmatpush2.msra.mxu0 0.0
    %621 = vmatprep.subr.mxu0 0.0
    %622 = vmatpush2.msra.mxu0 0.0
    %623 = vmatprep.subr.mxu0 0.0
    %624 = vmatpush2.msra.mxu0 0.0
    %625 = vmatprep.subr.mxu0 0.0
    %626 = vmatpush2.msra.mxu0 0.0
    %627 = vmatprep.subr.mxu0 0.0
    %628 = vmatpush2.msra.mxu0 0.0
    %629 = vmatprep.subr.mxu0 0.0
    %630 = vmatpush2.msra.mxu0 0.0
    %631 = vmatprep.subr.mxu0 0.0
    %632 = vmatpush2.msra.mxu0 0.0
    %633 = vmatprep.subr.mxu0 0.0
    %634 = vmatpush2.msra.mxu0 0.0
    %635 = vmatprep.subr.mxu0 0.0
    %636 = vmatpush2.msra.mxu0 0.0
    %637 = vmatprep.subr.mxu0 0.0
    %638 = vmatpush2.msra.mxu0 0.0
    %639 = vmatprep.subr.mxu0 0.0
    %640 = vmatpush2.msra.mxu0 0.0
    %641 = vmatprep.subr.mxu0 0.0
    %642 = vmatpush2.msra.mxu0 0.0
    %643 = vmatprep.mubr.f32.mxu0 0.0
    %644 = vmatmul.mubr.f32.gmra.mxu0 %v577
    %v645 = vpop.f32.mrf.mxu0
    %v646 = vadd.f32 %v573, %v645
    %v647 = vpop.f32.mrf.mxu0
    %648 = vdwg.mxu0
    %v649 = vadd.f32 %v646, %v220
    %v650 = vxor.u32 %v649, 2147483648
    %v651 = vmul.f32 %v650, 1.442695
    %v652 = vpow.pop %v651
    %v653 = vadd.f32 %v652, 1.0
    %v654 = vrcp.pop %v653
    %v655 = vmul.f32 1.0, %v654
    %v656 = vtanh.pop %v649
    %v657 = vmul.f32 %v655, %v454
    %659 = vrot.lane.b32.xlu0 %v656, 64
    %v660 = vpop.permute.xlu0 %659
    %v662 = vmul.f32 %v655, %v660
    %664 = vrot.lane.b32.xlu0 %v662, 32
    %v665 = vpop.permute.xlu0 %664
    %v667 = vadd.f32 %v657, %v665
    %v668 = vtanh.pop %v667
    %670 = vrot.lane.b32.xlu0 %v668, 64
    %v671 = vpop.permute.xlu0 %670
    %v673 = vmul.f32 %v655, %v671
    %v676 = vunpack.c.l.s4 1966171168
    %v677 = vunpack.c.0.s8 %v676
    %v678 = vlaneseq
    %v679 = vshrl.u32 %v678, 7
    %v680 = vsub.s32 %v677, %v679
    %v681 = vrot.slane %v673, %v680
    %v682 = vcombine.high %v681, %v681
    %v684 = vunpack.c.l.s4 1966171168
    %v685 = vunpack.c.0.s8 %v684
    %v686 = vlaneseq
    %v687 = vshrl.u32 %v686, 7
    %v688 = vsub.s32 %v685, %v687
    %v689 = vrot.slane %v681, %v688
    %v691 = vunpack.c.l.s4 1966171168
    %v692 = vunpack.c.0.s8 %v691
    %v693 = vlaneseq
    %v694 = vshrl.u32 %v693, 7
    %v695 = vsub.s32 %v692, %v694
    %v696 = vrot.slane %v682, %v695
    %v697 = vlaneseq
    %v698 = vshrl.u32 %v697, 7
    %v699 = vsub.s32 0, %v698
    %v700 = vrot.slane %v689, %v699
    %v701 = vlaneseq
    %v702 = vshrl.u32 %v701, 7
    %v703 = vsub.s32 0, %v702
    %v704 = vrot.slane %v696, %v703
    %705 = vrot.lane.b32.xlu0 %v700, 32
    %v706 = vpop.permute.xlu0 %705
    %707 = vrot.lane.b32.xlu0 %v704, 32
    %v708 = vpop.permute.xlu0 %707
    %711 = vst.msk [vmem:[#allocation2 + $0x2] sm:$0x1] %vm284, %v706
    %712 = vst.msk [vmem:[#allocation2 + $0xa] sm:$0x1] %vm284, %v708
    %s713 = scalar_lea.vmem %s0, 6
    %v714 = vld [vmem:[%s713] sm:$0x3]
    %715 = vrot.lane.b32.xlu0 %v673, 32
    %v716 = vpop.permute.xlu0 %715
    %v717 = vsel %vm68, %v716, 0
    %719 = vmatprep.subr.mxu0 0.0
    %720 = vmatpush1.msra.mxu0 0.0
    %721 = vmatprep.subr.mxu0 0.0
    %722 = vmatpush1.msra.mxu0 0.0
    %723 = vmatprep.subr.mxu0 0.0
    %724 = vmatpush1.msra.mxu0 0.0
    %725 = vmatprep.subr.mxu0 0.0
    %726 = vmatpush1.msra.mxu0 0.0
    %727 = vmatprep.subr.mxu0 0.0
    %728 = vmatpush1.msra.mxu0 0.0
    %729 = vmatprep.subr.mxu0 0.0
    %730 = vmatpush1.msra.mxu0 0.0
    %731 = vmatprep.subr.mxu0 0.0
    %732 = vmatpush1.msra.mxu0 0.0
    %733 = vmatprep.subr.mxu0 0.0
    %734 = vmatpush1.msra.mxu0 0.0
    %735 = vmatprep.subr.mxu0 0.0
    %736 = vmatpush1.msra.mxu0 0.0
    %737 = vmatprep.subr.mxu0 0.0
    %738 = vmatpush1.msra.mxu0 0.0
    %739 = vmatprep.subr.mxu0 0.0
    %740 = vmatpush1.msra.mxu0 0.0
    %741 = vmatprep.subr.mxu0 0.0
    %742 = vmatpush1.msra.mxu0 0.0
    %743 = vmatprep.subr.mxu0 0.0
    %744 = vmatpush1.msra.mxu0 %v49
    %745 = vmatprep.subr.mxu0 0.0
    %746 = vmatpush1.msra.mxu0 %v48
    %747 = vmatprep.subr.mxu0 0.0
    %748 = vmatpush1.msra.mxu0 %v47
    %749 = vmatprep.subr.mxu0 0.0
    %750 = vmatpush1.msra.mxu0 %v46
    %751 = vmatprep.subr.mxu0 0.0
    %752 = vmatpush2.msra.mxu0 0.0
    %753 = vmatprep.subr.mxu0 0.0
    %754 = vmatpush2.msra.mxu0 0.0
    %755 = vmatprep.subr.mxu0 0.0
    %756 = vmatpush2.msra.mxu0 0.0
    %757 = vmatprep.subr.mxu0 0.0
    %758 = vmatpush2.msra.mxu0 0.0
    %759 = vmatprep.subr.mxu0 0.0
    %760 = vmatpush2.msra.mxu0 0.0
    %761 = vmatprep.subr.mxu0 0.0
    %762 = vmatpush2.msra.mxu0 0.0
    %763 = vmatprep.subr.mxu0 0.0
    %764 = vmatpush2.msra.mxu0 0.0
    %765 = vmatprep.subr.mxu0 0.0
    %766 = vmatpush2.msra.mxu0 0.0
    %767 = vmatprep.subr.mxu0 0.0
    %768 = vmatpush2.msra.mxu0 0.0
    %769 = vmatprep.subr.mxu0 0.0
    %770 = vmatpush2.msra.mxu0 0.0
    %771 = vmatprep.subr.mxu0 0.0
    %772 = vmatpush2.msra.mxu0 0.0
    %773 = vmatprep.subr.mxu0 0.0
    %774 = vmatpush2.msra.mxu0 0.0
    %775 = vmatprep.subr.mxu0 0.0
    %776 = vmatpush2.msra.mxu0 0.0
    %777 = vmatprep.subr.mxu0 0.0
    %778 = vmatpush2.msra.mxu0 0.0
    %779 = vmatprep.subr.mxu0 0.0
    %780 = vmatpush2.msra.mxu0 0.0
    %781 = vmatprep.subr.mxu0 0.0
    %782 = vmatpush2.msra.mxu0 0.0
    %783 = vmatprep.mubr.f32.mxu0 0.0
    %784 = vmatmul.mubr.f32.gmra.mxu0 %v717
    %v785 = vpop.f32.mrf.mxu0
    %v786 = vadd.f32 0.0, %v785
    %v787 = vpop.f32.mrf.mxu0
    %788 = vdwg.mxu0
    %v790 = vsel %vm142, %v714, 0
    %792 = vmatprep.subr.mxu0 0.0
    %793 = vmatpush1.msra.mxu0 0.0
    %794 = vmatprep.subr.mxu0 0.0
    %795 = vmatpush1.msra.mxu0 0.0
    %796 = vmatprep.subr.mxu0 0.0
    %797 = vmatpush1.msra.mxu0 0.0
    %798 = vmatprep.subr.mxu0 0.0
    %799 = vmatpush1.msra.mxu0 0.0
    %800 = vmatprep.subr.mxu0 0.0
    %801 = vmatpush1.msra.mxu0 0.0
    %802 = vmatprep.subr.mxu0 0.0
    %803 = vmatpush1.msra.mxu0 0.0
    %804 = vmatprep.subr.mxu0 0.0
    %805 = vmatpush1.msra.mxu0 0.0
    %806 = vmatprep.subr.mxu0 0.0
    %807 = vmatpush1.msra.mxu0 0.0
    %808 = vmatprep.subr.mxu0 0.0
    %809 = vmatpush1.msra.mxu0 0.0
    %810 = vmatprep.subr.mxu0 0.0
    %811 = vmatpush1.msra.mxu0 0.0
    %812 = vmatprep.subr.mxu0 0.0
    %813 = vmatpush1.msra.mxu0 0.0
    %814 = vmatprep.subr.mxu0 0.0
    %815 = vmatpush1.msra.mxu0 0.0
    %816 = vmatprep.subr.mxu0 0.0
    %817 = vmatpush1.msra.mxu0 0.0
    %818 = vmatprep.subr.mxu0 0.0
    %819 = vmatpush1.msra.mxu0 0.0
    %820 = vmatprep.subr.mxu0 0.0
    %821 = vmatpush1.msra.mxu0 %v45
    %822 = vmatprep.subr.mxu0 0.0
    %823 = vmatpush1.msra.mxu0 %v44
    %824 = vmatprep.subr.mxu0 0.0
    %825 = vmatpush2.msra.mxu0 0.0
    %826 = vmatprep.subr.mxu0 0.0
    %827 = vmatpush2.msra.mxu0 0.0
    %828 = vmatprep.subr.mxu0 0.0
    %829 = vmatpush2.msra.mxu0 0.0
    %830 = vmatprep.subr.mxu0 0.0
    %831 = vmatpush2.msra.mxu0 0.0
    %832 = vmatprep.subr.mxu0 0.0
    %833 = vmatpush2.msra.mxu0 0.0
    %834 = vmatprep.subr.mxu0 0.0
    %835 = vmatpush2.msra.mxu0 0.0
    %836 = vmatprep.subr.mxu0 0.0
    %837 = vmatpush2.msra.mxu0 0.0
    %838 = vmatprep.subr.mxu0 0.0
    %839 = vmatpush2.msra.mxu0 0.0
    %840 = vmatprep.subr.mxu0 0.0
    %841 = vmatpush2.msra.mxu0 0.0
    %842 = vmatprep.subr.mxu0 0.0
    %843 = vmatpush2.msra.mxu0 0.0
    %844 = vmatprep.subr.mxu0 0.0
    %845 = vmatpush2.msra.mxu0 0.0
    %846 = vmatprep.subr.mxu0 0.0
    %847 = vmatpush2.msra.mxu0 0.0
    %848 = vmatprep.subr.mxu0 0.0
    %849 = vmatpush2.msra.mxu0 0.0
    %850 = vmatprep.subr.mxu0 0.0
    %851 = vmatpush2.msra.mxu0 0.0
    %852 = vmatprep.subr.mxu0 0.0
    %853 = vmatpush2.msra.mxu0 0.0
    %854 = vmatprep.subr.mxu0 0.0
    %855 = vmatpush2.msra.mxu0 0.0
    %856 = vmatprep.mubr.f32.mxu0 0.0
    %857 = vmatmul.mubr.f32.gmra.mxu0 %v790
    %v858 = vpop.f32.mrf.mxu0
    %v859 = vadd.f32 %v786, %v858
    %v860 = vpop.f32.mrf.mxu0
    %861 = vdwg.mxu0
    %v862 = vadd.f32 %v859, %v220
    %v863 = vxor.u32 %v862, 2147483648
    %v864 = vmul.f32 %v863, 1.442695
    %v865 = vpow.pop %v864
    %v866 = vadd.f32 %v865, 1.0
    %v867 = vrcp.pop %v866
    %v868 = vmul.f32 1.0, %v867
    %v869 = vtanh.pop %v862
    %v870 = vmul.f32 %v868, %v667
    %872 = vrot.lane.b32.xlu0 %v869, 64
    %v873 = vpop.permute.xlu0 %872
    %v875 = vmul.f32 %v868, %v873
    %877 = vrot.lane.b32.xlu0 %v875, 32
    %v878 = vpop.permute.xlu0 %877
    %v880 = vadd.f32 %v870, %v878
    %v881 = vtanh.pop %v880
    %883 = vrot.lane.b32.xlu0 %v881, 64
    %v884 = vpop.permute.xlu0 %883
    %v886 = vmul.f32 %v868, %v884
    %v889 = vunpack.c.l.s4 1966171168
    %v890 = vunpack.c.0.s8 %v889
    %v891 = vlaneseq
    %v892 = vshrl.u32 %v891, 7
    %v893 = vsub.s32 %v890, %v892
    %v894 = vrot.slane %v886, %v893
    %v895 = vcombine.high %v894, %v894
    %v897 = vunpack.c.l.s4 1966171168
    %v898 = vunpack.c.0.s8 %v897
    %v899 = vlaneseq
    %v900 = vshrl.u32 %v899, 7
    %v901 = vsub.s32 %v898, %v900
    %v902 = vrot.slane %v894, %v901
    %v904 = vunpack.c.l.s4 1966171168
    %v905 = vunpack.c.0.s8 %v904
    %v906 = vlaneseq
    %v907 = vshrl.u32 %v906, 7
    %v908 = vsub.s32 %v905, %v907
    %v909 = vrot.slane %v895, %v908
    %v910 = vlaneseq
    %v911 = vshrl.u32 %v910, 7
    %v912 = vsub.s32 0, %v911
    %v913 = vrot.slane %v902, %v912
    %v914 = vlaneseq
    %v915 = vshrl.u32 %v914, 7
    %v916 = vsub.s32 0, %v915
    %v917 = vrot.slane %v909, %v916
    %918 = vrot.lane.b32.xlu0 %v913, 32
    %v919 = vpop.permute.xlu0 %918
    %920 = vrot.lane.b32.xlu0 %v917, 32
    %v921 = vpop.permute.xlu0 %920
    %924 = vst.msk [vmem:[#allocation2 + $0x3] sm:$0x1] %vm284, %v919
    %925 = vst.msk [vmem:[#allocation2 + $0xb] sm:$0x1] %vm284, %v921
    %s926 = scalar_lea.vmem %s0, 8
    %v927 = vld [vmem:[%s926] sm:$0x3]
    %928 = vrot.lane.b32.xlu0 %v886, 32
    %v929 = vpop.permute.xlu0 %928
    %v930 = vsel %vm68, %v929, 0
    %932 = vmatprep.subr.mxu0 0.0
    %933 = vmatpush1.msra.mxu0 0.0
    %934 = vmatprep.subr.mxu0 0.0
    %935 = vmatpush1.msra.mxu0 0.0
    %936 = vmatprep.subr.mxu0 0.0
    %937 = vmatpush1.msra.mxu0 0.0
    %938 = vmatprep.subr.mxu0 0.0
    %939 = vmatpush1.msra.mxu0 0.0
    %940 = vmatprep.subr.mxu0 0.0
    %941 = vmatpush1.msra.mxu0 0.0
    %942 = vmatprep.subr.mxu0 0.0
    %943 = vmatpush1.msra.mxu0 0.0
    %944 = vmatprep.subr.mxu0 0.0
    %945 = vmatpush1.msra.mxu0 0.0
    %946 = vmatprep.subr.mxu0 0.0
    %947 = vmatpush1.msra.mxu0 0.0
    %948 = vmatprep.subr.mxu0 0.0
    %949 = vmatpush1.msra.mxu0 0.0
    %950 = vmatprep.subr.mxu0 0.0
    %951 = vmatpush1.msra.mxu0 0.0
    %952 = vmatprep.subr.mxu0 0.0
    %953 = vmatpush1.msra.mxu0 0.0
    %954 = vmatprep.subr.mxu0 0.0
    %955 = vmatpush1.msra.mxu0 0.0
    %956 = vmatprep.subr.mxu0 0.0
    %957 = vmatpush1.msra.mxu0 %v49
    %958 = vmatprep.subr.mxu0 0.0
    %959 = vmatpush1.msra.mxu0 %v48
    %960 = vmatprep.subr.mxu0 0.0
    %961 = vmatpush1.msra.mxu0 %v47
    %962 = vmatprep.subr.mxu0 0.0
    %963 = vmatpush1.msra.mxu0 %v46
    %964 = vmatprep.subr.mxu0 0.0
    %965 = vmatpush2.msra.mxu0 0.0
    %966 = vmatprep.subr.mxu0 0.0
    %967 = vmatpush2.msra.mxu0 0.0
    %968 = vmatprep.subr.mxu0 0.0
    %969 = vmatpush2.msra.mxu0 0.0
    %970 = vmatprep.subr.mxu0 0.0
    %971 = vmatpush2.msra.mxu0 0.0
    %972 = vmatprep.subr.mxu0 0.0
    %973 = vmatpush2.msra.mxu0 0.0
    %974 = vmatprep.subr.mxu0 0.0
    %975 = vmatpush2.msra.mxu0 0.0
    %976 = vmatprep.subr.mxu0 0.0
    %977 = vmatpush2.msra.mxu0 0.0
    %978 = vmatprep.subr.mxu0 0.0
    %979 = vmatpush2.msra.mxu0 0.0
    %980 = vmatprep.subr.mxu0 0.0
    %981 = vmatpush2.msra.mxu0 0.0
    %982 = vmatprep.subr.mxu0 0.0
    %983 = vmatpush2.msra.mxu0 0.0
    %984 = vmatprep.subr.mxu0 0.0
    %985 = vmatpush2.msra.mxu0 0.0
    %986 = vmatprep.subr.mxu0 0.0
    %987 = vmatpush2.msra.mxu0 0.0
    %988 = vmatprep.subr.mxu0 0.0
    %989 = vmatpush2.msra.mxu0 0.0
    %990 = vmatprep.subr.mxu0 0.0
    %991 = vmatpush2.msra.mxu0 0.0
    %992 = vmatprep.subr.mxu0 0.0
    %993 = vmatpush2.msra.mxu0 0.0
    %994 = vmatprep.subr.mxu0 0.0
    %995 = vmatpush2.msra.mxu0 0.0
    %996 = vmatprep.mubr.f32.mxu0 0.0
    %997 = vmatmul.mubr.f32.gmra.mxu0 %v930
    %v998 = vpop.f32.mrf.mxu0
    %v999 = vadd.f32 0.0, %v998
    %v1000 = vpop.f32.mrf.mxu0
    %1001 = vdwg.mxu0
    %v1003 = vsel %vm142, %v927, 0
    %1005 = vmatprep.subr.mxu0 0.0
    %1006 = vmatpush1.msra.mxu0 0.0
    %1007 = vmatprep.subr.mxu0 0.0
    %1008 = vmatpush1.msra.mxu0 0.0
    %1009 = vmatprep.subr.mxu0 0.0
    %1010 = vmatpush1.msra.mxu0 0.0
    %1011 = vmatprep.subr.mxu0 0.0
    %1012 = vmatpush1.msra.mxu0 0.0
    %1013 = vmatprep.subr.mxu0 0.0
    %1014 = vmatpush1.msra.mxu0 0.0
    %1015 = vmatprep.subr.mxu0 0.0
    %1016 = vmatpush1.msra.mxu0 0.0
    %1017 = vmatprep.subr.mxu0 0.0
    %1018 = vmatpush1.msra.mxu0 0.0
    %1019 = vmatprep.subr.mxu0 0.0
    %1020 = vmatpush1.msra.mxu0 0.0
    %1021 = vmatprep.subr.mxu0 0.0
    %1022 = vmatpush1.msra.mxu0 0.0
    %1023 = vmatprep.subr.mxu0 0.0
    %1024 = vmatpush1.msra.mxu0 0.0
    %1025 = vmatprep.subr.mxu0 0.0
    %1026 = vmatpush1.msra.mxu0 0.0
    %1027 = vmatprep.subr.mxu0 0.0
    %1028 = vmatpush1.msra.mxu0 0.0
    %1029 = vmatprep.subr.mxu0 0.0
    %1030 = vmatpush1.msra.mxu0 0.0
    %1031 = vmatprep.subr.mxu0 0.0
    %1032 = vmatpush1.msra.mxu0 0.0
    %1033 = vmatprep.subr.mxu0 0.0
    %1034 = vmatpush1.msra.mxu0 %v45
    %1035 = vmatprep.subr.mxu0 0.0
    %1036 = vmatpush1.msra.mxu0 %v44
    %1037 = vmatprep.subr.mxu0 0.0
    %1038 = vmatpush2.msra.mxu0 0.0
    %1039 = vmatprep.subr.mxu0 0.0
    %1040 = vmatpush2.msra.mxu0 0.0
    %1041 = vmatprep.subr.mxu0 0.0
    %1042 = vmatpush2.msra.mxu0 0.0
    %1043 = vmatprep.subr.mxu0 0.0
    %1044 = vmatpush2.msra.mxu0 0.0
    %1045 = vmatprep.subr.mxu0 0.0
    %1046 = vmatpush2.msra.mxu0 0.0
    %1047 = vmatprep.subr.mxu0 0.0
    %1048 = vmatpush2.msra.mxu0 0.0
    %1049 = vmatprep.subr.mxu0 0.0
    %1050 = vmatpush2.msra.mxu0 0.0
    %1051 = vmatprep.subr.mxu0 0.0
    %1052 = vmatpush2.msra.mxu0 0.0
    %1053 = vmatprep.subr.mxu0 0.0
    %1054 = vmatpush2.msra.mxu0 0.0
    %1055 = vmatprep.subr.mxu0 0.0
    %1056 = vmatpush2.msra.mxu0 0.0
    %1057 = vmatprep.subr.mxu0 0.0
    %1058 = vmatpush2.msra.mxu0 0.0
    %1059 = vmatprep.subr.mxu0 0.0
    %1060 = vmatpush2.msra.mxu0 0.0
    %1061 = vmatprep.subr.mxu0 0.0
    %1062 = vmatpush2.msra.mxu0 0.0
    %1063 = vmatprep.subr.mxu0 0.0
    %1064 = vmatpush2.msra.mxu0 0.0
    %1065 = vmatprep.subr.mxu0 0.0
    %1066 = vmatpush2.msra.mxu0 0.0
    %1067 = vmatprep.subr.mxu0 0.0
    %1068 = vmatpush2.msra.mxu0 0.0
    %1069 = vmatprep.mubr.f32.mxu0 0.0
    %1070 = vmatmul.mubr.f32.gmra.mxu0 %v1003
    %v1071 = vpop.f32.mrf.mxu0
    %v1072 = vadd.f32 %v999, %v1071
    %v1073 = vpop.f32.mrf.mxu0
    %1074 = vdwg.mxu0
    %v1075 = vadd.f32 %v1072, %v220
    %v1076 = vxor.u32 %v1075, 2147483648
    %v1077 = vmul.f32 %v1076, 1.442695
    %v1078 = vpow.pop %v1077
    %v1079 = vadd.f32 %v1078, 1.0
    %v1080 = vrcp.pop %v1079
    %v1081 = vmul.f32 1.0, %v1080
    %v1082 = vtanh.pop %v1075
    %v1083 = vmul.f32 %v1081, %v880
    %1085 = vrot.lane.b32.xlu0 %v1082, 64
    %v1086 = vpop.permute.xlu0 %1085
    %v1088 = vmul.f32 %v1081, %v1086
    %1090 = vrot.lane.b32.xlu0 %v1088, 32
    %v1091 = vpop.permute.xlu0 %1090
    %v1093 = vadd.f32 %v1083, %v1091
    %v1094 = vtanh.pop %v1093
    %1096 = vrot.lane.b32.xlu0 %v1094, 64
    %v1097 = vpop.permute.xlu0 %1096
    %v1099 = vmul.f32 %v1081, %v1097
    %v1102 = vunpack.c.l.s4 1966171168
    %v1103 = vunpack.c.0.s8 %v1102
    %v1104 = vlaneseq
    %v1105 = vshrl.u32 %v1104, 7
    %v1106 = vsub.s32 %v1103, %v1105
    %v1107 = vrot.slane %v1099, %v1106
    %v1108 = vcombine.high %v1107, %v1107
    %v1110 = vunpack.c.l.s4 1966171168
    %v1111 = vunpack.c.0.s8 %v1110
    %v1112 = vlaneseq
    %v1113 = vshrl.u32 %v1112, 7
    %v1114 = vsub.s32 %v1111, %v1113
    %v1115 = vrot.slane %v1107, %v1114
    %v1117 = vunpack.c.l.s4 1966171168
    %v1118 = vunpack.c.0.s8 %v1117
    %v1119 = vlaneseq
    %v1120 = vshrl.u32 %v1119, 7
    %v1121 = vsub.s32 %v1118, %v1120
    %v1122 = vrot.slane %v1108, %v1121
    %v1123 = vlaneseq
    %v1124 = vshrl.u32 %v1123, 7
    %v1125 = vsub.s32 0, %v1124
    %v1126 = vrot.slane %v1115, %v1125
    %v1127 = vlaneseq
    %v1128 = vshrl.u32 %v1127, 7
    %v1129 = vsub.s32 0, %v1128
    %v1130 = vrot.slane %v1122, %v1129
    %1131 = vrot.lane.b32.xlu0 %v1126, 32
    %v1132 = vpop.permute.xlu0 %1131
    %1133 = vrot.lane.b32.xlu0 %v1130, 32
    %v1134 = vpop.permute.xlu0 %1133
    %1137 = vst.msk [vmem:[#allocation2 + $0x4] sm:$0x1] %vm284, %v1132
    %1138 = vst.msk [vmem:[#allocation2 + $0xc] sm:$0x1] %vm284, %v1134
    %s1139 = scalar_lea.vmem %s0, 10
    %v1140 = vld [vmem:[%s1139] sm:$0x3]
    %1141 = vrot.lane.b32.xlu0 %v1099, 32
    %v1142 = vpop.permute.xlu0 %1141
    %v1143 = vsel %vm68, %v1142, 0
    %1145 = vmatprep.subr.mxu0 0.0
    %1146 = vmatpush1.msra.mxu0 0.0
    %1147 = vmatprep.subr.mxu0 0.0
    %1148 = vmatpush1.msra.mxu0 0.0
    %1149 = vmatprep.subr.mxu0 0.0
    %1150 = vmatpush1.msra.mxu0 0.0
    %1151 = vmatprep.subr.mxu0 0.0
    %1152 = vmatpush1.msra.mxu0 0.0
    %1153 = vmatprep.subr.mxu0 0.0
    %1154 = vmatpush1.msra.mxu0 0.0
    %1155 = vmatprep.subr.mxu0 0.0
    %1156 = vmatpush1.msra.mxu0 0.0
    %1157 = vmatprep.subr.mxu0 0.0
    %1158 = vmatpush1.msra.mxu0 0.0
    %1159 = vmatprep.subr.mxu0 0.0
    %1160 = vmatpush1.msra.mxu0 0.0
    %1161 = vmatprep.subr.mxu0 0.0
    %1162 = vmatpush1.msra.mxu0 0.0
    %1163 = vmatprep.subr.mxu0 0.0
    %1164 = vmatpush1.msra.mxu0 0.0
    %1165 = vmatprep.subr.mxu0 0.0
    %1166 = vmatpush1.msra.mxu0 0.0
    %1167 = vmatprep.subr.mxu0 0.0
    %1168 = vmatpush1.msra.mxu0 0.0
    %1169 = vmatprep.subr.mxu0 0.0
    %1170 = vmatpush1.msra.mxu0 %v49
    %1171 = vmatprep.subr.mxu0 0.0
    %1172 = vmatpush1.msra.mxu0 %v48
    %1173 = vmatprep.subr.mxu0 0.0
    %1174 = vmatpush1.msra.mxu0 %v47
    %1175 = vmatprep.subr.mxu0 0.0
    %1176 = vmatpush1.msra.mxu0 %v46
    %1177 = vmatprep.subr.mxu0 0.0
    %1178 = vmatpush2.msra.mxu0 0.0
    %1179 = vmatprep.subr.mxu0 0.0
    %1180 = vmatpush2.msra.mxu0 0.0
    %1181 = vmatprep.subr.mxu0 0.0
    %1182 = vmatpush2.msra.mxu0 0.0
    %1183 = vmatprep.subr.mxu0 0.0
    %1184 = vmatpush2.msra.mxu0 0.0
    %1185 = vmatprep.subr.mxu0 0.0
    %1186 = vmatpush2.msra.mxu0 0.0
    %1187 = vmatprep.subr.mxu0 0.0
    %1188 = vmatpush2.msra.mxu0 0.0
    %1189 = vmatprep.subr.mxu0 0.0
    %1190 = vmatpush2.msra.mxu0 0.0
    %1191 = vmatprep.subr.mxu0 0.0
    %1192 = vmatpush2.msra.mxu0 0.0
    %1193 = vmatprep.subr.mxu0 0.0
    %1194 = vmatpush2.msra.mxu0 0.0
    %1195 = vmatprep.subr.mxu0 0.0
    %1196 = vmatpush2.msra.mxu0 0.0
    %1197 = vmatprep.subr.mxu0 0.0
    %1198 = vmatpush2.msra.mxu0 0.0
    %1199 = vmatprep.subr.mxu0 0.0
    %1200 = vmatpush2.msra.mxu0 0.0
    %1201 = vmatprep.subr.mxu0 0.0
    %1202 = vmatpush2.msra.mxu0 0.0
    %1203 = vmatprep.subr.mxu0 0.0
    %1204 = vmatpush2.msra.mxu0 0.0
    %1205 = vmatprep.subr.mxu0 0.0
    %1206 = vmatpush2.msra.mxu0 0.0
    %1207 = vmatprep.subr.mxu0 0.0
    %1208 = vmatpush2.msra.mxu0 0.0
    %1209 = vmatprep.mubr.f32.mxu0 0.0
    %1210 = vmatmul.mubr.f32.gmra.mxu0 %v1143
    %v1211 = vpop.f32.mrf.mxu0
    %v1212 = vadd.f32 0.0, %v1211
    %v1213 = vpop.f32.mrf.mxu0
    %1214 = vdwg.mxu0
    %v1216 = vsel %vm142, %v1140, 0
    %1218 = vmatprep.subr.mxu0 0.0
    %1219 = vmatpush1.msra.mxu0 0.0
    %1220 = vmatprep.subr.mxu0 0.0
    %1221 = vmatpush1.msra.mxu0 0.0
    %1222 = vmatprep.subr.mxu0 0.0
    %1223 = vmatpush1.msra.mxu0 0.0
    %1224 = vmatprep.subr.mxu0 0.0
    %1225 = vmatpush1.msra.mxu0 0.0
    %1226 = vmatprep.subr.mxu0 0.0
    %1227 = vmatpush1.msra.mxu0 0.0
    %1228 = vmatprep.subr.mxu0 0.0
    %1229 = vmatpush1.msra.mxu0 0.0
    %1230 = vmatprep.subr.mxu0 0.0
    %1231 = vmatpush1.msra.mxu0 0.0
    %1232 = vmatprep.subr.mxu0 0.0
    %1233 = vmatpush1.msra.mxu0 0.0
    %1234 = vmatprep.subr.mxu0 0.0
    %1235 = vmatpush1.msra.mxu0 0.0
    %1236 = vmatprep.subr.mxu0 0.0
    %1237 = vmatpush1.msra.mxu0 0.0
    %1238 = vmatprep.subr.mxu0 0.0
    %1239 = vmatpush1.msra.mxu0 0.0
    %1240 = vmatprep.subr.mxu0 0.0
    %1241 = vmatpush1.msra.mxu0 0.0
    %1242 = vmatprep.subr.mxu0 0.0
    %1243 = vmatpush1.msra.mxu0 0.0
    %1244 = vmatprep.subr.mxu0 0.0
    %1245 = vmatpush1.msra.mxu0 0.0
    %1246 = vmatprep.subr.mxu0 0.0
    %1247 = vmatpush1.msra.mxu0 %v45
    %1248 = vmatprep.subr.mxu0 0.0
    %1249 = vmatpush1.msra.mxu0 %v44
    %1250 = vmatprep.subr.mxu0 0.0
    %1251 = vmatpush2.msra.mxu0 0.0
    %1252 = vmatprep.subr.mxu0 0.0
    %1253 = vmatpush2.msra.mxu0 0.0
    %1254 = vmatprep.subr.mxu0 0.0
    %1255 = vmatpush2.msra.mxu0 0.0
    %1256 = vmatprep.subr.mxu0 0.0
    %1257 = vmatpush2.msra.mxu0 0.0
    %1258 = vmatprep.subr.mxu0 0.0
    %1259 = vmatpush2.msra.mxu0 0.0
    %1260 = vmatprep.subr.mxu0 0.0
    %1261 = vmatpush2.msra.mxu0 0.0
    %1262 = vmatprep.subr.mxu0 0.0
    %1263 = vmatpush2.msra.mxu0 0.0
    %1264 = vmatprep.subr.mxu0 0.0
    %1265 = vmatpush2.msra.mxu0 0.0
    %1266 = vmatprep.subr.mxu0 0.0
    %1267 = vmatpush2.msra.mxu0 0.0
    %1268 = vmatprep.subr.mxu0 0.0
    %1269 = vmatpush2.msra.mxu0 0.0
    %1270 = vmatprep.subr.mxu0 0.0
    %1271 = vmatpush2.msra.mxu0 0.0
    %1272 = vmatprep.subr.mxu0 0.0
    %1273 = vmatpush2.msra.mxu0 0.0
    %1274 = vmatprep.subr.mxu0 0.0
    %1275 = vmatpush2.msra.mxu0 0.0
    %1276 = vmatprep.subr.mxu0 0.0
    %1277 = vmatpush2.msra.mxu0 0.0
    %1278 = vmatprep.subr.mxu0 0.0
    %1279 = vmatpush2.msra.mxu0 0.0
    %1280 = vmatprep.subr.mxu0 0.0
    %1281 = vmatpush2.msra.mxu0 0.0
    %1282 = vmatprep.mubr.f32.mxu0 0.0
    %1283 = vmatmul.mubr.f32.gmra.mxu0 %v1216
    %v1284 = vpop.f32.mrf.mxu0
    %v1285 = vadd.f32 %v1212, %v1284
    %v1286 = vpop.f32.mrf.mxu0
    %1287 = vdwg.mxu0
    %v1288 = vadd.f32 %v1285, %v220
    %v1289 = vxor.u32 %v1288, 2147483648
    %v1290 = vmul.f32 %v1289, 1.442695
    %v1291 = vpow.pop %v1290
    %v1292 = vadd.f32 %v1291, 1.0
    %v1293 = vrcp.pop %v1292
    %v1294 = vmul.f32 1.0, %v1293
    %v1295 = vtanh.pop %v1288
    %v1296 = vmul.f32 %v1294, %v1093
    %1298 = vrot.lane.b32.xlu0 %v1295, 64
    %v1299 = vpop.permute.xlu0 %1298
    %v1301 = vmul.f32 %v1294, %v1299
    %1303 = vrot.lane.b32.xlu0 %v1301, 32
    %v1304 = vpop.permute.xlu0 %1303
    %v1306 = vadd.f32 %v1296, %v1304
    %v1307 = vtanh.pop %v1306
    %1309 = vrot.lane.b32.xlu0 %v1307, 64
    %v1310 = vpop.permute.xlu0 %1309
    %v1312 = vmul.f32 %v1294, %v1310
    %v1315 = vunpack.c.l.s4 1966171168
    %v1316 = vunpack.c.0.s8 %v1315
    %v1317 = vlaneseq
    %v1318 = vshrl.u32 %v1317, 7
    %v1319 = vsub.s32 %v1316, %v1318
    %v1320 = vrot.slane %v1312, %v1319
    %v1321 = vcombine.high %v1320, %v1320
    %v1323 = vunpack.c.l.s4 1966171168
    %v1324 = vunpack.c.0.s8 %v1323
    %v1325 = vlaneseq
    %v1326 = vshrl.u32 %v1325, 7
    %v1327 = vsub.s32 %v1324, %v1326
    %v1328 = vrot.slane %v1320, %v1327
    %v1330 = vunpack.c.l.s4 1966171168
    %v1331 = vunpack.c.0.s8 %v1330
    %v1332 = vlaneseq
    %v1333 = vshrl.u32 %v1332, 7
    %v1334 = vsub.s32 %v1331, %v1333
    %v1335 = vrot.slane %v1321, %v1334
    %v1336 = vlaneseq
    %v1337 = vshrl.u32 %v1336, 7
    %v1338 = vsub.s32 0, %v1337
    %v1339 = vrot.slane %v1328, %v1338
    %v1340 = vlaneseq
    %v1341 = vshrl.u32 %v1340, 7
    %v1342 = vsub.s32 0, %v1341
    %v1343 = vrot.slane %v1335, %v1342
    %1344 = vrot.lane.b32.xlu0 %v1339, 32
    %v1345 = vpop.permute.xlu0 %1344
    %1346 = vrot.lane.b32.xlu0 %v1343, 32
    %v1347 = vpop.permute.xlu0 %1346
    %1350 = vst.msk [vmem:[#allocation2 + $0x5] sm:$0x1] %vm284, %v1345
    %1351 = vst.msk [vmem:[#allocation2 + $0xd] sm:$0x1] %vm284, %v1347
    %s1352 = scalar_lea.vmem %s0, 12
    %v1353 = vld [vmem:[%s1352] sm:$0x3]
    %1354 = vrot.lane.b32.xlu0 %v1312, 32
    %v1355 = vpop.permute.xlu0 %1354
    %v1356 = vsel %vm68, %v1355, 0
    %1358 = vmatprep.subr.mxu0 0.0
    %1359 = vmatpush1.msra.mxu0 0.0
    %1360 = vmatprep.subr.mxu0 0.0
    %1361 = vmatpush1.msra.mxu0 0.0
    %1362 = vmatprep.subr.mxu0 0.0
    %1363 = vmatpush1.msra.mxu0 0.0
    %1364 = vmatprep.subr.mxu0 0.0
    %1365 = vmatpush1.msra.mxu0 0.0
    %1366 = vmatprep.subr.mxu0 0.0
    %1367 = vmatpush1.msra.mxu0 0.0
    %1368 = vmatprep.subr.mxu0 0.0
    %1369 = vmatpush1.msra.mxu0 0.0
    %1370 = vmatprep.subr.mxu0 0.0
    %1371 = vmatpush1.msra.mxu0 0.0
    %1372 = vmatprep.subr.mxu0 0.0
    %1373 = vmatpush1.msra.mxu0 0.0
    %1374 = vmatprep.subr.mxu0 0.0
    %1375 = vmatpush1.msra.mxu0 0.0
    %1376 = vmatprep.subr.mxu0 0.0
    %1377 = vmatpush1.msra.mxu0 0.0
    %1378 = vmatprep.subr.mxu0 0.0
    %1379 = vmatpush1.msra.mxu0 0.0
    %1380 = vmatprep.subr.mxu0 0.0
    %1381 = vmatpush1.msra.mxu0 0.0
    %1382 = vmatprep.subr.mxu0 0.0
    %1383 = vmatpush1.msra.mxu0 %v49
    %1384 = vmatprep.subr.mxu0 0.0
    %1385 = vmatpush1.msra.mxu0 %v48
    %1386 = vmatprep.subr.mxu0 0.0
    %1387 = vmatpush1.msra.mxu0 %v47
    %1388 = vmatprep.subr.mxu0 0.0
    %1389 = vmatpush1.msra.mxu0 %v46
    %1390 = vmatprep.subr.mxu0 0.0
    %1391 = vmatpush2.msra.mxu0 0.0
    %1392 = vmatprep.subr.mxu0 0.0
    %1393 = vmatpush2.msra.mxu0 0.0
    %1394 = vmatprep.subr.mxu0 0.0
    %1395 = vmatpush2.msra.mxu0 0.0
    %1396 = vmatprep.subr.mxu0 0.0
    %1397 = vmatpush2.msra.mxu0 0.0
    %1398 = vmatprep.subr.mxu0 0.0
    %1399 = vmatpush2.msra.mxu0 0.0
    %1400 = vmatprep.subr.mxu0 0.0
    %1401 = vmatpush2.msra.mxu0 0.0
    %1402 = vmatprep.subr.mxu0 0.0
    %1403 = vmatpush2.msra.mxu0 0.0
    %1404 = vmatprep.subr.mxu0 0.0
    %1405 = vmatpush2.msra.mxu0 0.0
    %1406 = vmatprep.subr.mxu0 0.0
    %1407 = vmatpush2.msra.mxu0 0.0
    %1408 = vmatprep.subr.mxu0 0.0
    %1409 = vmatpush2.msra.mxu0 0.0
    %1410 = vmatprep.subr.mxu0 0.0
    %1411 = vmatpush2.msra.mxu0 0.0
    %1412 = vmatprep.subr.mxu0 0.0
    %1413 = vmatpush2.msra.mxu0 0.0
    %1414 = vmatprep.subr.mxu0 0.0
    %1415 = vmatpush2.msra.mxu0 0.0
    %1416 = vmatprep.subr.mxu0 0.0
    %1417 = vmatpush2.msra.mxu0 0.0
    %1418 = vmatprep.subr.mxu0 0.0
    %1419 = vmatpush2.msra.mxu0 0.0
    %1420 = vmatprep.subr.mxu0 0.0
    %1421 = vmatpush2.msra.mxu0 0.0
    %1422 = vmatprep.mubr.f32.mxu0 0.0
    %1423 = vmatmul.mubr.f32.gmra.mxu0 %v1356
    %v1424 = vpop.f32.mrf.mxu0
    %v1425 = vadd.f32 0.0, %v1424
    %v1426 = vpop.f32.mrf.mxu0
    %1427 = vdwg.mxu0
    %v1429 = vsel %vm142, %v1353, 0
    %1431 = vmatprep.subr.mxu0 0.0
    %1432 = vmatpush1.msra.mxu0 0.0
    %1433 = vmatprep.subr.mxu0 0.0
    %1434 = vmatpush1.msra.mxu0 0.0
    %1435 = vmatprep.subr.mxu0 0.0
    %1436 = vmatpush1.msra.mxu0 0.0
    %1437 = vmatprep.subr.mxu0 0.0
    %1438 = vmatpush1.msra.mxu0 0.0
    %1439 = vmatprep.subr.mxu0 0.0
    %1440 = vmatpush1.msra.mxu0 0.0
    %1441 = vmatprep.subr.mxu0 0.0
    %1442 = vmatpush1.msra.mxu0 0.0
    %1443 = vmatprep.subr.mxu0 0.0
    %1444 = vmatpush1.msra.mxu0 0.0
    %1445 = vmatprep.subr.mxu0 0.0
    %1446 = vmatpush1.msra.mxu0 0.0
    %1447 = vmatprep.subr.mxu0 0.0
    %1448 = vmatpush1.msra.mxu0 0.0
    %1449 = vmatprep.subr.mxu0 0.0
    %1450 = vmatpush1.msra.mxu0 0.0
    %1451 = vmatprep.subr.mxu0 0.0
    %1452 = vmatpush1.msra.mxu0 0.0
    %1453 = vmatprep.subr.mxu0 0.0
    %1454 = vmatpush1.msra.mxu0 0.0
    %1455 = vmatprep.subr.mxu0 0.0
    %1456 = vmatpush1.msra.mxu0 0.0
    %1457 = vmatprep.subr.mxu0 0.0
    %1458 = vmatpush1.msra.mxu0 0.0
    %1459 = vmatprep.subr.mxu0 0.0
    %1460 = vmatpush1.msra.mxu0 %v45
    %1461 = vmatprep.subr.mxu0 0.0
    %1462 = vmatpush1.msra.mxu0 %v44
    %1463 = vmatprep.subr.mxu0 0.0
    %1464 = vmatpush2.msra.mxu0 0.0
    %1465 = vmatprep.subr.mxu0 0.0
    %1466 = vmatpush2.msra.mxu0 0.0
    %1467 = vmatprep.subr.mxu0 0.0
    %1468 = vmatpush2.msra.mxu0 0.0
    %1469 = vmatprep.subr.mxu0 0.0
    %1470 = vmatpush2.msra.mxu0 0.0
    %1471 = vmatprep.subr.mxu0 0.0
    %1472 = vmatpush2.msra.mxu0 0.0
    %1473 = vmatprep.subr.mxu0 0.0
    %1474 = vmatpush2.msra.mxu0 0.0
    %1475 = vmatprep.subr.mxu0 0.0
    %1476 = vmatpush2.msra.mxu0 0.0
    %1477 = vmatprep.subr.mxu0 0.0
    %1478 = vmatpush2.msra.mxu0 0.0
    %1479 = vmatprep.subr.mxu0 0.0
    %1480 = vmatpush2.msra.mxu0 0.0
    %1481 = vmatprep.subr.mxu0 0.0
    %1482 = vmatpush2.msra.mxu0 0.0
    %1483 = vmatprep.subr.mxu0 0.0
    %1484 = vmatpush2.msra.mxu0 0.0
    %1485 = vmatprep.subr.mxu0 0.0
    %1486 = vmatpush2.msra.mxu0 0.0
    %1487 = vmatprep.subr.mxu0 0.0
    %1488 = vmatpush2.msra.mxu0 0.0
    %1489 = vmatprep.subr.mxu0 0.0
    %1490 = vmatpush2.msra.mxu0 0.0
    %1491 = vmatprep.subr.mxu0 0.0
    %1492 = vmatpush2.msra.mxu0 0.0
    %1493 = vmatprep.subr.mxu0 0.0
    %1494 = vmatpush2.msra.mxu0 0.0
    %1495 = vmatprep.mubr.f32.mxu0 0.0
    %1496 = vmatmul.mubr.f32.gmra.mxu0 %v1429
    %v1497 = vpop.f32.mrf.mxu0
    %v1498 = vadd.f32 %v1425, %v1497
    %v1499 = vpop.f32.mrf.mxu0
    %1500 = vdwg.mxu0
    %v1501 = vadd.f32 %v1498, %v220
    %v1502 = vxor.u32 %v1501, 2147483648
    %v1503 = vmul.f32 %v1502, 1.442695
    %v1504 = vpow.pop %v1503
    %v1505 = vadd.f32 %v1504, 1.0
    %v1506 = vrcp.pop %v1505
    %v1507 = vmul.f32 1.0, %v1506
    %v1508 = vtanh.pop %v1501
    %v1509 = vmul.f32 %v1507, %v1306
    %1511 = vrot.lane.b32.xlu0 %v1508, 64
    %v1512 = vpop.permute.xlu0 %1511
    %v1514 = vmul.f32 %v1507, %v1512
    %1516 = vrot.lane.b32.xlu0 %v1514, 32
    %v1517 = vpop.permute.xlu0 %1516
    %v1519 = vadd.f32 %v1509, %v1517
    %v1520 = vtanh.pop %v1519
    %1522 = vrot.lane.b32.xlu0 %v1520, 64
    %v1523 = vpop.permute.xlu0 %1522
    %v1525 = vmul.f32 %v1507, %v1523
    %v1528 = vunpack.c.l.s4 1966171168
    %v1529 = vunpack.c.0.s8 %v1528
    %v1530 = vlaneseq
    %v1531 = vshrl.u32 %v1530, 7
    %v1532 = vsub.s32 %v1529, %v1531
    %v1533 = vrot.slane %v1525, %v1532
    %v1534 = vcombine.high %v1533, %v1533
    %v1536 = vunpack.c.l.s4 1966171168
    %v1537 = vunpack.c.0.s8 %v1536
    %v1538 = vlaneseq
    %v1539 = vshrl.u32 %v1538, 7
    %v1540 = vsub.s32 %v1537, %v1539
    %v1541 = vrot.slane %v1533, %v1540
    %v1543 = vunpack.c.l.s4 1966171168
    %v1544 = vunpack.c.0.s8 %v1543
    %v1545 = vlaneseq
    %v1546 = vshrl.u32 %v1545, 7
    %v1547 = vsub.s32 %v1544, %v1546
    %v1548 = vrot.slane %v1534, %v1547
    %v1549 = vlaneseq
    %v1550 = vshrl.u32 %v1549, 7
    %v1551 = vsub.s32 0, %v1550
    %v1552 = vrot.slane %v1541, %v1551
    %v1553 = vlaneseq
    %v1554 = vshrl.u32 %v1553, 7
    %v1555 = vsub.s32 0, %v1554
    %v1556 = vrot.slane %v1548, %v1555
    %1557 = vrot.lane.b32.xlu0 %v1552, 32
    %v1558 = vpop.permute.xlu0 %1557
    %1559 = vrot.lane.b32.xlu0 %v1556, 32
    %v1560 = vpop.permute.xlu0 %1559
    %1563 = vst.msk [vmem:[#allocation2 + $0x6] sm:$0x1] %vm284, %v1558
    %1564 = vst.msk [vmem:[#allocation2 + $0xe] sm:$0x1] %vm284, %v1560
    %s1565 = scalar_lea.vmem %s0, 14
    %v1566 = vld [vmem:[%s1565] sm:$0x3]
    %1567 = vrot.lane.b32.xlu0 %v1525, 32
    %v1568 = vpop.permute.xlu0 %1567
    %v1569 = vsel %vm68, %v1568, 0
    %1571 = vmatprep.subr.mxu0 0.0
    %1572 = vmatpush1.msra.mxu0 0.0
    %1573 = vmatprep.subr.mxu0 0.0
    %1574 = vmatpush1.msra.mxu0 0.0
    %1575 = vmatprep.subr.mxu0 0.0
    %1576 = vmatpush1.msra.mxu0 0.0
    %1577 = vmatprep.subr.mxu0 0.0
    %1578 = vmatpush1.msra.mxu0 0.0
    %1579 = vmatprep.subr.mxu0 0.0
    %1580 = vmatpush1.msra.mxu0 0.0
    %1581 = vmatprep.subr.mxu0 0.0
    %1582 = vmatpush1.msra.mxu0 0.0
    %1583 = vmatprep.subr.mxu0 0.0
    %1584 = vmatpush1.msra.mxu0 0.0
    %1585 = vmatprep.subr.mxu0 0.0
    %1586 = vmatpush1.msra.mxu0 0.0
    %1587 = vmatprep.subr.mxu0 0.0
    %1588 = vmatpush1.msra.mxu0 0.0
    %1589 = vmatprep.subr.mxu0 0.0
    %1590 = vmatpush1.msra.mxu0 0.0
    %1591 = vmatprep.subr.mxu0 0.0
    %1592 = vmatpush1.msra.mxu0 0.0
    %1593 = vmatprep.subr.mxu0 0.0
    %1594 = vmatpush1.msra.mxu0 0.0
    %1595 = vmatprep.subr.mxu0 0.0
    %1596 = vmatpush1.msra.mxu0 %v49
    %1597 = vmatprep.subr.mxu0 0.0
    %1598 = vmatpush1.msra.mxu0 %v48
    %1599 = vmatprep.subr.mxu0 0.0
    %1600 = vmatpush1.msra.mxu0 %v47
    %1601 = vmatprep.subr.mxu0 0.0
    %1602 = vmatpush1.msra.mxu0 %v46
    %1603 = vmatprep.subr.mxu0 0.0
    %1604 = vmatpush2.msra.mxu0 0.0
    %1605 = vmatprep.subr.mxu0 0.0
    %1606 = vmatpush2.msra.mxu0 0.0
    %1607 = vmatprep.subr.mxu0 0.0
    %1608 = vmatpush2.msra.mxu0 0.0
    %1609 = vmatprep.subr.mxu0 0.0
    %1610 = vmatpush2.msra.mxu0 0.0
    %1611 = vmatprep.subr.mxu0 0.0
    %1612 = vmatpush2.msra.mxu0 0.0
    %1613 = vmatprep.subr.mxu0 0.0
    %1614 = vmatpush2.msra.mxu0 0.0
    %1615 = vmatprep.subr.mxu0 0.0
    %1616 = vmatpush2.msra.mxu0 0.0
    %1617 = vmatprep.subr.mxu0 0.0
    %1618 = vmatpush2.msra.mxu0 0.0
    %1619 = vmatprep.subr.mxu0 0.0
    %1620 = vmatpush2.msra.mxu0 0.0
    %1621 = vmatprep.subr.mxu0 0.0
    %1622 = vmatpush2.msra.mxu0 0.0
    %1623 = vmatprep.subr.mxu0 0.0
    %1624 = vmatpush2.msra.mxu0 0.0
    %1625 = vmatprep.subr.mxu0 0.0
    %1626 = vmatpush2.msra.mxu0 0.0
    %1627 = vmatprep.subr.mxu0 0.0
    %1628 = vmatpush2.msra.mxu0 0.0
    %1629 = vmatprep.subr.mxu0 0.0
    %1630 = vmatpush2.msra.mxu0 0.0
    %1631 = vmatprep.subr.mxu0 0.0
    %1632 = vmatpush2.msra.mxu0 0.0
    %1633 = vmatprep.subr.mxu0 0.0
    %1634 = vmatpush2.msra.mxu0 0.0
    %1635 = vmatprep.mubr.f32.mxu0 0.0
    %1636 = vmatmul.mubr.f32.gmra.mxu0 %v1569
    %v1637 = vpop.f32.mrf.mxu0
    %v1638 = vadd.f32 0.0, %v1637
    %v1639 = vpop.f32.mrf.mxu0
    %1640 = vdwg.mxu0
    %v1642 = vsel %vm142, %v1566, 0
    %1644 = vmatprep.subr.mxu0 0.0
    %1645 = vmatpush1.msra.mxu0 0.0
    %1646 = vmatprep.subr.mxu0 0.0
    %1647 = vmatpush1.msra.mxu0 0.0
    %1648 = vmatprep.subr.mxu0 0.0
    %1649 = vmatpush1.msra.mxu0 0.0
    %1650 = vmatprep.subr.mxu0 0.0
    %1651 = vmatpush1.msra.mxu0 0.0
    %1652 = vmatprep.subr.mxu0 0.0
    %1653 = vmatpush1.msra.mxu0 0.0
    %1654 = vmatprep.subr.mxu0 0.0
    %1655 = vmatpush1.msra.mxu0 0.0
    %1656 = vmatprep.subr.mxu0 0.0
    %1657 = vmatpush1.msra.mxu0 0.0
    %1658 = vmatprep.subr.mxu0 0.0
    %1659 = vmatpush1.msra.mxu0 0.0
    %1660 = vmatprep.subr.mxu0 0.0
    %1661 = vmatpush1.msra.mxu0 0.0
    %1662 = vmatprep.subr.mxu0 0.0
    %1663 = vmatpush1.msra.mxu0 0.0
    %1664 = vmatprep.subr.mxu0 0.0
    %1665 = vmatpush1.msra.mxu0 0.0
    %1666 = vmatprep.subr.mxu0 0.0
    %1667 = vmatpush1.msra.mxu0 0.0
    %1668 = vmatprep.subr.mxu0 0.0
    %1669 = vmatpush1.msra.mxu0 0.0
    %1670 = vmatprep.subr.mxu0 0.0
    %1671 = vmatpush1.msra.mxu0 0.0
    %1672 = vmatprep.subr.mxu0 0.0
    %1673 = vmatpush1.msra.mxu0 %v45
    %1674 = vmatprep.subr.mxu0 0.0
    %1675 = vmatpush1.msra.mxu0 %v44
    %1676 = vmatprep.subr.mxu0 0.0
    %1677 = vmatpush2.msra.mxu0 0.0
    %1678 = vmatprep.subr.mxu0 0.0
    %1679 = vmatpush2.msra.mxu0 0.0
    %1680 = vmatprep.subr.mxu0 0.0
    %1681 = vmatpush2.msra.mxu0 0.0
    %1682 = vmatprep.subr.mxu0 0.0
    %1683 = vmatpush2.msra.mxu0 0.0
    %1684 = vmatprep.subr.mxu0 0.0
    %1685 = vmatpush2.msra.mxu0 0.0
    %1686 = vmatprep.subr.mxu0 0.0
    %1687 = vmatpush2.msra.mxu0 0.0
    %1688 = vmatprep.subr.mxu0 0.0
    %1689 = vmatpush2.msra.mxu0 0.0
    %1690 = vmatprep.subr.mxu0 0.0
    %1691 = vmatpush2.msra.mxu0 0.0
    %1692 = vmatprep.subr.mxu0 0.0
    %1693 = vmatpush2.msra.mxu0 0.0
    %1694 = vmatprep.subr.mxu0 0.0
    %1695 = vmatpush2.msra.mxu0 0.0
    %1696 = vmatprep.subr.mxu0 0.0
    %1697 = vmatpush2.msra.mxu0 0.0
    %1698 = vmatprep.subr.mxu0 0.0
    %1699 = vmatpush2.msra.mxu0 0.0
    %1700 = vmatprep.subr.mxu0 0.0
    %1701 = vmatpush2.msra.mxu0 0.0
    %1702 = vmatprep.subr.mxu0 0.0
    %1703 = vmatpush2.msra.mxu0 0.0
    %1704 = vmatprep.subr.mxu0 0.0
    %1705 = vmatpush2.msra.mxu0 0.0
    %1706 = vmatprep.subr.mxu0 0.0
    %1707 = vmatpush2.msra.mxu0 0.0
    %1708 = vmatprep.mubr.f32.mxu0 0.0
    %1709 = vmatmul.mubr.f32.gmra.mxu0 %v1642
    %v1710 = vpop.f32.mrf.mxu0
    %v1711 = vadd.f32 %v1638, %v1710
    %v1712 = vpop.f32.mrf.mxu0
    %1713 = vdwg.mxu0
    %v1714 = vadd.f32 %v1711, %v220
    %v1715 = vxor.u32 %v1714, 2147483648
    %v1716 = vmul.f32 %v1715, 1.442695
    %v1717 = vpow.pop %v1716
    %v1718 = vadd.f32 %v1717, 1.0
    %v1719 = vrcp.pop %v1718
    %v1720 = vmul.f32 1.0, %v1719
    %v1721 = vtanh.pop %v1714
    %v1722 = vmul.f32 %v1720, %v1519
    %1724 = vrot.lane.b32.xlu0 %v1721, 64
    %v1725 = vpop.permute.xlu0 %1724
    %v1727 = vmul.f32 %v1720, %v1725
    %1729 = vrot.lane.b32.xlu0 %v1727, 32
    %v1730 = vpop.permute.xlu0 %1729
    %v1732 = vadd.f32 %v1722, %v1730
    %v1733 = vtanh.pop %v1732
    %1735 = vrot.lane.b32.xlu0 %v1733, 64
    %v1736 = vpop.permute.xlu0 %1735
    %v1738 = vmul.f32 %v1720, %v1736
    %v1741 = vunpack.c.l.s4 1966171168
    %v1742 = vunpack.c.0.s8 %v1741
    %v1743 = vlaneseq
    %v1744 = vshrl.u32 %v1743, 7
    %v1745 = vsub.s32 %v1742, %v1744
    %v1746 = vrot.slane %v1738, %v1745
    %v1747 = vcombine.high %v1746, %v1746
    %v1749 = vunpack.c.l.s4 1966171168
    %v1750 = vunpack.c.0.s8 %v1749
    %v1751 = vlaneseq
    %v1752 = vshrl.u32 %v1751, 7
    %v1753 = vsub.s32 %v1750, %v1752
    %v1754 = vrot.slane %v1746, %v1753
    %v1756 = vunpack.c.l.s4 1966171168
    %v1757 = vunpack.c.0.s8 %v1756
    %v1758 = vlaneseq
    %v1759 = vshrl.u32 %v1758, 7
    %v1760 = vsub.s32 %v1757, %v1759
    %v1761 = vrot.slane %v1747, %v1760
    %v1762 = vlaneseq
    %v1763 = vshrl.u32 %v1762, 7
    %v1764 = vsub.s32 0, %v1763
    %v1765 = vrot.slane %v1754, %v1764
    %v1766 = vlaneseq
    %v1767 = vshrl.u32 %v1766, 7
    %v1768 = vsub.s32 0, %v1767
    %v1769 = vrot.slane %v1761, %v1768
    %1770 = vrot.lane.b32.xlu0 %v1765, 32
    %v1771 = vpop.permute.xlu0 %1770
    %1772 = vrot.lane.b32.xlu0 %v1769, 32
    %v1773 = vpop.permute.xlu0 %1772
    %1776 = vst.msk [vmem:[#allocation2 + $0x7] sm:$0x1] %vm284, %v1771
    %1777 = vst.msk [vmem:[#allocation2 + $0xf] sm:$0x1] %vm284, %v1773
    %v1778 = vld [vmem:[#allocation2] sm:$0xff]
    %v1779 = vld [vmem:[#allocation2 + $0x8] sm:$0xff]
    %v1780 = vld [vmem:[%s1] sm:$0x3]
    %v1781 = vsub.f32 %v1780, 1.0
    %v1782 = vmul.f32 %v1781, 1e+09
    %v1783 = vlaneseq
    %v1784 = vand.u32 %v1783, 127
    %v1785 = vld [vmem:[%s3] sm:$0x3]
    %v1786 = vld [vmem:[%s2] sm:$0x3]
    %1787 = vrot.lane.b32.xlu0 %v1738, 32
    %v1788 = vpop.permute.xlu0 %1787
    %v1789 = vsel %vm68, %v1788, 0
    %1791 = vmatprep.subr.mxu0 0.0
    %1792 = vmatpush1.msra.mxu0 0.0
    %1793 = vmatprep.subr.mxu0 0.0
    %1794 = vmatpush1.msra.mxu0 0.0
    %1795 = vmatprep.subr.mxu0 0.0
    %1796 = vmatpush1.msra.mxu0 0.0
    %1797 = vmatprep.subr.mxu0 0.0
    %1798 = vmatpush1.msra.mxu0 0.0
    %1799 = vmatprep.subr.mxu0 0.0
    %1800 = vmatpush1.msra.mxu0 0.0
    %1801 = vmatprep.subr.mxu0 0.0
    %1802 = vmatpush1.msra.mxu0 0.0
    %1803 = vmatprep.subr.mxu0 0.0
    %1804 = vmatpush1.msra.mxu0 0.0
    %1805 = vmatprep.subr.mxu0 0.0
    %1806 = vmatpush1.msra.mxu0 0.0
    %1807 = vmatprep.subr.mxu0 0.0
    %1808 = vmatpush1.msra.mxu0 0.0
    %1809 = vmatprep.subr.mxu0 0.0
    %1810 = vmatpush1.msra.mxu0 0.0
    %1811 = vmatprep.subr.mxu0 0.0
    %1812 = vmatpush1.msra.mxu0 0.0
    %1813 = vmatprep.subr.mxu0 0.0
    %1814 = vmatpush1.msra.mxu0 0.0
    %1815 = vmatprep.subr.mxu0 0.0
    %1816 = vmatpush1.msra.mxu0 %v56
    %1817 = vmatprep.subr.mxu0 0.0
    %1818 = vmatpush1.msra.mxu0 %v55
    %1819 = vmatprep.subr.mxu0 0.0
    %1820 = vmatpush1.msra.mxu0 %v54
    %1821 = vmatprep.subr.mxu0 0.0
    %1822 = vmatpush1.msra.mxu0 %v53
    %1823 = vmatprep.subr.mxu0 0.0
    %1824 = vmatpush2.msra.mxu0 0.0
    %1825 = vmatprep.subr.mxu0 0.0
    %1826 = vmatpush2.msra.mxu0 0.0
    %1827 = vmatprep.subr.mxu0 0.0
    %1828 = vmatpush2.msra.mxu0 0.0
    %1829 = vmatprep.subr.mxu0 0.0
    %1830 = vmatpush2.msra.mxu0 0.0
    %1831 = vmatprep.subr.mxu0 0.0
    %1832 = vmatpush2.msra.mxu0 0.0
    %1833 = vmatprep.subr.mxu0 0.0
    %1834 = vmatpush2.msra.mxu0 0.0
    %1835 = vmatprep.subr.mxu0 0.0
    %1836 = vmatpush2.msra.mxu0 0.0
    %1837 = vmatprep.subr.mxu0 0.0
    %1838 = vmatpush2.msra.mxu0 0.0
    %1839 = vmatprep.subr.mxu0 0.0
    %1840 = vmatpush2.msra.mxu0 0.0
    %1841 = vmatprep.subr.mxu0 0.0
    %1842 = vmatpush2.msra.mxu0 0.0
    %1843 = vmatprep.subr.mxu0 0.0
    %1844 = vmatpush2.msra.mxu0 0.0
    %1845 = vmatprep.subr.mxu0 0.0
    %1846 = vmatpush2.msra.mxu0 0.0
    %1847 = vmatprep.subr.mxu0 0.0
    %1848 = vmatpush2.msra.mxu0 0.0
    %1849 = vmatprep.subr.mxu0 0.0
    %1850 = vmatpush2.msra.mxu0 0.0
    %1851 = vmatprep.subr.mxu0 0.0
    %1852 = vmatpush2.msra.mxu0 0.0
    %1853 = vmatprep.subr.mxu0 0.0
    %1854 = vmatpush2.msra.mxu0 0.0
    %1855 = vmatprep.mubr.f32.mxu0 0.0
    %1856 = vmatmul.mubr.f32.gmra.mxu0 %v1789
    %v1857 = vpop.f32.mrf.mxu0
    %v1858 = vadd.f32 0.0, %v1857
    %v1859 = vpop.f32.mrf.mxu0
    %1860 = vdwg.mxu0
    %v1862 = vsel %vm142, %v1786, 0
    %1864 = vmatprep.subr.mxu0 0.0
    %1865 = vmatpush1.msra.mxu0 0.0
    %1866 = vmatprep.subr.mxu0 0.0
    %1867 = vmatpush1.msra.mxu0 0.0
    %1868 = vmatprep.subr.mxu0 0.0
    %1869 = vmatpush1.msra.mxu0 0.0
    %1870 = vmatprep.subr.mxu0 0.0
    %1871 = vmatpush1.msra.mxu0 0.0
    %1872 = vmatprep.subr.mxu0 0.0
    %1873 = vmatpush1.msra.mxu0 0.0
    %1874 = vmatprep.subr.mxu0 0.0
    %1875 = vmatpush1.msra.mxu0 0.0
    %1876 = vmatprep.subr.mxu0 0.0
    %1877 = vmatpush1.msra.mxu0 0.0
    %1878 = vmatprep.subr.mxu0 0.0
    %1879 = vmatpush1.msra.mxu0 0.0
    %1880 = vmatprep.subr.mxu0 0.0
    %1881 = vmatpush1.msra.mxu0 0.0
    %1882 = vmatprep.subr.mxu0 0.0
    %1883 = vmatpush1.msra.mxu0 0.0
    %1884 = vmatprep.subr.mxu0 0.0
    %1885 = vmatpush1.msra.mxu0 0.0
    %1886 = vmatprep.subr.mxu0 0.0
    %1887 = vmatpush1.msra.mxu0 0.0
    %1888 = vmatprep.subr.mxu0 0.0
    %1889 = vmatpush1.msra.mxu0 0.0
    %1890 = vmatprep.subr.mxu0 0.0
    %1891 = vmatpush1.msra.mxu0 0.0
    %1892 = vmatprep.subr.mxu0 0.0
    %1893 = vmatpush1.msra.mxu0 %v52
    %1894 = vmatprep.subr.mxu0 0.0
    %1895 = vmatpush1.msra.mxu0 %v51
    %1896 = vmatprep.subr.mxu0 0.0
    %1897 = vmatpush2.msra.mxu0 0.0
    %1898 = vmatprep.subr.mxu0 0.0
    %1899 = vmatpush2.msra.mxu0 0.0
    %1900 = vmatprep.subr.mxu0 0.0
    %1901 = vmatpush2.msra.mxu0 0.0
    %1902 = vmatprep.subr.mxu0 0.0
    %1903 = vmatpush2.msra.mxu0 0.0
    %1904 = vmatprep.subr.mxu0 0.0
    %1905 = vmatpush2.msra.mxu0 0.0
    %1906 = vmatprep.subr.mxu0 0.0
    %1907 = vmatpush2.msra.mxu0 0.0
    %1908 = vmatprep.subr.mxu0 0.0
    %1909 = vmatpush2.msra.mxu0 0.0
    %1910 = vmatprep.subr.mxu0 0.0
    %1911 = vmatpush2.msra.mxu0 0.0
    %1912 = vmatprep.subr.mxu0 0.0
    %1913 = vmatpush2.msra.mxu0 0.0
    %1914 = vmatprep.subr.mxu0 0.0
    %1915 = vmatpush2.msra.mxu0 0.0
    %1916 = vmatprep.subr.mxu0 0.0
    %1917 = vmatpush2.msra.mxu0 0.0
    %1918 = vmatprep.subr.mxu0 0.0
    %1919 = vmatpush2.msra.mxu0 0.0
    %1920 = vmatprep.subr.mxu0 0.0
    %1921 = vmatpush2.msra.mxu0 0.0
    %1922 = vmatprep.subr.mxu0 0.0
    %1923 = vmatpush2.msra.mxu0 0.0
    %1924 = vmatprep.subr.mxu0 0.0
    %1925 = vmatpush2.msra.mxu0 0.0
    %1926 = vmatprep.subr.mxu0 0.0
    %1927 = vmatpush2.msra.mxu0 0.0
    %1928 = vmatprep.mubr.f32.mxu0 0.0
    %1929 = vmatmul.mubr.f32.gmra.mxu0 %v1862
    %v1930 = vpop.f32.mrf.mxu0
    %v1931 = vadd.f32 %v1858, %v1930
    %v1932 = vpop.f32.mrf.mxu0
    %1933 = vdwg.mxu0
    %v1935 = vlaneseq
    %v1936 = vshrl.u32 %v1935, 7
    %v1937 = vsub.s32 0, %v1936
    %v1938 = vrot.slane %v57, %v1937
    %v1940 = vadd.f32 %v1931, %v1938
    %v1941 = vxor.u32 %v1940, 2147483648
    %v1942 = vmul.f32 %v1941, 1.442695
    %v1943 = vpow.pop %v1942
    %v1944 = vadd.f32 %v1943, 1.0
    %v1945 = vrcp.pop %v1944
    %v1946 = vmul.f32 1.0, %v1945
    %v1947 = vtanh.pop %v1940
    %v1948 = vmul.f32 %v1946, %v1732
    %1950 = vrot.lane.b32.xlu0 %v1947, 64
    %v1951 = vpop.permute.xlu0 %1950
    %v1953 = vmul.f32 %v1946, %v1951
    %1955 = vrot.lane.b32.xlu0 %v1953, 32
    %v1956 = vpop.permute.xlu0 %1955
    %v1958 = vadd.f32 %v1948, %v1956
    %v1959 = vtanh.pop %v1958
    %1961 = vrot.lane.b32.xlu0 %v1959, 64
    %v1962 = vpop.permute.xlu0 %1961
    %v1964 = vmul.f32 %v1946, %v1962
    %v1967 = vunpack.c.l.s4 1966171168
    %v1968 = vunpack.c.0.s8 %v1967
    %v1969 = vlaneseq
    %v1970 = vshrl.u32 %v1969, 7
    %v1971 = vsub.s32 %v1968, %v1970
    %v1972 = vrot.slane %v1964, %v1971
    %v1973 = vcombine.high %v1972, %v1972
    %v1975 = vunpack.c.l.s4 1966171168
    %v1976 = vunpack.c.0.s8 %v1975
    %v1977 = vlaneseq
    %v1978 = vshrl.u32 %v1977, 7
    %v1979 = vsub.s32 %v1976, %v1978
    %v1980 = vrot.slane %v1972, %v1979
    %v1982 = vunpack.c.l.s4 1966171168
    %v1983 = vunpack.c.0.s8 %v1982
    %v1984 = vlaneseq
    %v1985 = vshrl.u32 %v1984, 7
    %v1986 = vsub.s32 %v1983, %v1985
    %v1987 = vrot.slane %v1973, %v1986
    %v1988 = vlaneseq
    %v1989 = vshrl.u32 %v1988, 7
    %v1990 = vsub.s32 0, %v1989
    %v1991 = vrot.slane %v1980, %v1990
    %v1992 = vlaneseq
    %v1993 = vshrl.u32 %v1992, 7
    %v1994 = vsub.s32 0, %v1993
    %v1995 = vrot.slane %v1987, %v1994
    %2000 = vrot.lane.b32.xlu0 %v1778, 96
    %v2001 = vpop.permute.xlu0 %2000
    %2002 = vrot.lane.b32.xlu0 %v1779, 96
    %v2003 = vpop.permute.xlu0 %2002
    %v2006 = vmul.f32 %v1991, %v2001
    %v2007 = vmul.f32 %v1995, %v2003
    %2010 = vrot.lane.b32.xlu0 %v2006, 32
    %v2011 = vpop.permute.xlu0 %2010
    %2012 = vrot.lane.b32.xlu0 %v2007, 32
    %v2013 = vpop.permute.xlu0 %2012
    %v2016 = vsel %vm68, %v2011, 0.0
    %2017 = vadd.xlane.f32.xlu0 %v2016
    %v2018 = vpop.xlane.xlu0 %2017
    %v2019 = vsel %vm68, %v2013, 0.0
    %2020 = vadd.xlane.f32.xlu0 %v2019
    %v2021 = vpop.xlane.xlu0 %2020
    %v2023 = vlaneseq
    %v2024 = vshrl.u32 %v2023, 7
    %v2025 = vsub.s32 0, %v2024
    %v2026 = vrot.slane %v1782, %v2025
    %2028 = vbcast.lane.b32.xlu0 %v2026, 256
    %v2029 = vpop.permute.xlu0 %2028
    %v2030 = vlaneseq
    %v2031 = vshrl.u32 %v2030, 7
    %v2032 = vsub.s32 1, %v2031
    %v2033 = vrot.slane %v1782, %v2032
    %2035 = vbcast.lane.b32.xlu0 %v2033, 256
    %v2036 = vpop.permute.xlu0 %2035
    %v2039 = vadd.f32 %v2018, %v2029
    %v2040 = vadd.f32 %v2021, %v2036
    %2043 = vset.pattern.permute.xlu0 0
    %2044 = vperm.xlu0 %2043, %v2039
    %v2045 = vpop.permute.xlu0 %2044
    %2046 = vset.pattern.permute.xlu0 0
    %2047 = vperm.xlu0 %2046, %v2040
    %v2048 = vpop.permute.xlu0 %2047
    %v2049 = vlaneseq
    %v2050 = vshrl.u32 %v2049, 7
    %v2051 = vsub.s32 %v1784, %v2050
    %v2052 = vrot.slane %v2045, %v2051
    %v2053 = vlaneseq
    %v2054 = vshrl.u32 %v2053, 7
    %v2055 = vsub.s32 %v1784, %v2054
    %v2056 = vrot.slane %v2048, %v2055
    %vm2057 = vcmask 1041409
    %v2058 = vsel %vm2057, %v2056, %v2052
    %vm2060 = vcmask 58368
    %v2061 = vsel %vm2060, %v2058, -inf
    %2062 = vmax.xlane.f32.xlu0 %v2061
    %v2063 = vpop.xlane.xlu0 %2062
    %v2065 = vlaneseq
    %v2066 = vshrl.u32 %v2065, 7
    %v2067 = vsub.s32 0, %v2066
    %v2068 = vrot.slane %v2063, %v2067
    %v2069 = vlaneseq
    %v2070 = vshrl.u32 %v2069, 7
    %v2071 = vsub.s32 1, %v2070
    %v2072 = vrot.slane %v2063, %v2071
    %v2075 = vsub.f32 %v2039, %v2068
    %v2076 = vsub.f32 %v2040, %v2072
    %v2077 = vmul.f32 %v2075, 1.442695
    %v2078 = vpow.pop %v2077
    %v2079 = vmul.f32 %v2076, 1.442695
    %v2080 = vpow.pop %v2079
    %2083 = vset.pattern.permute.xlu0 0
    %2084 = vperm.xlu0 %2083, %v2078
    %v2085 = vpop.permute.xlu0 %2084
    %2086 = vset.pattern.permute.xlu0 0
    %2087 = vperm.xlu0 %2086, %v2080
    %v2088 = vpop.permute.xlu0 %2087
    %v2089 = vlaneseq
    %v2090 = vshrl.u32 %v2089, 7
    %v2091 = vsub.s32 %v1784, %v2090
    %v2092 = vrot.slane %v2085, %v2091
    %v2093 = vlaneseq
    %v2094 = vshrl.u32 %v2093, 7
    %v2095 = vsub.s32 %v1784, %v2094
    %v2096 = vrot.slane %v2088, %v2095
    %v2097 = vsel %vm2057, %v2096, %v2092
    %v2099 = vsel %vm2060, %v2097, 0.0
    %2100 = vadd.xlane.f32.xlu0 %v2099
    %v2101 = vpop.xlane.xlu0 %2100
    %v2102 = vrcp.pop %v2101
    %v2104 = vlaneseq
    %v2105 = vshrl.u32 %v2104, 7
    %v2106 = vsub.s32 0, %v2105
    %v2107 = vrot.slane %v2102, %v2106
    %v2108 = vlaneseq
    %v2109 = vshrl.u32 %v2108, 7
    %v2110 = vsub.s32 1, %v2109
    %v2111 = vrot.slane %v2102, %v2110
    %v2114 = vmul.f32 %v2078, %v2107
    %v2115 = vmul.f32 %v2080, %v2111
    %2117 = vset.pattern.permute.xlu0 0
    %2118 = vperm.xlu0 %2117, %v2114
    %v2119 = vpop.permute.xlu0 %2118
    %2122 = vset.pattern.permute.xlu0 0
    %2123 = vperm.xlu0 %2122, %v2115
    %v2124 = vpop.permute.xlu0 %2123
    %v2126 = vmul.f32 %v2119, %v1778
    %v2127 = vmul.f32 %v2124, %v1779
    %v2128 = vsel %vm68, %v2126, 0.0
    %v2129 = vrot.slane %v2128, 4
    %v2130 = vadd.f32 %v2128, %v2129
    %v2131 = vrot.slane %v2130, 2
    %v2132 = vadd.f32 %v2130, %v2131
    %v2133 = vrot.slane %v2132, 1
    %v2134 = vadd.f32 %v2132, %v2133
    %v2135 = vsel %vm68, %v2127, 0.0
    %v2136 = vrot.slane %v2135, 4
    %v2137 = vadd.f32 %v2135, %v2136
    %v2138 = vrot.slane %v2137, 2
    %v2139 = vadd.f32 %v2137, %v2138
    %v2140 = vrot.slane %v2139, 1
    %v2141 = vadd.f32 %v2139, %v2140
    %2142 = vrot.lane.b32.xlu0 %v1964, 32
    %v2143 = vpop.permute.xlu0 %2142
    %v2147 = vsel %vm2057, %v2141, %v2134
    %2148 = vrot.lane.b32.xlu0 %v2147, 32
    %v2149 = vpop.permute.xlu0 %2148
    %v2151 = vsel %vm68, %v2143, %v2149
    %v2153 = vlaneseq
    %v2154 = vshrl.u32 %v2153, 7
    %v2155 = vsub.s32 0, %v2154
    %v2156 = vrot.slane %v66, %v2155
    %vm2158 = vcmask 523264
    %v2160 = vsel %vm2158, %v2151, 0
    %2162 = vmatprep.subr.mxu0 0.0
    %2163 = vmatpush1.msra.mxu0 0.0
    %2164 = vmatprep.subr.mxu0 0.0
    %2165 = vmatpush1.msra.mxu0 0.0
    %2166 = vmatprep.subr.mxu0 0.0
    %2167 = vmatpush1.msra.mxu0 0.0
    %2168 = vmatprep.subr.mxu0 0.0
    %2169 = vmatpush1.msra.mxu0 0.0
    %2170 = vmatprep.subr.mxu0 0.0
    %2171 = vmatpush1.msra.mxu0 0.0
    %2172 = vmatprep.subr.mxu0 0.0
    %2173 = vmatpush1.msra.mxu0 0.0
    %2174 = vmatprep.subr.mxu0 0.0
    %2175 = vmatpush1.msra.mxu0 0.0
    %2176 = vmatprep.subr.mxu0 0.0
    %2177 = vmatpush1.msra.mxu0 0.0
    %2178 = vmatprep.subr.mxu0 0.0
    %2179 = vmatpush1.msra.mxu0 %v65
    %2180 = vmatprep.subr.mxu0 0.0
    %2181 = vmatpush1.msra.mxu0 %v64
    %2182 = vmatprep.subr.mxu0 0.0
    %2183 = vmatpush1.msra.mxu0 %v63
    %2184 = vmatprep.subr.mxu0 0.0
    %2185 = vmatpush1.msra.mxu0 %v62
    %2186 = vmatprep.subr.mxu0 0.0
    %2187 = vmatpush1.msra.mxu0 %v61
    %2188 = vmatprep.subr.mxu0 0.0
    %2189 = vmatpush1.msra.mxu0 %v60
    %2190 = vmatprep.subr.mxu0 0.0
    %2191 = vmatpush1.msra.mxu0 %v59
    %2192 = vmatprep.subr.mxu0 0.0
    %2193 = vmatpush1.msra.mxu0 %v58
    %2194 = vmatprep.subr.mxu0 0.0
    %2195 = vmatpush2.msra.mxu0 0.0
    %2196 = vmatprep.subr.mxu0 0.0
    %2197 = vmatpush2.msra.mxu0 0.0
    %2198 = vmatprep.subr.mxu0 0.0
    %2199 = vmatpush2.msra.mxu0 0.0
    %2200 = vmatprep.subr.mxu0 0.0
    %2201 = vmatpush2.msra.mxu0 0.0
    %2202 = vmatprep.subr.mxu0 0.0
    %2203 = vmatpush2.msra.mxu0 0.0
    %2204 = vmatprep.subr.mxu0 0.0
    %2205 = vmatpush2.msra.mxu0 0.0
    %2206 = vmatprep.subr.mxu0 0.0
    %2207 = vmatpush2.msra.mxu0 0.0
    %2208 = vmatprep.subr.mxu0 0.0
    %2209 = vmatpush2.msra.mxu0 0.0
    %2210 = vmatprep.subr.mxu0 0.0
    %2211 = vmatpush2.msra.mxu0 0.0
    %2212 = vmatprep.subr.mxu0 0.0
    %2213 = vmatpush2.msra.mxu0 0.0
    %2214 = vmatprep.subr.mxu0 0.0
    %2215 = vmatpush2.msra.mxu0 0.0
    %2216 = vmatprep.subr.mxu0 0.0
    %2217 = vmatpush2.msra.mxu0 0.0
    %2218 = vmatprep.subr.mxu0 0.0
    %2219 = vmatpush2.msra.mxu0 0.0
    %2220 = vmatprep.subr.mxu0 0.0
    %2221 = vmatpush2.msra.mxu0 0.0
    %2222 = vmatprep.subr.mxu0 0.0
    %2223 = vmatpush2.msra.mxu0 0.0
    %2224 = vmatprep.subr.mxu0 0.0
    %2225 = vmatpush2.msra.mxu0 0.0
    %2226 = vmatprep.mubr.f32.mxu0 0.0
    %2227 = vmatmul.mubr.f32.gmra.mxu0 %v2160
    %v2228 = vpop.f32.mrf.mxu0
    %v2229 = vadd.f32 %v2156, %v2228
    %v2230 = vpop.f32.mrf.mxu0
    %2231 = vdwg.mxu0
    %vm2232 = vcmask 1041408
    %v2233 = vsel %vm2232, %v2229, -inf
    %2234 = vmax.xlane.f32.xlu0 %v2233
    %v2235 = vpop.xlane.xlu0 %2234
    %v2236 = vsub.f32 %v2229, %v2235
    %v2237 = vmul.f32 %v2236, 1.442695
    %v2238 = vpow.pop %v2237
    %v2239 = vsel %vm2232, %v2238, 0.0
    %2240 = vadd.xlane.f32.xlu0 %v2239
    %v2241 = vpop.xlane.xlu0 %2240
    %v2242 = vlog2.pop %v2241
    %v2243 = vmul.f32 %v2242, 0.6931472
    %v2244 = vsub.f32 %v2236, %v2243
    %2245 = vset.pattern.permute.xlu0 0
    %2246 = vperm.xlu0 %2245, %v1785
    %v2247 = vpop.permute.xlu0 %2246
    %vm2248 = vcmp.eq.s32.totalorder %v1784, %v2247
    %v2249 = vsel %vm2248, 1, 0
    %v2250 = vcvt.s32.f32 %v2249
    %v2251 = vmul.f32 %v2250, %v2244
    %v2252 = vsel %vm2232, %v2251, 0.0
    %2253 = vadd.xlane.f32.xlu0 %v2252
    %v2254 = vpop.xlane.xlu0 %2253
    %v2255 = vsub.f32 0.0, %v2254
    %vm2256 = vcmp.ne.s32.totalorder %v1785, 0
    %v2257 = vsel %vm2256, 1, 0
    %v2258 = vcvt.s32.f32 %v2257
    %v2259 = vmul.f32 %v2255, %v2258
    %v2260 = vadd.f32 %v2259, 0.0
    %s2261 = scalar_lea.vmem %s2, 2
    %v2262 = vld [vmem:[%s2261] sm:$0x3]
    %v2263 = vsel %vm68, %v2143, 0
    %2265 = vmatprep.subr.mxu0 0.0
    %2266 = vmatpush1.msra.mxu0 0.0
    %2267 = vmatprep.subr.mxu0 0.0
    %2268 = vmatpush1.msra.mxu0 0.0
    %2269 = vmatprep.subr.mxu0 0.0
    %2270 = vmatpush1.msra.mxu0 0.0
    %2271 = vmatprep.subr.mxu0 0.0
    %2272 = vmatpush1.msra.mxu0 0.0
    %2273 = vmatprep.subr.mxu0 0.0
    %2274 = vmatpush1.msra.mxu0 0.0
    %2275 = vmatprep.subr.mxu0 0.0
    %2276 = vmatpush1.msra.mxu0 0.0
    %2277 = vmatprep.subr.mxu0 0.0
    %2278 = vmatpush1.msra.mxu0 0.0
    %2279 = vmatprep.subr.mxu0 0.0
    %2280 = vmatpush1.msra.mxu0 0.0
    %2281 = vmatprep.subr.mxu0 0.0
    %2282 = vmatpush1.msra.mxu0 0.0
    %2283 = vmatprep.subr.mxu0 0.0
    %2284 = vmatpush1.msra.mxu0 0.0
    %2285 = vmatprep.subr.mxu0 0.0
    %2286 = vmatpush1.msra.mxu0 0.0
    %2287 = vmatprep.subr.mxu0 0.0
    %2288 = vmatpush1.msra.mxu0 0.0
    %2289 = vmatprep.subr.mxu0 0.0
    %2290 = vmatpush1.msra.mxu0 %v56
    %2291 = vmatprep.subr.mxu0 0.0
    %2292 = vmatpush1.msra.mxu0 %v55
    %2293 = vmatprep.subr.mxu0 0.0
    %2294 = vmatpush1.msra.mxu0 %v54
    %2295 = vmatprep.subr.mxu0 0.0
    %2296 = vmatpush1.msra.mxu0 %v53
    %2297 = vmatprep.subr.mxu0 0.0
    %2298 = vmatpush2.msra.mxu0 0.0
    %2299 = vmatprep.subr.mxu0 0.0
    %2300 = vmatpush2.msra.mxu0 0.0
    %2301 = vmatprep.subr.mxu0 0.0
    %2302 = vmatpush2.msra.mxu0 0.0
    %2303 = vmatprep.subr.mxu0 0.0
    %2304 = vmatpush2.msra.mxu0 0.0
    %2305 = vmatprep.subr.mxu0 0.0
    %2306 = vmatpush2.msra.mxu0 0.0
    %2307 = vmatprep.subr.mxu0 0.0
    %2308 = vmatpush2.msra.mxu0 0.0
    %2309 = vmatprep.subr.mxu0 0.0
    %2310 = vmatpush2.msra.mxu0 0.0
    %2311 = vmatprep.subr.mxu0 0.0
    %2312 = vmatpush2.msra.mxu0 0.0
    %2313 = vmatprep.subr.mxu0 0.0
    %2314 = vmatpush2.msra.mxu0 0.0
    %2315 = vmatprep.subr.mxu0 0.0
    %2316 = vmatpush2.msra.mxu0 0.0
    %2317 = vmatprep.subr.mxu0 0.0
    %2318 = vmatpush2.msra.mxu0 0.0
    %2319 = vmatprep.subr.mxu0 0.0
    %2320 = vmatpush2.msra.mxu0 0.0
    %2321 = vmatprep.subr.mxu0 0.0
    %2322 = vmatpush2.msra.mxu0 0.0
    %2323 = vmatprep.subr.mxu0 0.0
    %2324 = vmatpush2.msra.mxu0 0.0
    %2325 = vmatprep.subr.mxu0 0.0
    %2326 = vmatpush2.msra.mxu0 0.0
    %2327 = vmatprep.subr.mxu0 0.0
    %2328 = vmatpush2.msra.mxu0 0.0
    %2329 = vmatprep.mubr.f32.mxu0 0.0
    %2330 = vmatmul.mubr.f32.gmra.mxu0 %v2263
    %v2331 = vpop.f32.mrf.mxu0
    %v2332 = vadd.f32 0.0, %v2331
    %v2333 = vpop.f32.mrf.mxu0
    %2334 = vdwg.mxu0
    %v2336 = vsel %vm142, %v2262, 0
    %2338 = vmatprep.subr.mxu0 0.0
    %2339 = vmatpush1.msra.mxu0 0.0
    %2340 = vmatprep.subr.mxu0 0.0
    %2341 = vmatpush1.msra.mxu0 0.0
    %2342 = vmatprep.subr.mxu0 0.0
    %2343 = vmatpush1.msra.mxu0 0.0
    %2344 = vmatprep.subr.mxu0 0.0
    %2345 = vmatpush1.msra.mxu0 0.0
    %2346 = vmatprep.subr.mxu0 0.0
    %2347 = vmatpush1.msra.mxu0 0.0
    %2348 = vmatprep.subr.mxu0 0.0
    %2349 = vmatpush1.msra.mxu0 0.0
    %2350 = vmatprep.subr.mxu0 0.0
    %2351 = vmatpush1.msra.mxu0 0.0
    %2352 = vmatprep.subr.mxu0 0.0
    %2353 = vmatpush1.msra.mxu0 0.0
    %2354 = vmatprep.subr.mxu0 0.0
    %2355 = vmatpush1.msra.mxu0 0.0
    %2356 = vmatprep.subr.mxu0 0.0
    %2357 = vmatpush1.msra.mxu0 0.0
    %2358 = vmatprep.subr.mxu0 0.0
    %2359 = vmatpush1.msra.mxu0 0.0
    %2360 = vmatprep.subr.mxu0 0.0
    %2361 = vmatpush1.msra.mxu0 0.0
    %2362 = vmatprep.subr.mxu0 0.0
    %2363 = vmatpush1.msra.mxu0 0.0
    %2364 = vmatprep.subr.mxu0 0.0
    %2365 = vmatpush1.msra.mxu0 0.0
    %2366 = vmatprep.subr.mxu0 0.0
    %2367 = vmatpush1.msra.mxu0 %v52
    %2368 = vmatprep.subr.mxu0 0.0
    %2369 = vmatpush1.msra.mxu0 %v51
    %2370 = vmatprep.subr.mxu0 0.0
    %2371 = vmatpush2.msra.mxu0 0.0
    %2372 = vmatprep.subr.mxu0 0.0
    %2373 = vmatpush2.msra.mxu0 0.0
    %2374 = vmatprep.subr.mxu0 0.0
    %2375 = vmatpush2.msra.mxu0 0.0
    %2376 = vmatprep.subr.mxu0 0.0
    %2377 = vmatpush2.msra.mxu0 0.0
    %2378 = vmatprep.subr.mxu0 0.0
    %2379 = vmatpush2.msra.mxu0 0.0
    %2380 = vmatprep.subr.mxu0 0.0
    %2381 = vmatpush2.msra.mxu0 0.0
    %2382 = vmatprep.subr.mxu0 0.0
    %2383 = vmatpush2.msra.mxu0 0.0
    %2384 = vmatprep.subr.mxu0 0.0
    %2385 = vmatpush2.msra.mxu0 0.0
    %2386 = vmatprep.subr.mxu0 0.0
    %2387 = vmatpush2.msra.mxu0 0.0
    %2388 = vmatprep.subr.mxu0 0.0
    %2389 = vmatpush2.msra.mxu0 0.0
    %2390 = vmatprep.subr.mxu0 0.0
    %2391 = vmatpush2.msra.mxu0 0.0
    %2392 = vmatprep.subr.mxu0 0.0
    %2393 = vmatpush2.msra.mxu0 0.0
    %2394 = vmatprep.subr.mxu0 0.0
    %2395 = vmatpush2.msra.mxu0 0.0
    %2396 = vmatprep.subr.mxu0 0.0
    %2397 = vmatpush2.msra.mxu0 0.0
    %2398 = vmatprep.subr.mxu0 0.0
    %2399 = vmatpush2.msra.mxu0 0.0
    %2400 = vmatprep.subr.mxu0 0.0
    %2401 = vmatpush2.msra.mxu0 0.0
    %2402 = vmatprep.mubr.f32.mxu0 0.0
    %2403 = vmatmul.mubr.f32.gmra.mxu0 %v2336
    %v2404 = vpop.f32.mrf.mxu0
    %v2405 = vadd.f32 %v2332, %v2404
    %v2406 = vpop.f32.mrf.mxu0
    %2407 = vdwg.mxu0
    %v2408 = vadd.f32 %v2405, %v1938
    %v2409 = vxor.u32 %v2408, 2147483648
    %v2410 = vmul.f32 %v2409, 1.442695
    %v2411 = vpow.pop %v2410
    %v2412 = vadd.f32 %v2411, 1.0
    %v2413 = vrcp.pop %v2412
    %v2414 = vmul.f32 1.0, %v2413
    %v2415 = vtanh.pop %v2408
    %v2416 = vmul.f32 %v2414, %v1958
    %2418 = vrot.lane.b32.xlu0 %v2415, 64
    %v2419 = vpop.permute.xlu0 %2418
    %v2421 = vmul.f32 %v2414, %v2419
    %2423 = vrot.lane.b32.xlu0 %v2421, 32
    %v2424 = vpop.permute.xlu0 %2423
    %v2426 = vadd.f32 %v2416, %v2424
    %v2427 = vtanh.pop %v2426
    %2429 = vrot.lane.b32.xlu0 %v2427, 64
    %v2430 = vpop.permute.xlu0 %2429
    %v2432 = vmul.f32 %v2414, %v2430
    %v2435 = vunpack.c.l.s4 1966171168
    %v2436 = vunpack.c.0.s8 %v2435
    %v2437 = vlaneseq
    %v2438 = vshrl.u32 %v2437, 7
    %v2439 = vsub.s32 %v2436, %v2438
    %v2440 = vrot.slane %v2432, %v2439
    %v2441 = vcombine.high %v2440, %v2440
    %v2443 = vunpack.c.l.s4 1966171168
    %v2444 = vunpack.c.0.s8 %v2443
    %v2445 = vlaneseq
    %v2446 = vshrl.u32 %v2445, 7
    %v2447 = vsub.s32 %v2444, %v2446
    %v2448 = vrot.slane %v2440, %v2447
    %v2450 = vunpack.c.l.s4 1966171168
    %v2451 = vunpack.c.0.s8 %v2450
    %v2452 = vlaneseq
    %v2453 = vshrl.u32 %v2452, 7
    %v2454 = vsub.s32 %v2451, %v2453
    %v2455 = vrot.slane %v2441, %v2454
    %v2456 = vlaneseq
    %v2457 = vshrl.u32 %v2456, 7
    %v2458 = vsub.s32 0, %v2457
    %v2459 = vrot.slane %v2448, %v2458
    %v2460 = vlaneseq
    %v2461 = vshrl.u32 %v2460, 7
    %v2462 = vsub.s32 0, %v2461
    %v2463 = vrot.slane %v2455, %v2462
    %v2466 = vmul.f32 %v2459, %v2001
    %v2467 = vmul.f32 %v2463, %v2003
    %2470 = vrot.lane.b32.xlu0 %v2466, 32
    %v2471 = vpop.permute.xlu0 %2470
    %2472 = vrot.lane.b32.xlu0 %v2467, 32
    %v2473 = vpop.permute.xlu0 %2472
    %v2476 = vsel %vm68, %v2471, 0.0
    %2477 = vadd.xlane.f32.xlu0 %v2476
    %v2478 = vpop.xlane.xlu0 %2477
    %v2479 = vsel %vm68, %v2473, 0.0
    %2480 = vadd.xlane.f32.xlu0 %v2479
    %v2481 = vpop.xlane.xlu0 %2480
    %v2482 = vadd.f32 %v2478, %v2029
    %v2483 = vadd.f32 %v2481, %v2036
    %2486 = vset.pattern.permute.xlu0 0
    %2487 = vperm.xlu0 %2486, %v2482
    %v2488 = vpop.permute.xlu0 %2487
    %2489 = vset.pattern.permute.xlu0 0
    %2490 = vperm.xlu0 %2489, %v2483
    %v2491 = vpop.permute.xlu0 %2490
    %v2492 = vlaneseq
    %v2493 = vshrl.u32 %v2492, 7
    %v2494 = vsub.s32 %v1784, %v2493
    %v2495 = vrot.slane %v2488, %v2494
    %v2496 = vlaneseq
    %v2497 = vshrl.u32 %v2496, 7
    %v2498 = vsub.s32 %v1784, %v2497
    %v2499 = vrot.slane %v2491, %v2498
    %v2500 = vsel %vm2057, %v2499, %v2495
    %v2502 = vsel %vm2060, %v2500, -inf
    %2503 = vmax.xlane.f32.xlu0 %v2502
    %v2504 = vpop.xlane.xlu0 %2503
    %v2506 = vlaneseq
    %v2507 = vshrl.u32 %v2506, 7
    %v2508 = vsub.s32 0, %v2507
    %v2509 = vrot.slane %v2504, %v2508
    %v2510 = vlaneseq
    %v2511 = vshrl.u32 %v2510, 7
    %v2512 = vsub.s32 1, %v2511
    %v2513 = vrot.slane %v2504, %v2512
    %v2516 = vsub.f32 %v2482, %v2509
    %v2517 = vsub.f32 %v2483, %v2513
    %v2518 = vmul.f32 %v2516, 1.442695
    %v2519 = vpow.pop %v2518
    %v2520 = vmul.f32 %v2517, 1.442695
    %v2521 = vpow.pop %v2520
    %2524 = vset.pattern.permute.xlu0 0
    %2525 = vperm.xlu0 %2524, %v2519
    %v2526 = vpop.permute.xlu0 %2525
    %2527 = vset.pattern.permute.xlu0 0
    %2528 = vperm.xlu0 %2527, %v2521
    %v2529 = vpop.permute.xlu0 %2528
    %v2530 = vlaneseq
    %v2531 = vshrl.u32 %v2530, 7
    %v2532 = vsub.s32 %v1784, %v2531
    %v2533 = vrot.slane %v2526, %v2532
    %v2534 = vlaneseq
    %v2535 = vshrl.u32 %v2534, 7
    %v2536 = vsub.s32 %v1784, %v2535
    %v2537 = vrot.slane %v2529, %v2536
    %v2538 = vsel %vm2057, %v2537, %v2533
    %v2540 = vsel %vm2060, %v2538, 0.0
    %2541 = vadd.xlane.f32.xlu0 %v2540
    %v2542 = vpop.xlane.xlu0 %2541
    %v2543 = vrcp.pop %v2542
    %v2545 = vlaneseq
    %v2546 = vshrl.u32 %v2545, 7
    %v2547 = vsub.s32 0, %v2546
    %v2548 = vrot.slane %v2543, %v2547
    %v2549 = vlaneseq
    %v2550 = vshrl.u32 %v2549, 7
    %v2551 = vsub.s32 1, %v2550
    %v2552 = vrot.slane %v2543, %v2551
    %v2555 = vmul.f32 %v2519, %v2548
    %v2556 = vmul.f32 %v2521, %v2552
    %2558 = vset.pattern.permute.xlu0 0
    %2559 = vperm.xlu0 %2558, %v2555
    %v2560 = vpop.permute.xlu0 %2559
    %2563 = vset.pattern.permute.xlu0 0
    %2564 = vperm.xlu0 %2563, %v2556
    %v2565 = vpop.permute.xlu0 %2564
    %v2567 = vmul.f32 %v2560, %v1778
    %v2568 = vmul.f32 %v2565, %v1779
    %v2569 = vsel %vm68, %v2567, 0.0
    %v2570 = vrot.slane %v2569, 4
    %v2571 = vadd.f32 %v2569, %v2570
    %v2572 = vrot.slane %v2571, 2
    %v2573 = vadd.f32 %v2571, %v2572
    %v2574 = vrot.slane %v2573, 1
    %v2575 = vadd.f32 %v2573, %v2574
    %v2576 = vsel %vm68, %v2568, 0.0
    %v2577 = vrot.slane %v2576, 4
    %v2578 = vadd.f32 %v2576, %v2577
    %v2579 = vrot.slane %v2578, 2
    %v2580 = vadd.f32 %v2578, %v2579
    %v2581 = vrot.slane %v2580, 1
    %v2582 = vadd.f32 %v2580, %v2581
    %2583 = vrot.lane.b32.xlu0 %v2432, 32
    %v2584 = vpop.permute.xlu0 %2583
    %v2588 = vsel %vm2057, %v2582, %v2575
    %2589 = vrot.lane.b32.xlu0 %v2588, 32
    %v2590 = vpop.permute.xlu0 %2589
    %v2592 = vsel %vm68, %v2584, %v2590
    %v2594 = vsel %vm2158, %v2592, 0
    %2596 = vmatprep.subr.mxu0 0.0
    %2597 = vmatpush1.msra.mxu0 0.0
    %2598 = vmatprep.subr.mxu0 0.0
    %2599 = vmatpush1.msra.mxu0 0.0
    %2600 = vmatprep.subr.mxu0 0.0
    %2601 = vmatpush1.msra.mxu0 0.0
    %2602 = vmatprep.subr.mxu0 0.0
    %2603 = vmatpush1.msra.mxu0 0.0
    %2604 = vmatprep.subr.mxu0 0.0
    %2605 = vmatpush1.msra.mxu0 0.0
    %2606 = vmatprep.subr.mxu0 0.0
    %2607 = vmatpush1.msra.mxu0 0.0
    %2608 = vmatprep.subr.mxu0 0.0
    %2609 = vmatpush1.msra.mxu0 0.0
    %2610 = vmatprep.subr.mxu0 0.0
    %2611 = vmatpush1.msra.mxu0 0.0
    %2612 = vmatprep.subr.mxu0 0.0
    %2613 = vmatpush1.msra.mxu0 %v65
    %2614 = vmatprep.subr.mxu0 0.0
    %2615 = vmatpush1.msra.mxu0 %v64
    %2616 = vmatprep.subr.mxu0 0.0
    %2617 = vmatpush1.msra.mxu0 %v63
    %2618 = vmatprep.subr.mxu0 0.0
    %2619 = vmatpush1.msra.mxu0 %v62
    %2620 = vmatprep.subr.mxu0 0.0
    %2621 = vmatpush1.msra.mxu0 %v61
    %2622 = vmatprep.subr.mxu0 0.0
    %2623 = vmatpush1.msra.mxu0 %v60
    %2624 = vmatprep.subr.mxu0 0.0
    %2625 = vmatpush1.msra.mxu0 %v59
    %2626 = vmatprep.subr.mxu0 0.0
    %2627 = vmatpush1.msra.mxu0 %v58
    %2628 = vmatprep.subr.mxu0 0.0
    %2629 = vmatpush2.msra.mxu0 0.0
    %2630 = vmatprep.subr.mxu0 0.0
    %2631 = vmatpush2.msra.mxu0 0.0
    %2632 = vmatprep.subr.mxu0 0.0
    %2633 = vmatpush2.msra.mxu0 0.0
    %2634 = vmatprep.subr.mxu0 0.0
    %2635 = vmatpush2.msra.mxu0 0.0
    %2636 = vmatprep.subr.mxu0 0.0
    %2637 = vmatpush2.msra.mxu0 0.0
    %2638 = vmatprep.subr.mxu0 0.0
    %2639 = vmatpush2.msra.mxu0 0.0
    %2640 = vmatprep.subr.mxu0 0.0
    %2641 = vmatpush2.msra.mxu0 0.0
    %2642 = vmatprep.subr.mxu0 0.0
    %2643 = vmatpush2.msra.mxu0 0.0
    %2644 = vmatprep.subr.mxu0 0.0
    %2645 = vmatpush2.msra.mxu0 0.0
    %2646 = vmatprep.subr.mxu0 0.0
    %2647 = vmatpush2.msra.mxu0 0.0
    %2648 = vmatprep.subr.mxu0 0.0
    %2649 = vmatpush2.msra.mxu0 0.0
    %2650 = vmatprep.subr.mxu0 0.0
    %2651 = vmatpush2.msra.mxu0 0.0
    %2652 = vmatprep.subr.mxu0 0.0
    %2653 = vmatpush2.msra.mxu0 0.0
    %2654 = vmatprep.subr.mxu0 0.0
    %2655 = vmatpush2.msra.mxu0 0.0
    %2656 = vmatprep.subr.mxu0 0.0
    %2657 = vmatpush2.msra.mxu0 0.0
    %2658 = vmatprep.subr.mxu0 0.0
    %2659 = vmatpush2.msra.mxu0 0.0
    %2660 = vmatprep.mubr.f32.mxu0 0.0
    %2661 = vmatmul.mubr.f32.gmra.mxu0 %v2594
    %v2662 = vpop.f32.mrf.mxu0
    %v2663 = vadd.f32 %v2156, %v2662
    %v2664 = vpop.f32.mrf.mxu0
    %2665 = vdwg.mxu0
    %v2666 = vsel %vm2232, %v2663, -inf
    %2667 = vmax.xlane.f32.xlu0 %v2666
    %v2668 = vpop.xlane.xlu0 %2667
    %v2669 = vsub.f32 %v2663, %v2668
    %v2670 = vmul.f32 %v2669, 1.442695
    %v2671 = vpow.pop %v2670
    %v2672 = vsel %vm2232, %v2671, 0.0
    %2673 = vadd.xlane.f32.xlu0 %v2672
    %v2674 = vpop.xlane.xlu0 %2673
    %v2675 = vlog2.pop %v2674
    %v2676 = vmul.f32 %v2675, 0.6931472
    %v2677 = vsub.f32 %v2669, %v2676
    %2678 = vset.pattern.permute.xlu0 1
    %2679 = vperm.xlu0 %2678, %v1785
    %v2680 = vpop.permute.xlu0 %2679
    %vm2681 = vcmp.eq.s32.totalorder %v1784, %v2680
    %v2682 = vsel %vm2681, 1, 0
    %v2683 = vcvt.s32.f32 %v2682
    %v2684 = vmul.f32 %v2683, %v2677
    %v2685 = vsel %vm2232, %v2684, 0.0
    %2686 = vadd.xlane.f32.xlu0 %v2685
    %v2687 = vpop.xlane.xlu0 %2686
    %v2688 = vsub.f32 0.0, %v2687
    %v2689 = vmul.f32 %v2688, %v2258
    %2691 = vrot.lane.b32.xlu0 %v2689, 127
    %v2692 = vpop.permute.xlu0 %2691
    %v2694 = vadd.f32 %v2260, %v2692
    %s2695 = scalar_lea.vmem %s2, 4
    %v2696 = vld [vmem:[%s2695] sm:$0x3]
    %v2697 = vsel %vm68, %v2584, 0
    %2699 = vmatprep.subr.mxu0 0.0
    %2700 = vmatpush1.msra.mxu0 0.0
    %2701 = vmatprep.subr.mxu0 0.0
    %2702 = vmatpush1.msra.mxu0 0.0
    %2703 = vmatprep.subr.mxu0 0.0
    %2704 = vmatpush1.msra.mxu0 0.0
    %2705 = vmatprep.subr.mxu0 0.0
    %2706 = vmatpush1.msra.mxu0 0.0
    %2707 = vmatprep.subr.mxu0 0.0
    %2708 = vmatpush1.msra.mxu0 0.0
    %2709 = vmatprep.subr.mxu0 0.0
    %2710 = vmatpush1.msra.mxu0 0.0
    %2711 = vmatprep.subr.mxu0 0.0
    %2712 = vmatpush1.msra.mxu0 0.0
    %2713 = vmatprep.subr.mxu0 0.0
    %2714 = vmatpush1.msra.mxu0 0.0
    %2715 = vmatprep.subr.mxu0 0.0
    %2716 = vmatpush1.msra.mxu0 0.0
    %2717 = vmatprep.subr.mxu0 0.0
    %2718 = vmatpush1.msra.mxu0 0.0
    %2719 = vmatprep.subr.mxu0 0.0
    %2720 = vmatpush1.msra.mxu0 0.0
    %2721 = vmatprep.subr.mxu0 0.0
    %2722 = vmatpush1.msra.mxu0 0.0
    %2723 = vmatprep.subr.mxu0 0.0
    %2724 = vmatpush1.msra.mxu0 %v56
    %2725 = vmatprep.subr.mxu0 0.0
    %2726 = vmatpush1.msra.mxu0 %v55
    %2727 = vmatprep.subr.mxu0 0.0
    %2728 = vmatpush1.msra.mxu0 %v54
    %2729 = vmatprep.subr.mxu0 0.0
    %2730 = vmatpush1.msra.mxu0 %v53
    %2731 = vmatprep.subr.mxu0 0.0
    %2732 = vmatpush2.msra.mxu0 0.0
    %2733 = vmatprep.subr.mxu0 0.0
    %2734 = vmatpush2.msra.mxu0 0.0
    %2735 = vmatprep.subr.mxu0 0.0
    %2736 = vmatpush2.msra.mxu0 0.0
    %2737 = vmatprep.subr.mxu0 0.0
    %2738 = vmatpush2.msra.mxu0 0.0
    %2739 = vmatprep.subr.mxu0 0.0
    %2740 = vmatpush2.msra.mxu0 0.0
    %2741 = vmatprep.subr.mxu0 0.0
    %2742 = vmatpush2.msra.mxu0 0.0
    %2743 = vmatprep.subr.mxu0 0.0
    %2744 = vmatpush2.msra.mxu0 0.0
    %2745 = vmatprep.subr.mxu0 0.0
    %2746 = vmatpush2.msra.mxu0 0.0
    %2747 = vmatprep.subr.mxu0 0.0
    %2748 = vmatpush2.msra.mxu0 0.0
    %2749 = vmatprep.subr.mxu0 0.0
    %2750 = vmatpush2.msra.mxu0 0.0
    %2751 = vmatprep.subr.mxu0 0.0
    %2752 = vmatpush2.msra.mxu0 0.0
    %2753 = vmatprep.subr.mxu0 0.0
    %2754 = vmatpush2.msra.mxu0 0.0
    %2755 = vmatprep.subr.mxu0 0.0
    %2756 = vmatpush2.msra.mxu0 0.0
    %2757 = vmatprep.subr.mxu0 0.0
    %2758 = vmatpush2.msra.mxu0 0.0
    %2759 = vmatprep.subr.mxu0 0.0
    %2760 = vmatpush2.msra.mxu0 0.0
    %2761 = vmatprep.subr.mxu0 0.0
    %2762 = vmatpush2.msra.mxu0 0.0
    %2763 = vmatprep.mubr.f32.mxu0 0.0
    %2764 = vmatmul.mubr.f32.gmra.mxu0 %v2697
    %v2765 = vpop.f32.mrf.mxu0
    %v2766 = vadd.f32 0.0, %v2765
    %v2767 = vpop.f32.mrf.mxu0
    %2768 = vdwg.mxu0
    %v2770 = vsel %vm142, %v2696, 0
    %2772 = vmatprep.subr.mxu0 0.0
    %2773 = vmatpush1.msra.mxu0 0.0
    %2774 = vmatprep.subr.mxu0 0.0
    %2775 = vmatpush1.msra.mxu0 0.0
    %2776 = vmatprep.subr.mxu0 0.0
    %2777 = vmatpush1.msra.mxu0 0.0
    %2778 = vmatprep.subr.mxu0 0.0
    %2779 = vmatpush1.msra.mxu0 0.0
    %2780 = vmatprep.subr.mxu0 0.0
    %2781 = vmatpush1.msra.mxu0 0.0
    %2782 = vmatprep.subr.mxu0 0.0
    %2783 = vmatpush1.msra.mxu0 0.0
    %2784 = vmatprep.subr.mxu0 0.0
    %2785 = vmatpush1.msra.mxu0 0.0
    %2786 = vmatprep.subr.mxu0 0.0
    %2787 = vmatpush1.msra.mxu0 0.0
    %2788 = vmatprep.subr.mxu0 0.0
    %2789 = vmatpush1.msra.mxu0 0.0
    %2790 = vmatprep.subr.mxu0 0.0
    %2791 = vmatpush1.msra.mxu0 0.0
    %2792 = vmatprep.subr.mxu0 0.0
    %2793 = vmatpush1.msra.mxu0 0.0
    %2794 = vmatprep.subr.mxu0 0.0
    %2795 = vmatpush1.msra.mxu0 0.0
    %2796 = vmatprep.subr.mxu0 0.0
    %2797 = vmatpush1.msra.mxu0 0.0
    %2798 = vmatprep.subr.mxu0 0.0
    %2799 = vmatpush1.msra.mxu0 0.0
    %2800 = vmatprep.subr.mxu0 0.0
    %2801 = vmatpush1.msra.mxu0 %v52
    %2802 = vmatprep.subr.mxu0 0.0
    %2803 = vmatpush1.msra.mxu0 %v51
    %2804 = vmatprep.subr.mxu0 0.0
    %2805 = vmatpush2.msra.mxu0 0.0
    %2806 = vmatprep.subr.mxu0 0.0
    %2807 = vmatpush2.msra.mxu0 0.0
    %2808 = vmatprep.subr.mxu0 0.0
    %2809 = vmatpush2.msra.mxu0 0.0
    %2810 = vmatprep.subr.mxu0 0.0
    %2811 = vmatpush2.msra.mxu0 0.0
    %2812 = vmatprep.subr.mxu0 0.0
    %2813 = vmatpush2.msra.mxu0 0.0
    %2814 = vmatprep.subr.mxu0 0.0
    %2815 = vmatpush2.msra.mxu0 0.0
    %2816 = vmatprep.subr.mxu0 0.0
    %2817 = vmatpush2.msra.mxu0 0.0
    %2818 = vmatprep.subr.mxu0 0.0
    %2819 = vmatpush2.msra.mxu0 0.0
    %2820 = vmatprep.subr.mxu0 0.0
    %2821 = vmatpush2.msra.mxu0 0.0
    %2822 = vmatprep.subr.mxu0 0.0
    %2823 = vmatpush2.msra.mxu0 0.0
    %2824 = vmatprep.subr.mxu0 0.0
    %2825 = vmatpush2.msra.mxu0 0.0
    %2826 = vmatprep.subr.mxu0 0.0
    %2827 = vmatpush2.msra.mxu0 0.0
    %2828 = vmatprep.subr.mxu0 0.0
    %2829 = vmatpush2.msra.mxu0 0.0
    %2830 = vmatprep.subr.mxu0 0.0
    %2831 = vmatpush2.msra.mxu0 0.0
    %2832 = vmatprep.subr.mxu0 0.0
    %2833 = vmatpush2.msra.mxu0 0.0
    %2834 = vmatprep.subr.mxu0 0.0
    %2835 = vmatpush2.msra.mxu0 0.0
    %2836 = vmatprep.mubr.f32.mxu0 0.0
    %2837 = vmatmul.mubr.f32.gmra.mxu0 %v2770
    %v2838 = vpop.f32.mrf.mxu0
    %v2839 = vadd.f32 %v2766, %v2838
    %v2840 = vpop.f32.mrf.mxu0
    %2841 = vdwg.mxu0
    %v2842 = vadd.f32 %v2839, %v1938
    %v2843 = vxor.u32 %v2842, 2147483648
    %v2844 = vmul.f32 %v2843, 1.442695
    %v2845 = vpow.pop %v2844
    %v2846 = vadd.f32 %v2845, 1.0
    %v2847 = vrcp.pop %v2846
    %v2848 = vmul.f32 1.0, %v2847
    %v2849 = vtanh.pop %v2842
    %v2850 = vmul.f32 %v2848, %v2426
    %2852 = vrot.lane.b32.xlu0 %v2849, 64
    %v2853 = vpop.permute.xlu0 %2852
    %v2855 = vmul.f32 %v2848, %v2853
    %2857 = vrot.lane.b32.xlu0 %v2855, 32
    %v2858 = vpop.permute.xlu0 %2857
    %v2860 = vadd.f32 %v2850, %v2858
    %v2861 = vtanh.pop %v2860
    %2863 = vrot.lane.b32.xlu0 %v2861, 64
    %v2864 = vpop.permute.xlu0 %2863
    %v2866 = vmul.f32 %v2848, %v2864
    %v2869 = vunpack.c.l.s4 1966171168
    %v2870 = vunpack.c.0.s8 %v2869
    %v2871 = vlaneseq
    %v2872 = vshrl.u32 %v2871, 7
    %v2873 = vsub.s32 %v2870, %v2872
    %v2874 = vrot.slane %v2866, %v2873
    %v2875 = vcombine.high %v2874, %v2874
    %v2877 = vunpack.c.l.s4 1966171168
    %v2878 = vunpack.c.0.s8 %v2877
    %v2879 = vlaneseq
    %v2880 = vshrl.u32 %v2879, 7
    %v2881 = vsub.s32 %v2878, %v2880
    %v2882 = vrot.slane %v2874, %v2881
    %v2884 = vunpack.c.l.s4 1966171168
    %v2885 = vunpack.c.0.s8 %v2884
    %v2886 = vlaneseq
    %v2887 = vshrl.u32 %v2886, 7
    %v2888 = vsub.s32 %v2885, %v2887
    %v2889 = vrot.slane %v2875, %v2888
    %v2890 = vlaneseq
    %v2891 = vshrl.u32 %v2890, 7
    %v2892 = vsub.s32 0, %v2891
    %v2893 = vrot.slane %v2882, %v2892
    %v2894 = vlaneseq
    %v2895 = vshrl.u32 %v2894, 7
    %v2896 = vsub.s32 0, %v2895
    %v2897 = vrot.slane %v2889, %v2896
    %v2900 = vmul.f32 %v2893, %v2001
    %v2901 = vmul.f32 %v2897, %v2003
    %2904 = vrot.lane.b32.xlu0 %v2900, 32
    %v2905 = vpop.permute.xlu0 %2904
    %2906 = vrot.lane.b32.xlu0 %v2901, 32
    %v2907 = vpop.permute.xlu0 %2906
    %v2910 = vsel %vm68, %v2905, 0.0
    %2911 = vadd.xlane.f32.xlu0 %v2910
    %v2912 = vpop.xlane.xlu0 %2911
    %v2913 = vsel %vm68, %v2907, 0.0
    %2914 = vadd.xlane.f32.xlu0 %v2913
    %v2915 = vpop.xlane.xlu0 %2914
    %v2916 = vadd.f32 %v2912, %v2029
    %v2917 = vadd.f32 %v2915, %v2036
    %2920 = vset.pattern.permute.xlu0 0
    %2921 = vperm.xlu0 %2920, %v2916
    %v2922 = vpop.permute.xlu0 %2921
    %2923 = vset.pattern.permute.xlu0 0
    %2924 = vperm.xlu0 %2923, %v2917
    %v2925 = vpop.permute.xlu0 %2924
    %v2926 = vlaneseq
    %v2927 = vshrl.u32 %v2926, 7
    %v2928 = vsub.s32 %v1784, %v2927
    %v2929 = vrot.slane %v2922, %v2928
    %v2930 = vlaneseq
    %v2931 = vshrl.u32 %v2930, 7
    %v2932 = vsub.s32 %v1784, %v2931
    %v2933 = vrot.slane %v2925, %v2932
    %v2934 = vsel %vm2057, %v2933, %v2929
    %v2936 = vsel %vm2060, %v2934, -inf
    %2937 = vmax.xlane.f32.xlu0 %v2936
    %v2938 = vpop.xlane.xlu0 %2937
    %v2940 = vlaneseq
    %v2941 = vshrl.u32 %v2940, 7
    %v2942 = vsub.s32 0, %v2941
    %v2943 = vrot.slane %v2938, %v2942
    %v2944 = vlaneseq
    %v2945 = vshrl.u32 %v2944, 7
    %v2946 = vsub.s32 1, %v2945
    %v2947 = vrot.slane %v2938, %v2946
    %v2950 = vsub.f32 %v2916, %v2943
    %v2951 = vsub.f32 %v2917, %v2947
    %v2952 = vmul.f32 %v2950, 1.442695
    %v2953 = vpow.pop %v2952
    %v2954 = vmul.f32 %v2951, 1.442695
    %v2955 = vpow.pop %v2954
    %2958 = vset.pattern.permute.xlu0 0
    %2959 = vperm.xlu0 %2958, %v2953
    %v2960 = vpop.permute.xlu0 %2959
    %2961 = vset.pattern.permute.xlu0 0
    %2962 = vperm.xlu0 %2961, %v2955
    %v2963 = vpop.permute.xlu0 %2962
    %v2964 = vlaneseq
    %v2965 = vshrl.u32 %v2964, 7
    %v2966 = vsub.s32 %v1784, %v2965
    %v2967 = vrot.slane %v2960, %v2966
    %v2968 = vlaneseq
    %v2969 = vshrl.u32 %v2968, 7
    %v2970 = vsub.s32 %v1784, %v2969
    %v2971 = vrot.slane %v2963, %v2970
    %v2972 = vsel %vm2057, %v2971, %v2967
    %v2974 = vsel %vm2060, %v2972, 0.0
    %2975 = vadd.xlane.f32.xlu0 %v2974
    %v2976 = vpop.xlane.xlu0 %2975
    %v2977 = vrcp.pop %v2976
    %v2979 = vlaneseq
    %v2980 = vshrl.u32 %v2979, 7
    %v2981 = vsub.s32 0, %v2980
    %v2982 = vrot.slane %v2977, %v2981
    %v2983 = vlaneseq
    %v2984 = vshrl.u32 %v2983, 7
    %v2985 = vsub.s32 1, %v2984
    %v2986 = vrot.slane %v2977, %v2985
    %v2989 = vmul.f32 %v2953, %v2982
    %v2990 = vmul.f32 %v2955, %v2986
    %2992 = vset.pattern.permute.xlu0 0
    %2993 = vperm.xlu0 %2992, %v2989
    %v2994 = vpop.permute.xlu0 %2993
    %2997 = vset.pattern.permute.xlu0 0
    %2998 = vperm.xlu0 %2997, %v2990
    %v2999 = vpop.permute.xlu0 %2998
    %v3001 = vmul.f32 %v2994, %v1778
    %v3002 = vmul.f32 %v2999, %v1779
    %v3003 = vsel %vm68, %v3001, 0.0
    %v3004 = vrot.slane %v3003, 4
    %v3005 = vadd.f32 %v3003, %v3004
    %v3006 = vrot.slane %v3005, 2
    %v3007 = vadd.f32 %v3005, %v3006
    %v3008 = vrot.slane %v3007, 1
    %v3009 = vadd.f32 %v3007, %v3008
    %v3010 = vsel %vm68, %v3002, 0.0
    %v3011 = vrot.slane %v3010, 4
    %v3012 = vadd.f32 %v3010, %v3011
    %v3013 = vrot.slane %v3012, 2
    %v3014 = vadd.f32 %v3012, %v3013
    %v3015 = vrot.slane %v3014, 1
    %v3016 = vadd.f32 %v3014, %v3015
    %3017 = vrot.lane.b32.xlu0 %v2866, 32
    %v3018 = vpop.permute.xlu0 %3017
    %v3022 = vsel %vm2057, %v3016, %v3009
    %3023 = vrot.lane.b32.xlu0 %v3022, 32
    %v3024 = vpop.permute.xlu0 %3023
    %v3026 = vsel %vm68, %v3018, %v3024
    %v3028 = vsel %vm2158, %v3026, 0
    %3030 = vmatprep.subr.mxu0 0.0
    %3031 = vmatpush1.msra.mxu0 0.0
    %3032 = vmatprep.subr.mxu0 0.0
    %3033 = vmatpush1.msra.mxu0 0.0
    %3034 = vmatprep.subr.mxu0 0.0
    %3035 = vmatpush1.msra.mxu0 0.0
    %3036 = vmatprep.subr.mxu0 0.0
    %3037 = vmatpush1.msra.mxu0 0.0
    %3038 = vmatprep.subr.mxu0 0.0
    %3039 = vmatpush1.msra.mxu0 0.0
    %3040 = vmatprep.subr.mxu0 0.0
    %3041 = vmatpush1.msra.mxu0 0.0
    %3042 = vmatprep.subr.mxu0 0.0
    %3043 = vmatpush1.msra.mxu0 0.0
    %3044 = vmatprep.subr.mxu0 0.0
    %3045 = vmatpush1.msra.mxu0 0.0
    %3046 = vmatprep.subr.mxu0 0.0
    %3047 = vmatpush1.msra.mxu0 %v65
    %3048 = vmatprep.subr.mxu0 0.0
    %3049 = vmatpush1.msra.mxu0 %v64
    %3050 = vmatprep.subr.mxu0 0.0
    %3051 = vmatpush1.msra.mxu0 %v63
    %3052 = vmatprep.subr.mxu0 0.0
    %3053 = vmatpush1.msra.mxu0 %v62
    %3054 = vmatprep.subr.mxu0 0.0
    %3055 = vmatpush1.msra.mxu0 %v61
    %3056 = vmatprep.subr.mxu0 0.0
    %3057 = vmatpush1.msra.mxu0 %v60
    %3058 = vmatprep.subr.mxu0 0.0
    %3059 = vmatpush1.msra.mxu0 %v59
    %3060 = vmatprep.subr.mxu0 0.0
    %3061 = vmatpush1.msra.mxu0 %v58
    %3062 = vmatprep.subr.mxu0 0.0
    %3063 = vmatpush2.msra.mxu0 0.0
    %3064 = vmatprep.subr.mxu0 0.0
    %3065 = vmatpush2.msra.mxu0 0.0
    %3066 = vmatprep.subr.mxu0 0.0
    %3067 = vmatpush2.msra.mxu0 0.0
    %3068 = vmatprep.subr.mxu0 0.0
    %3069 = vmatpush2.msra.mxu0 0.0
    %3070 = vmatprep.subr.mxu0 0.0
    %3071 = vmatpush2.msra.mxu0 0.0
    %3072 = vmatprep.subr.mxu0 0.0
    %3073 = vmatpush2.msra.mxu0 0.0
    %3074 = vmatprep.subr.mxu0 0.0
    %3075 = vmatpush2.msra.mxu0 0.0
    %3076 = vmatprep.subr.mxu0 0.0
    %3077 = vmatpush2.msra.mxu0 0.0
    %3078 = vmatprep.subr.mxu0 0.0
    %3079 = vmatpush2.msra.mxu0 0.0
    %3080 = vmatprep.subr.mxu0 0.0
    %3081 = vmatpush2.msra.mxu0 0.0
    %3082 = vmatprep.subr.mxu0 0.0
    %3083 = vmatpush2.msra.mxu0 0.0
    %3084 = vmatprep.subr.mxu0 0.0
    %3085 = vmatpush2.msra.mxu0 0.0
    %3086 = vmatprep.subr.mxu0 0.0
    %3087 = vmatpush2.msra.mxu0 0.0
    %3088 = vmatprep.subr.mxu0 0.0
    %3089 = vmatpush2.msra.mxu0 0.0
    %3090 = vmatprep.subr.mxu0 0.0
    %3091 = vmatpush2.msra.mxu0 0.0
    %3092 = vmatprep.subr.mxu0 0.0
    %3093 = vmatpush2.msra.mxu0 0.0
    %3094 = vmatprep.mubr.f32.mxu0 0.0
    %3095 = vmatmul.mubr.f32.gmra.mxu0 %v3028
    %v3096 = vpop.f32.mrf.mxu0
    %v3097 = vadd.f32 %v2156, %v3096
    %v3098 = vpop.f32.mrf.mxu0
    %3099 = vdwg.mxu0
    %v3100 = vsel %vm2232, %v3097, -inf
    %3101 = vmax.xlane.f32.xlu0 %v3100
    %v3102 = vpop.xlane.xlu0 %3101
    %v3103 = vsub.f32 %v3097, %v3102
    %v3104 = vmul.f32 %v3103, 1.442695
    %v3105 = vpow.pop %v3104
    %v3106 = vsel %vm2232, %v3105, 0.0
    %3107 = vadd.xlane.f32.xlu0 %v3106
    %v3108 = vpop.xlane.xlu0 %3107
    %v3109 = vlog2.pop %v3108
    %v3110 = vmul.f32 %v3109, 0.6931472
    %v3111 = vsub.f32 %v3103, %v3110
    %3112 = vset.pattern.permute.xlu0 2
    %3113 = vperm.xlu0 %3112, %v1785
    %v3114 = vpop.permute.xlu0 %3113
    %vm3115 = vcmp.eq.s32.totalorder %v1784, %v3114
    %v3116 = vsel %vm3115, 1, 0
    %v3117 = vcvt.s32.f32 %v3116
    %v3118 = vmul.f32 %v3117, %v3111
    %v3119 = vsel %vm2232, %v3118, 0.0
    %3120 = vadd.xlane.f32.xlu0 %v3119
    %v3121 = vpop.xlane.xlu0 %3120
    %v3122 = vsub.f32 0.0, %v3121
    %v3123 = vmul.f32 %v3122, %v2258
    %3125 = vrot.lane.b32.xlu0 %v3123, 126
    %v3126 = vpop.permute.xlu0 %3125
    %v3128 = vadd.f32 %v2694, %v3126
    %s3129 = scalar_lea.vmem %s2, 6
    %v3130 = vld [vmem:[%s3129] sm:$0x3]
    %v3131 = vsel %vm68, %v3018, 0
    %3133 = vmatprep.subr.mxu0 0.0
    %3134 = vmatpush1.msra.mxu0 0.0
    %3135 = vmatprep.subr.mxu0 0.0
    %3136 = vmatpush1.msra.mxu0 0.0
    %3137 = vmatprep.subr.mxu0 0.0
    %3138 = vmatpush1.msra.mxu0 0.0
    %3139 = vmatprep.subr.mxu0 0.0
    %3140 = vmatpush1.msra.mxu0 0.0
    %3141 = vmatprep.subr.mxu0 0.0
    %3142 = vmatpush1.msra.mxu0 0.0
    %3143 = vmatprep.subr.mxu0 0.0
    %3144 = vmatpush1.msra.mxu0 0.0
    %3145 = vmatprep.subr.mxu0 0.0
    %3146 = vmatpush1.msra.mxu0 0.0
    %3147 = vmatprep.subr.mxu0 0.0
    %3148 = vmatpush1.msra.mxu0 0.0
    %3149 = vmatprep.subr.mxu0 0.0
    %3150 = vmatpush1.msra.mxu0 0.0
    %3151 = vmatprep.subr.mxu0 0.0
    %3152 = vmatpush1.msra.mxu0 0.0
    %3153 = vmatprep.subr.mxu0 0.0
    %3154 = vmatpush1.msra.mxu0 0.0
    %3155 = vmatprep.subr.mxu0 0.0
    %3156 = vmatpush1.msra.mxu0 0.0
    %3157 = vmatprep.subr.mxu0 0.0
    %3158 = vmatpush1.msra.mxu0 %v56
    %3159 = vmatprep.subr.mxu0 0.0
    %3160 = vmatpush1.msra.mxu0 %v55
    %3161 = vmatprep.subr.mxu0 0.0
    %3162 = vmatpush1.msra.mxu0 %v54
    %3163 = vmatprep.subr.mxu0 0.0
    %3164 = vmatpush1.msra.mxu0 %v53
    %3165 = vmatprep.subr.mxu0 0.0
    %3166 = vmatpush2.msra.mxu0 0.0
    %3167 = vmatprep.subr.mxu0 0.0
    %3168 = vmatpush2.msra.mxu0 0.0
    %3169 = vmatprep.subr.mxu0 0.0
    %3170 = vmatpush2.msra.mxu0 0.0
    %3171 = vmatprep.subr.mxu0 0.0
    %3172 = vmatpush2.msra.mxu0 0.0
    %3173 = vmatprep.subr.mxu0 0.0
    %3174 = vmatpush2.msra.mxu0 0.0
    %3175 = vmatprep.subr.mxu0 0.0
    %3176 = vmatpush2.msra.mxu0 0.0
    %3177 = vmatprep.subr.mxu0 0.0
    %3178 = vmatpush2.msra.mxu0 0.0
    %3179 = vmatprep.subr.mxu0 0.0
    %3180 = vmatpush2.msra.mxu0 0.0
    %3181 = vmatprep.subr.mxu0 0.0
    %3182 = vmatpush2.msra.mxu0 0.0
    %3183 = vmatprep.subr.mxu0 0.0
    %3184 = vmatpush2.msra.mxu0 0.0
    %3185 = vmatprep.subr.mxu0 0.0
    %3186 = vmatpush2.msra.mxu0 0.0
    %3187 = vmatprep.subr.mxu0 0.0
    %3188 = vmatpush2.msra.mxu0 0.0
    %3189 = vmatprep.subr.mxu0 0.0
    %3190 = vmatpush2.msra.mxu0 0.0
    %3191 = vmatprep.subr.mxu0 0.0
    %3192 = vmatpush2.msra.mxu0 0.0
    %3193 = vmatprep.subr.mxu0 0.0
    %3194 = vmatpush2.msra.mxu0 0.0
    %3195 = vmatprep.subr.mxu0 0.0
    %3196 = vmatpush2.msra.mxu0 0.0
    %3197 = vmatprep.mubr.f32.mxu0 0.0
    %3198 = vmatmul.mubr.f32.gmra.mxu0 %v3131
    %v3199 = vpop.f32.mrf.mxu0
    %v3200 = vadd.f32 0.0, %v3199
    %v3201 = vpop.f32.mrf.mxu0
    %3202 = vdwg.mxu0
    %v3204 = vsel %vm142, %v3130, 0
    %3206 = vmatprep.subr.mxu0 0.0
    %3207 = vmatpush1.msra.mxu0 0.0
    %3208 = vmatprep.subr.mxu0 0.0
    %3209 = vmatpush1.msra.mxu0 0.0
    %3210 = vmatprep.subr.mxu0 0.0
    %3211 = vmatpush1.msra.mxu0 0.0
    %3212 = vmatprep.subr.mxu0 0.0
    %3213 = vmatpush1.msra.mxu0 0.0
    %3214 = vmatprep.subr.mxu0 0.0
    %3215 = vmatpush1.msra.mxu0 0.0
    %3216 = vmatprep.subr.mxu0 0.0
    %3217 = vmatpush1.msra.mxu0 0.0
    %3218 = vmatprep.subr.mxu0 0.0
    %3219 = vmatpush1.msra.mxu0 0.0
    %3220 = vmatprep.subr.mxu0 0.0
    %3221 = vmatpush1.msra.mxu0 0.0
    %3222 = vmatprep.subr.mxu0 0.0
    %3223 = vmatpush1.msra.mxu0 0.0
    %3224 = vmatprep.subr.mxu0 0.0
    %3225 = vmatpush1.msra.mxu0 0.0
    %3226 = vmatprep.subr.mxu0 0.0
    %3227 = vmatpush1.msra.mxu0 0.0
    %3228 = vmatprep.subr.mxu0 0.0
    %3229 = vmatpush1.msra.mxu0 0.0
    %3230 = vmatprep.subr.mxu0 0.0
    %3231 = vmatpush1.msra.mxu0 0.0
    %3232 = vmatprep.subr.mxu0 0.0
    %3233 = vmatpush1.msra.mxu0 0.0
    %3234 = vmatprep.subr.mxu0 0.0
    %3235 = vmatpush1.msra.mxu0 %v52
    %3236 = vmatprep.subr.mxu0 0.0
    %3237 = vmatpush1.msra.mxu0 %v51
    %3238 = vmatprep.subr.mxu0 0.0
    %3239 = vmatpush2.msra.mxu0 0.0
    %3240 = vmatprep.subr.mxu0 0.0
    %3241 = vmatpush2.msra.mxu0 0.0
    %3242 = vmatprep.subr.mxu0 0.0
    %3243 = vmatpush2.msra.mxu0 0.0
    %3244 = vmatprep.subr.mxu0 0.0
    %3245 = vmatpush2.msra.mxu0 0.0
    %3246 = vmatprep.subr.mxu0 0.0
    %3247 = vmatpush2.msra.mxu0 0.0
    %3248 = vmatprep.subr.mxu0 0.0
    %3249 = vmatpush2.msra.mxu0 0.0
    %3250 = vmatprep.subr.mxu0 0.0
    %3251 = vmatpush2.msra.mxu0 0.0
    %3252 = vmatprep.subr.mxu0 0.0
    %3253 = vmatpush2.msra.mxu0 0.0
    %3254 = vmatprep.subr.mxu0 0.0
    %3255 = vmatpush2.msra.mxu0 0.0
    %3256 = vmatprep.subr.mxu0 0.0
    %3257 = vmatpush2.msra.mxu0 0.0
    %3258 = vmatprep.subr.mxu0 0.0
    %3259 = vmatpush2.msra.mxu0 0.0
    %3260 = vmatprep.subr.mxu0 0.0
    %3261 = vmatpush2.msra.mxu0 0.0
    %3262 = vmatprep.subr.mxu0 0.0
    %3263 = vmatpush2.msra.mxu0 0.0
    %3264 = vmatprep.subr.mxu0 0.0
    %3265 = vmatpush2.msra.mxu0 0.0
    %3266 = vmatprep.subr.mxu0 0.0
    %3267 = vmatpush2.msra.mxu0 0.0
    %3268 = vmatprep.subr.mxu0 0.0
    %3269 = vmatpush2.msra.mxu0 0.0
    %3270 = vmatprep.mubr.f32.mxu0 0.0
    %3271 = vmatmul.mubr.f32.gmra.mxu0 %v3204
    %v3272 = vpop.f32.mrf.mxu0
    %v3273 = vadd.f32 %v3200, %v3272
    %v3274 = vpop.f32.mrf.mxu0
    %3275 = vdwg.mxu0
    %v3276 = vadd.f32 %v3273, %v1938
    %v3277 = vxor.u32 %v3276, 2147483648
    %v3278 = vmul.f32 %v3277, 1.442695
    %v3279 = vpow.pop %v3278
    %v3280 = vadd.f32 %v3279, 1.0
    %v3281 = vrcp.pop %v3280
    %v3282 = vmul.f32 1.0, %v3281
    %v3283 = vtanh.pop %v3276
    %v3284 = vmul.f32 %v3282, %v2860
    %3286 = vrot.lane.b32.xlu0 %v3283, 64
    %v3287 = vpop.permute.xlu0 %3286
    %v3289 = vmul.f32 %v3282, %v3287
    %3291 = vrot.lane.b32.xlu0 %v3289, 32
    %v3292 = vpop.permute.xlu0 %3291
    %v3294 = vadd.f32 %v3284, %v3292
    %v3295 = vtanh.pop %v3294
    %3297 = vrot.lane.b32.xlu0 %v3295, 64
    %v3298 = vpop.permute.xlu0 %3297
    %v3300 = vmul.f32 %v3282, %v3298
    %v3303 = vunpack.c.l.s4 1966171168
    %v3304 = vunpack.c.0.s8 %v3303
    %v3305 = vlaneseq
    %v3306 = vshrl.u32 %v3305, 7
    %v3307 = vsub.s32 %v3304, %v3306
    %v3308 = vrot.slane %v3300, %v3307
    %v3309 = vcombine.high %v3308, %v3308
    %v3311 = vunpack.c.l.s4 1966171168
    %v3312 = vunpack.c.0.s8 %v3311
    %v3313 = vlaneseq
    %v3314 = vshrl.u32 %v3313, 7
    %v3315 = vsub.s32 %v3312, %v3314
    %v3316 = vrot.slane %v3308, %v3315
    %v3318 = vunpack.c.l.s4 1966171168
    %v3319 = vunpack.c.0.s8 %v3318
    %v3320 = vlaneseq
    %v3321 = vshrl.u32 %v3320, 7
    %v3322 = vsub.s32 %v3319, %v3321
    %v3323 = vrot.slane %v3309, %v3322
    %v3324 = vlaneseq
    %v3325 = vshrl.u32 %v3324, 7
    %v3326 = vsub.s32 0, %v3325
    %v3327 = vrot.slane %v3316, %v3326
    %v3328 = vlaneseq
    %v3329 = vshrl.u32 %v3328, 7
    %v3330 = vsub.s32 0, %v3329
    %v3331 = vrot.slane %v3323, %v3330
    %v3334 = vmul.f32 %v3327, %v2001
    %v3335 = vmul.f32 %v3331, %v2003
    %3338 = vrot.lane.b32.xlu0 %v3334, 32
    %v3339 = vpop.permute.xlu0 %3338
    %3340 = vrot.lane.b32.xlu0 %v3335, 32
    %v3341 = vpop.permute.xlu0 %3340
    %v3344 = vsel %vm68, %v3339, 0.0
    %3345 = vadd.xlane.f32.xlu0 %v3344
    %v3346 = vpop.xlane.xlu0 %3345
    %v3347 = vsel %vm68, %v3341, 0.0
    %3348 = vadd.xlane.f32.xlu0 %v3347
    %v3349 = vpop.xlane.xlu0 %3348
    %v3350 = vadd.f32 %v3346, %v2029
    %v3351 = vadd.f32 %v3349, %v2036
    %3354 = vset.pattern.permute.xlu0 0
    %3355 = vperm.xlu0 %3354, %v3350
    %v3356 = vpop.permute.xlu0 %3355
    %3357 = vset.pattern.permute.xlu0 0
    %3358 = vperm.xlu0 %3357, %v3351
    %v3359 = vpop.permute.xlu0 %3358
    %v3360 = vlaneseq
    %v3361 = vshrl.u32 %v3360, 7
    %v3362 = vsub.s32 %v1784, %v3361
    %v3363 = vrot.slane %v3356, %v3362
    %v3364 = vlaneseq
    %v3365 = vshrl.u32 %v3364, 7
    %v3366 = vsub.s32 %v1784, %v3365
    %v3367 = vrot.slane %v3359, %v3366
    %v3368 = vsel %vm2057, %v3367, %v3363
    %v3370 = vsel %vm2060, %v3368, -inf
    %3371 = vmax.xlane.f32.xlu0 %v3370
    %v3372 = vpop.xlane.xlu0 %3371
    %v3374 = vlaneseq
    %v3375 = vshrl.u32 %v3374, 7
    %v3376 = vsub.s32 0, %v3375
    %v3377 = vrot.slane %v3372, %v3376
    %v3378 = vlaneseq
    %v3379 = vshrl.u32 %v3378, 7
    %v3380 = vsub.s32 1, %v3379
    %v3381 = vrot.slane %v3372, %v3380
    %v3384 = vsub.f32 %v3350, %v3377
    %v3385 = vsub.f32 %v3351, %v3381
    %v3386 = vmul.f32 %v3384, 1.442695
    %v3387 = vpow.pop %v3386
    %v3388 = vmul.f32 %v3385, 1.442695
    %v3389 = vpow.pop %v3388
    %3392 = vset.pattern.permute.xlu0 0
    %3393 = vperm.xlu0 %3392, %v3387
    %v3394 = vpop.permute.xlu0 %3393
    %3395 = vset.pattern.permute.xlu0 0
    %3396 = vperm.xlu0 %3395, %v3389
    %v3397 = vpop.permute.xlu0 %3396
    %v3398 = vlaneseq
    %v3399 = vshrl.u32 %v3398, 7
    %v3400 = vsub.s32 %v1784, %v3399
    %v3401 = vrot.slane %v3394, %v3400
    %v3402 = vlaneseq
    %v3403 = vshrl.u32 %v3402, 7
    %v3404 = vsub.s32 %v1784, %v3403
    %v3405 = vrot.slane %v3397, %v3404
    %v3406 = vsel %vm2057, %v3405, %v3401
    %v3408 = vsel %vm2060, %v3406, 0.0
    %3409 = vadd.xlane.f32.xlu0 %v3408
    %v3410 = vpop.xlane.xlu0 %3409
    %v3411 = vrcp.pop %v3410
    %v3413 = vlaneseq
    %v3414 = vshrl.u32 %v3413, 7
    %v3415 = vsub.s32 0, %v3414
    %v3416 = vrot.slane %v3411, %v3415
    %v3417 = vlaneseq
    %v3418 = vshrl.u32 %v3417, 7
    %v3419 = vsub.s32 1, %v3418
    %v3420 = vrot.slane %v3411, %v3419
    %v3423 = vmul.f32 %v3387, %v3416
    %v3424 = vmul.f32 %v3389, %v3420
    %3426 = vset.pattern.permute.xlu0 0
    %3427 = vperm.xlu0 %3426, %v3423
    %v3428 = vpop.permute.xlu0 %3427
    %3431 = vset.pattern.permute.xlu0 0
    %3432 = vperm.xlu0 %3431, %v3424
    %v3433 = vpop.permute.xlu0 %3432
    %v3435 = vmul.f32 %v3428, %v1778
    %v3436 = vmul.f32 %v3433, %v1779
    %v3437 = vsel %vm68, %v3435, 0.0
    %v3438 = vrot.slane %v3437, 4
    %v3439 = vadd.f32 %v3437, %v3438
    %v3440 = vrot.slane %v3439, 2
    %v3441 = vadd.f32 %v3439, %v3440
    %v3442 = vrot.slane %v3441, 1
    %v3443 = vadd.f32 %v3441, %v3442
    %v3444 = vsel %vm68, %v3436, 0.0
    %v3445 = vrot.slane %v3444, 4
    %v3446 = vadd.f32 %v3444, %v3445
    %v3447 = vrot.slane %v3446, 2
    %v3448 = vadd.f32 %v3446, %v3447
    %v3449 = vrot.slane %v3448, 1
    %v3450 = vadd.f32 %v3448, %v3449
    %3451 = vrot.lane.b32.xlu0 %v3300, 32
    %v3452 = vpop.permute.xlu0 %3451
    %v3456 = vsel %vm2057, %v3450, %v3443
    %3457 = vrot.lane.b32.xlu0 %v3456, 32
    %v3458 = vpop.permute.xlu0 %3457
    %v3460 = vsel %vm68, %v3452, %v3458
    %v3462 = vsel %vm2158, %v3460, 0
    %3464 = vmatprep.subr.mxu0 0.0
    %3465 = vmatpush1.msra.mxu0 0.0
    %3466 = vmatprep.subr.mxu0 0.0
    %3467 = vmatpush1.msra.mxu0 0.0
    %3468 = vmatprep.subr.mxu0 0.0
    %3469 = vmatpush1.msra.mxu0 0.0
    %3470 = vmatprep.subr.mxu0 0.0
    %3471 = vmatpush1.msra.mxu0 0.0
    %3472 = vmatprep.subr.mxu0 0.0
    %3473 = vmatpush1.msra.mxu0 0.0
    %3474 = vmatprep.subr.mxu0 0.0
    %3475 = vmatpush1.msra.mxu0 0.0
    %3476 = vmatprep.subr.mxu0 0.0
    %3477 = vmatpush1.msra.mxu0 0.0
    %3478 = vmatprep.subr.mxu0 0.0
    %3479 = vmatpush1.msra.mxu0 0.0
    %3480 = vmatprep.subr.mxu0 0.0
    %3481 = vmatpush1.msra.mxu0 %v65
    %3482 = vmatprep.subr.mxu0 0.0
    %3483 = vmatpush1.msra.mxu0 %v64
    %3484 = vmatprep.subr.mxu0 0.0
    %3485 = vmatpush1.msra.mxu0 %v63
    %3486 = vmatprep.subr.mxu0 0.0
    %3487 = vmatpush1.msra.mxu0 %v62
    %3488 = vmatprep.subr.mxu0 0.0
    %3489 = vmatpush1.msra.mxu0 %v61
    %3490 = vmatprep.subr.mxu0 0.0
    %3491 = vmatpush1.msra.mxu0 %v60
    %3492 = vmatprep.subr.mxu0 0.0
    %3493 = vmatpush1.msra.mxu0 %v59
    %3494 = vmatprep.subr.mxu0 0.0
    %3495 = vmatpush1.msra.mxu0 %v58
    %3496 = vmatprep.subr.mxu0 0.0
    %3497 = vmatpush2.msra.mxu0 0.0
    %3498 = vmatprep.subr.mxu0 0.0
    %3499 = vmatpush2.msra.mxu0 0.0
    %3500 = vmatprep.subr.mxu0 0.0
    %3501 = vmatpush2.msra.mxu0 0.0
    %3502 = vmatprep.subr.mxu0 0.0
    %3503 = vmatpush2.msra.mxu0 0.0
    %3504 = vmatprep.subr.mxu0 0.0
    %3505 = vmatpush2.msra.mxu0 0.0
    %3506 = vmatprep.subr.mxu0 0.0
    %3507 = vmatpush2.msra.mxu0 0.0
    %3508 = vmatprep.subr.mxu0 0.0
    %3509 = vmatpush2.msra.mxu0 0.0
    %3510 = vmatprep.subr.mxu0 0.0
    %3511 = vmatpush2.msra.mxu0 0.0
    %3512 = vmatprep.subr.mxu0 0.0
    %3513 = vmatpush2.msra.mxu0 0.0
    %3514 = vmatprep.subr.mxu0 0.0
    %3515 = vmatpush2.msra.mxu0 0.0
    %3516 = vmatprep.subr.mxu0 0.0
    %3517 = vmatpush2.msra.mxu0 0.0
    %3518 = vmatprep.subr.mxu0 0.0
    %3519 = vmatpush2.msra.mxu0 0.0
    %3520 = vmatprep.subr.mxu0 0.0
    %3521 = vmatpush2.msra.mxu0 0.0
    %3522 = vmatprep.subr.mxu0 0.0
    %3523 = vmatpush2.msra.mxu0 0.0
    %3524 = vmatprep.subr.mxu0 0.0
    %3525 = vmatpush2.msra.mxu0 0.0
    %3526 = vmatprep.subr.mxu0 0.0
    %3527 = vmatpush2.msra.mxu0 0.0
    %3528 = vmatprep.mubr.f32.mxu0 0.0
    %3529 = vmatmul.mubr.f32.gmra.mxu0 %v3462
    %v3530 = vpop.f32.mrf.mxu0
    %v3531 = vadd.f32 %v2156, %v3530
    %v3532 = vpop.f32.mrf.mxu0
    %3533 = vdwg.mxu0
    %v3534 = vsel %vm2232, %v3531, -inf
    %3535 = vmax.xlane.f32.xlu0 %v3534
    %v3536 = vpop.xlane.xlu0 %3535
    %v3537 = vsub.f32 %v3531, %v3536
    %v3538 = vmul.f32 %v3537, 1.442695
    %v3539 = vpow.pop %v3538
    %v3540 = vsel %vm2232, %v3539, 0.0
    %3541 = vadd.xlane.f32.xlu0 %v3540
    %v3542 = vpop.xlane.xlu0 %3541
    %v3543 = vlog2.pop %v3542
    %v3544 = vmul.f32 %v3543, 0.6931472
    %v3545 = vsub.f32 %v3537, %v3544
    %3546 = vset.pattern.permute.xlu0 3
    %3547 = vperm.xlu0 %3546, %v1785
    %v3548 = vpop.permute.xlu0 %3547
    %vm3549 = vcmp.eq.s32.totalorder %v1784, %v3548
    %v3550 = vsel %vm3549, 1, 0
    %v3551 = vcvt.s32.f32 %v3550
    %v3552 = vmul.f32 %v3551, %v3545
    %v3553 = vsel %vm2232, %v3552, 0.0
    %3554 = vadd.xlane.f32.xlu0 %v3553
    %v3555 = vpop.xlane.xlu0 %3554
    %v3556 = vsub.f32 0.0, %v3555
    %v3557 = vmul.f32 %v3556, %v2258
    %3559 = vrot.lane.b32.xlu0 %v3557, 125
    %v3560 = vpop.permute.xlu0 %3559
    %v3562 = vadd.f32 %v3128, %v3560
    %vm3563 = vcmask 1024
    %3564 = vst.msk [vmem:[%s12] sm:$0x3] %vm3563, %v3562
    %v3565 = vmul.f32 %v3545, 1.442695
    %v3566 = vpow.pop %v3565
    %3567 = vst [vmem:[#allocation3] sm:$0x3] %v3566
    // Predicated region
    $region50: #{model_forward.1} parent=1 // pred_check
      _
    $region51: #{model_forward.1} parent=1 // pred_check_branch
      %3569 = sbr.rel (0) target = $region53
    $region52: #{model_forward.1} parent=1 // pred_region
      _
    $region53: #{model_forward.1} parent=1 // pred_fallthru
      _
    // Predicated region
    $region54: #{model_forward.1} parent=1 // pred_check
      _
    $region55: #{model_forward.1} parent=1 // pred_check_branch
      %3571 = sbr.rel (0) target = $region57
    $region56: #{model_forward.1} parent=1 // pred_region
      %s3573 = ssub.s32 32, 32
      %3574 = vsyncadd [#allocation4], %s3573
      %s3576 = sshll.u32 [#allocation3], 4
      %s3577 = int_to_ptr.vmem [resolvable:$true] %s3576
      %3579 = dma.vmem_to_hbm [thread:$0]  %s3577, 32, %s13, [#allocation4]
    $region57: #{model_forward.1} parent=1 // pred_fallthru
      _
    // Predicated region
    $region58: #{model_forward.1} parent=1 // pred_check
      _
    $region59: #{model_forward.1} parent=1 // pred_check_branch
      %3581 = sbr.rel (0) target = $region61
    $region60: #{model_forward.1} parent=1 // pred_region
      _
    $region61: #{model_forward.1} parent=1 // pred_fallthru
      _
    // Predicated region
    $region62: #{model_forward.1} parent=1 // pred_check
      _
    $region63: #{model_forward.1} parent=1 // pred_check_branch
      %3583 = sbr.rel (0) target = $region65
    $region64: #{model_forward.1} parent=1 // pred_region
      %3584 = dma.done [#allocation4], 32
    $region65: #{model_forward.1} parent=1 // pred_fallthru
      _
    %3585 = vsyncpa [#allocation4], 1

</llo_original>
